<compile_context>
chip_gen: v6e
topology: v6e:2x2x1
jax: 0.10.0
libtpu: 0.0.40
codegen_flags: <defaults>
</compile_context>

<pallas_src>
import functools

import jax
import jax.numpy as jnp
from jax.experimental import pallas as pl
from jax.experimental.pallas import tpu as pltpu


def _round_up(x, m):
    return ((x + m - 1) // m) * m


# ---------------------------------------------------------------------------
# Fused kernel factory: 2 skewed LSTM layers + FC head.  grid = (batch, time).
# ---------------------------------------------------------------------------
def _make_fused_kernel(T_total, TC, BB, Hp, unroll):
    ragged = (T_total % TC) != 0      # last chunk has fewer than TC valid steps
    needs_drain = not ragged          # loop ends with layer 1 one step behind

    def kernel(x_ref, wih0_ref, b0_ref, wc_ref, whh1_ref, b1_ref,
               wfc_ref, bfc_ref, out_ref,
               xg_sc, h0_sc, c0_sc, h1_sc, c1_sc):
        t_chunk = pl.program_id(1)
        n_tc = pl.num_programs(1)

        # Recurrent state lives in VMEM scratch and is carried across the time
        # axis.  CORRECTNESS RELIES on grid order (batch, time) with time the
        # innermost/fastest axis, and on per-core scratch under megacore
        # sharding of the "parallel" batch axis.  Do not reorder the grid.
        @pl.when(t_chunk == 0)
        def _():
            h0_sc[...] = jnp.zeros_like(h0_sc)
            c0_sc[...] = jnp.zeros_like(c0_sc)
            h1_sc[...] = jnp.zeros_like(h1_sc)
            c1_sc[...] = jnp.zeros_like(c1_sc)

        # Hoisted layer-0 input projection: ONE matmul covers all TC steps of
        # this chunk (the block already arrives as a 2-D (TC*BB, Ip) slab).
        xg_sc[...] = (
            jnp.dot(x_ref[0], wih0_ref[...], preferred_element_type=jnp.float32)
            + b0_ref[...])

        b1 = b1_ref[...]              # tiny (4 vregs): the only hoisted operand
        base = t_chunk * TC

        def cell(gates, c_prev):
            # Gate boundaries are 128-lane aligned (Hp multiple of 128):
            # these slices are free vreg views.
            i_g = jax.nn.sigmoid(gates[:, 0 * Hp:1 * Hp])
            f_g = jax.nn.sigmoid(gates[:, 1 * Hp:2 * Hp])
            g_g = jnp.tanh(gates[:, 2 * Hp:3 * Hp])
            o_g = jax.nn.sigmoid(gates[:, 3 * Hp:4 * Hp])
            c_new = f_g * c_prev + i_g * g_g
            return o_g * jnp.tanh(c_new), c_new

        # Skewed recurrence: iteration s runs layer-0 step (base+s) and layer-1
        # step (base+s-1).  Both consume h0_{base+s-1}, so the layer-0
        # recurrent matmul and the layer-1 input matmul are fused into one
        # (BB,Hp)@(Hp,8Hp) dot; the h1@W_hh1 dot depends only on the previous
        # iteration's h1 and can overlap with it.
        def step(s, carry):
            h0, c0, h1, c1 = carry
            g = base + s                                       # global layer-0 step
            m = jnp.dot(h0, wc_ref[...], preferred_element_type=jnp.float32)
            r1 = jnp.dot(h1, whh1_ref[...], preferred_element_type=jnp.float32)

            gv = jnp.full((BB, Hp), g, dtype=jnp.int32)        # step id, splat

            # ---- layer 1 (lagging one step): processes h0_{g-1}.
            g1 = m[:, 4 * Hp:8 * Hp] + r1 + b1
            h1n, c1n = cell(g1, c1)
            ok1 = gv >= 1                                      # no step before h0_0 exists
            if ragged:
                ok1 = ok1 & (gv <= T_total)                    # last valid input is h0_{T-1}
            h1 = jnp.where(ok1, h1n, h1)
            c1 = jnp.where(ok1, c1n, c1)

            # ---- layer 0: step g.
            row = pl.multiple_of(s * BB, BB)
            g0 = xg_sc[pl.ds(row, BB), :] + m[:, 0:4 * Hp]
            h0n, c0n = cell(g0, c0)
            if ragged:
                ok0 = gv < T_total
                h0 = jnp.where(ok0, h0n, h0)
                c0 = jnp.where(ok0, c0n, c0)
            else:
                h0, c0 = h0n, c0n
            return h0, c0, h1, c1

        h0, c0, h1, c1 = jax.lax.fori_loop(
            0, TC, step,
            (h0_sc[...], c0_sc[...], h1_sc[...], c1_sc[...]),
            unroll=unroll)           # partial unroll: scheduler visibility w/o vreg blowup
        h0_sc[...] = h0
        c0_sc[...] = c0
        h1_sc[...] = h1
        c1_sc[...] = c1

        # Fused FC head on the final chunk (dropout is identity at inference);
        # lane-dense (BB, 128) store.
        @pl.when(t_chunk == n_tc - 1)
        def _():
            if needs_drain:
                # Layer 1 is still one step behind: final step on h0_{T-1}.
                g1 = (jnp.dot(h0, wc_ref[:, 4 * Hp:8 * Hp],
                              preferred_element_type=jnp.float32)
                      + jnp.dot(h1, whh1_ref[...],
                                preferred_element_type=jnp.float32)
                      + b1)
                h_last, _ = cell(g1, c1)
            else:
                h_last = h1
            out_ref[...] = (
                jnp.dot(h_last, wfc_ref[...], preferred_element_type=jnp.float32)
                + bfc_ref[...]).astype(out_ref.dtype)

    return kernel


# ---------------------------------------------------------------------------
# Wrapper: layout, grid, pallas_call.
# ---------------------------------------------------------------------------
@functools.partial(
    jax.jit, static_argnames=("out_dim", "time_chunk", "unroll", "batch_block"))
def lstm_model_forward(packed, x_bti, *, out_dim=1, time_chunk=64, unroll=8,
                       batch_block=None):
    """x_bti: (B, T, input_size) float32, batch_first like the PyTorch module."""
    B, T, I = x_bti.shape
    Ip = packed["wih0"].shape[0]
    Hp = packed["whh1"].shape[0]
    Op = packed["wfc"].shape[1]

    # Batch block: sublane granule minimum, scaled with B so the MXU sees more
    # rows per pass.  On v7x, for real batches keep nb a multiple of 2 so the
    # "parallel" batch axis feeds both TensorCores.
    if batch_block is None:
        batch_block = min(64, _round_up(B, 8))
    BB = batch_block
    Bp = _round_up(B, BB)
    nb = Bp // BB

    tc = max(1, min(time_chunk, T))
    nt = -(-T // tc)                 # ragged final chunk handled in-kernel
    T_pad = nt * tc

    # Single (jit-fused) pad + chunk layout: (nb*nt, tc*BB, Ip), rows ordered
    # [time-within-chunk, batch-within-block] so each grid block is already the
    # 2-D LHS of the hoisted input projection (no in-kernel reshape).
    x_pad = jnp.zeros((Bp, T_pad, Ip), jnp.float32).at[:B, :T, :I].set(
        x_bti.astype(jnp.float32))
    x_blk = (x_pad.reshape(nb, BB, nt, tc, Ip)
             .transpose(0, 2, 3, 1, 4)
             .reshape(nb * nt, tc * BB, Ip))

    kernel = _make_fused_kernel(T, tc, BB, Hp, min(unroll, tc))

    out_pad = pl.pallas_call(
        kernel,
        out_shape=jax.ShapeDtypeStruct((Bp, Op), jnp.float32),
        grid_spec=pltpu.PrefetchScalarGridSpec(
            num_scalar_prefetch=0,
            grid=(nb, nt),           # time MUST stay innermost (state carry)
            in_specs=[
                pl.BlockSpec((1, tc * BB, Ip), lambda b, t: (b * nt + t, 0, 0)),
                pl.BlockSpec((Ip, 4 * Hp), lambda b, t: (0, 0)),   # W_ih0^T
                pl.BlockSpec((1, 4 * Hp), lambda b, t: (0, 0)),    # b_ih0 + b_hh0
                pl.BlockSpec((Hp, 8 * Hp), lambda b, t: (0, 0)),   # [W_hh0^T | W_ih1^T]
                pl.BlockSpec((Hp, 4 * Hp), lambda b, t: (0, 0)),   # W_hh1^T
                pl.BlockSpec((1, 4 * Hp), lambda b, t: (0, 0)),    # b_ih1 + b_hh1
                pl.BlockSpec((Hp, Op), lambda b, t: (0, 0)),       # W_fc^T
                pl.BlockSpec((1, Op), lambda b, t: (0, 0)),        # b_fc
            ],
            out_specs=pl.BlockSpec((BB, Op), lambda b, t: (b, 0)),
            scratch_shapes=[
                pltpu.VMEM((tc * BB, 4 * Hp), jnp.float32),        # hoisted x-proj
                pltpu.VMEM((BB, Hp), jnp.float32),                 # h layer 0
                pltpu.VMEM((BB, Hp), jnp.float32),                 # c layer 0
                pltpu.VMEM((BB, Hp), jnp.float32),                 # h layer 1
                pltpu.VMEM((BB, Hp), jnp.float32),                 # c layer 1
            ],
        ),
        compiler_params=pltpu.CompilerParams(
            dimension_semantics=("parallel", "arbitrary")),
    )(x_blk, packed["wih0"], packed["b0"], packed["wc"], packed["whh1"],
      packed["b1"], packed["wfc"], packed["bfc"])

    return out_pad[:B, :out_dim]


# ---------------------------------------------------------------------------
# Parameter packing: PyTorch layout -> padded, gate-aligned, pre-transposed,
# with W_hh0 / W_ih1 fused into one RHS for the skewed recurrence.
# ---------------------------------------------------------------------------
def pack_params(raw, H, I):
    Hp = _round_up(H, 128)           # gate boundaries on 128-lane boundaries
    Ip = _round_up(I, 8)
    Op = 128                         # lane-dense head output (real width is 1)

    def lstm_T(w, in_dim, in_pad):
        out = jnp.zeros((in_pad, 4 * Hp), jnp.float32)
        for g in range(4):           # PyTorch gate order i, f, g, o
            out = out.at[:in_dim, g * Hp:g * Hp + H].set(
                jnp.asarray(w[g * H:(g + 1) * H, :in_dim], jnp.float32).T)
        return out

    def bias(b_ih, b_hh):
        out = jnp.zeros((1, 4 * Hp), jnp.float32)
        s = jnp.asarray(b_ih, jnp.float32) + jnp.asarray(b_hh, jnp.float32)
        for g in range(4):
            out = out.at[0, g * Hp:g * Hp + H].set(s[g * H:(g + 1) * H])
        return out

    l0, l1 = raw["lstm"]
    whh0 = lstm_T(l0["w_hh"], H, Hp)
    wih1 = lstm_T(l1["w_ih"], H, Hp)
    # Skewed recurrence: layer-0 recurrent weights and layer-1 input weights
    # share the same LHS (h0_{s-1}) -> fuse into one (Hp, 8*Hp) RHS.
    wc = jnp.concatenate([whh0, wih1], axis=1)

    O = raw["fc_w"].shape[0]
    wfc = jnp.zeros((Hp, Op), jnp.float32).at[:H, :O].set(
        jnp.asarray(raw["fc_w"], jnp.float32).T)
    bfc = jnp.zeros((1, Op), jnp.float32).at[0, :O].set(
        jnp.asarray(raw["fc_b"], jnp.float32))
    return {
        "wih0": lstm_T(l0["w_ih"], I, Ip),
        "b0": bias(l0["b_ih"], l0["b_hh"]),
        "wc": wc,
        "whh1": lstm_T(l1["w_hh"], H, Hp),
        "b1": bias(l1["b_ih"], l1["b_hh"]),
        "wfc": wfc,
        "bfc": bfc,
    }


# ---------------------------------------------------------------------------
# Pure-JAX reference (same math, python loop) for correctness checking.
# ---------------------------------------------------------------------------
def reference_forward(raw, x_bti):
    B, T, _ = x_bti.shape
    h_seq = x_bti.astype(jnp.float32)
    for layer in raw["lstm"]:
        H = layer["w_hh"].shape[1]
        h = jnp.zeros((B, H), jnp.float32)
        c = jnp.zeros((B, H), jnp.float32)
        outs = []
        for t in range(T):
            g = (h_seq[:, t, :] @ layer["w_ih"].T + h @ layer["w_hh"].T
                 + layer["b_ih"] + layer["b_hh"])
            i = jax.nn.sigmoid(g[:, :H])
            f = jax.nn.sigmoid(g[:, H:2 * H])
            gg = jnp.tanh(g[:, 2 * H:3 * H])
            o = jax.nn.sigmoid(g[:, 3 * H:])
            c = f * c + i * gg
            h = o * jnp.tanh(c)
            outs.append(h)
        h_seq = jnp.stack(outs, axis=1)
    return h_seq[:, -1, :] @ raw["fc_w"].T + raw["fc_b"]


if __name__ == "__main__":
    B, T, I, H, L = 2, 8, 1, 64, 2   # module defaults: input=1, hidden=64, 2 layers
    key = jax.random.PRNGKey(0)
    keys = jax.random.split(key, 4 * L + 4)
    bound = 1.0 / jnp.sqrt(jnp.float32(H))

    lstm_raw = []
    ki = 0
    for layer_idx in range(L):
        in_dim = I if layer_idx == 0 else H
        w_ih = jax.random.uniform(keys[ki], (4 * H, in_dim), minval=-bound, maxval=bound); ki += 1
        w_hh = jax.random.uniform(keys[ki], (4 * H, H), minval=-bound, maxval=bound); ki += 1
        b_ih = jax.random.uniform(keys[ki], (4 * H,), minval=-bound, maxval=bound); ki += 1
        b_hh = jax.random.uniform(keys[ki], (4 * H,), minval=-bound, maxval=bound); ki += 1
        lstm_raw.append({"w_ih": w_ih, "w_hh": w_hh, "b_ih": b_ih, "b_hh": b_hh})
    fc_w = jax.random.uniform(keys[ki], (1, H), minval=-bound, maxval=bound); ki += 1
    fc_b = jax.random.uniform(keys[ki], (1,), minval=-bound, maxval=bound); ki += 1
    raw = {"lstm": lstm_raw, "fc_w": fc_w, "fc_b": fc_b}

    packed = pack_params(raw, H, I)

    # Config 1: T divisible by the time chunk (drain path, 2 chunks -> exercises
    # the VMEM state carry across the sequential time axis).
    x = jax.random.normal(keys[ki], (B, T, I), dtype=jnp.float32); ki += 1
    out = jax.block_until_ready(lstm_model_forward(packed, x, time_chunk=4))
    ref = reference_forward(raw, x)
    assert out.shape == (B, 1), out.shape
    assert jnp.allclose(out, ref, atol=1e-4, rtol=1e-4), (out, ref)

    # Config 2: ragged final chunk (T=7, tc=3) + two batch blocks (state reset
    # at t_chunk==0 for the second block).
    B2, T2 = 10, 7
    x2 = jax.random.normal(keys[ki], (B2, T2, I), dtype=jnp.float32)
    out2 = jax.block_until_ready(
        lstm_model_forward(packed, x2, time_chunk=3, batch_block=8))
    ref2 = reference_forward(raw, x2)
    assert out2.shape == (B2, 1), out2.shape
    assert jnp.allclose(out2, ref2, atol=1e-4, rtol=1e-4), (out2, ref2)

    print("KERNEL_OK")
</pallas_src>

<mosaic_0001>
module attributes {stable_mosaic.version = 11 : i64} {
  func.func @kernel(%arg0: i32, %arg1: i32, %arg2: memref<1x32x8xf32, #tpu.memory_space<vmem>>, %arg3: memref<8x512xf32, #tpu.memory_space<vmem>>, %arg4: memref<1x512xf32, #tpu.memory_space<vmem>>, %arg5: memref<128x1024xf32, #tpu.memory_space<vmem>>, %arg6: memref<128x512xf32, #tpu.memory_space<vmem>>, %arg7: memref<1x512xf32, #tpu.memory_space<vmem>>, %arg8: memref<128x128xf32, #tpu.memory_space<vmem>>, %arg9: memref<1x128xf32, #tpu.memory_space<vmem>>, %arg10: memref<8x128xf32, #tpu.memory_space<vmem>>, %arg11: memref<32x512xf32, #tpu.memory_space<vmem>>, %arg12: memref<8x128xf32, #tpu.memory_space<vmem>>, %arg13: memref<8x128xf32, #tpu.memory_space<vmem>>, %arg14: memref<8x128xf32, #tpu.memory_space<vmem>>, %arg15: memref<8x128xf32, #tpu.memory_space<vmem>>) attributes {dimension_semantics = [#tpu.dimension_semantics<parallel>, #tpu.dimension_semantics<arbitrary>], iteration_bounds = array<i64: 1, 2>, scalar_prefetch = 0 : i64, scratch_operands = 5 : i64, tpu.core_type = #tpu.core_type<tc>, window_params = [{transform_indices = @transform_0, window_bounds = array<i64: 1, 32, 8>}, {pipeline_mode = #tpu.pipeline_mode<synchronous>, transform_indices = @transform_1, window_bounds = array<i64: 8, 512>}, {pipeline_mode = #tpu.pipeline_mode<synchronous>, transform_indices = @transform_2, window_bounds = array<i64: 1, 512>}, {pipeline_mode = #tpu.pipeline_mode<synchronous>, transform_indices = @transform_3, window_bounds = array<i64: 128, 1024>}, {pipeline_mode = #tpu.pipeline_mode<synchronous>, transform_indices = @transform_4, window_bounds = array<i64: 128, 512>}, {pipeline_mode = #tpu.pipeline_mode<synchronous>, transform_indices = @transform_5, window_bounds = array<i64: 1, 512>}, {pipeline_mode = #tpu.pipeline_mode<synchronous>, transform_indices = @transform_6, window_bounds = array<i64: 128, 128>}, {pipeline_mode = #tpu.pipeline_mode<synchronous>, transform_indices = @transform_7, window_bounds = array<i64: 1, 128>}, {transform_indices = @transform_8, window_bounds = array<i64: 8, 128>}]} {
    %c0_i32 = arith.constant 0 : i32
    %0 = arith.cmpi eq, %arg1, %c0_i32 : i32
    %1 = arith.extui %0 : i1 to i32
    %c0_i32_0 = arith.constant 0 : i32
    %2 = arith.cmpi ne, %1, %c0_i32_0 : i32
    scf.if %2 {
      %cst_90 = arith.constant 0.000000e+00 : f32
      %304 = vector.broadcast %cst_90 : f32 to vector<8x128xf32>
      %c0_91 = arith.constant 0 : index
      %c0_92 = arith.constant 0 : index
      %305 = vector.load %arg12[%c0_91, %c0_92] : memref<8x128xf32, #tpu.memory_space<vmem>>, vector<8x128xf32>
      tpu.vector_store %arg12[%c0_91, %c0_92], %304 {strides = array<i32>} : memref<8x128xf32, #tpu.memory_space<vmem>>, vector<8x128xf32>,
      %cst_93 = arith.constant 0.000000e+00 : f32
      %306 = vector.broadcast %cst_93 : f32 to vector<8x128xf32>
      %c0_94 = arith.constant 0 : index
      %c0_95 = arith.constant 0 : index
      %307 = vector.load %arg13[%c0_94, %c0_95] : memref<8x128xf32, #tpu.memory_space<vmem>>, vector<8x128xf32>
      tpu.vector_store %arg13[%c0_94, %c0_95], %306 {strides = array<i32>} : memref<8x128xf32, #tpu.memory_space<vmem>>, vector<8x128xf32>,
      %cst_96 = arith.constant 0.000000e+00 : f32
      %308 = vector.broadcast %cst_96 : f32 to vector<8x128xf32>
      %c0_97 = arith.constant 0 : index
      %c0_98 = arith.constant 0 : index
      %309 = vector.load %arg14[%c0_97, %c0_98] : memref<8x128xf32, #tpu.memory_space<vmem>>, vector<8x128xf32>
      tpu.vector_store %arg14[%c0_97, %c0_98], %308 {strides = array<i32>} : memref<8x128xf32, #tpu.memory_space<vmem>>, vector<8x128xf32>,
      %cst_99 = arith.constant 0.000000e+00 : f32
      %310 = vector.broadcast %cst_99 : f32 to vector<8x128xf32>
      %c0_100 = arith.constant 0 : index
      %c0_101 = arith.constant 0 : index
      %311 = vector.load %arg15[%c0_100, %c0_101] : memref<8x128xf32, #tpu.memory_space<vmem>>, vector<8x128xf32>
      tpu.vector_store %arg15[%c0_100, %c0_101], %310 {strides = array<i32>} : memref<8x128xf32, #tpu.memory_space<vmem>>, vector<8x128xf32>,
    } else {
    }
    %c0 = arith.constant 0 : index
    %c0_1 = arith.constant 0 : index
    %c0_2 = arith.constant 0 : index
    %3 = vector.load %arg2[%c0, %c0_1, %c0_2] : memref<1x32x8xf32, #tpu.memory_space<vmem>>, vector<1x32x8xf32>
    %4 = vector.shape_cast %3 : vector<1x32x8xf32> to vector<32x8xf32>
    %c0_3 = arith.constant 0 : index
    %c0_4 = arith.constant 0 : index
    %5 = vector.load %arg3[%c0_3, %c0_4] : memref<8x512xf32, #tpu.memory_space<vmem>>, vector<8x512xf32>
    %cst = arith.constant dense<0.000000e+00> : vector<32x512xf32>
    %6 = tpu.matmul %4, %5, %cst {dimension_numbers = #tpu.dot_dimension_numbers<[1], [0], [0], [1], [0, 0, 1, 1], [], []>} : vector<32x8xf32>, vector<8x512xf32>, vector<32x512xf32> -> vector<32x512xf32>
    %c0_5 = arith.constant 0 : index
    %c0_6 = arith.constant 0 : index
    %7 = vector.load %arg4[%c0_5, %c0_6] : memref<1x512xf32, #tpu.memory_space<vmem>>, vector<1x512xf32>
    %8 = vector.broadcast %7 : vector<1x512xf32> to vector<32x512xf32>
    %9 = arith.addf %6, %8 : vector<32x512xf32>
    %c0_7 = arith.constant 0 : index
    %c0_8 = arith.constant 0 : index
    %10 = vector.load %arg11[%c0_7, %c0_8] : memref<32x512xf32, #tpu.memory_space<vmem>>, vector<32x512xf32>
    tpu.vector_store %arg11[%c0_7, %c0_8], %9 {strides = array<i32>} : memref<32x512xf32, #tpu.memory_space<vmem>>, vector<32x512xf32>,
    %c0_9 = arith.constant 0 : index
    %c0_10 = arith.constant 0 : index
    %11 = vector.load %arg7[%c0_9, %c0_10] : memref<1x512xf32, #tpu.memory_space<vmem>>, vector<1x512xf32>
    %c4_i32 = arith.constant 4 : i32
    %12 = arith.muli %arg1, %c4_i32 : i32
    %c0_11 = arith.constant 0 : index
    %c0_12 = arith.constant 0 : index
    %13 = vector.load %arg12[%c0_11, %c0_12] : memref<8x128xf32, #tpu.memory_space<vmem>>, vector<8x128xf32>
    %c0_13 = arith.constant 0 : index
    %c0_14 = arith.constant 0 : index
    %14 = vector.load %arg13[%c0_13, %c0_14] : memref<8x128xf32, #tpu.memory_space<vmem>>, vector<8x128xf32>
    %c0_15 = arith.constant 0 : index
    %c0_16 = arith.constant 0 : index
    %15 = vector.load %arg14[%c0_15, %c0_16] : memref<8x128xf32, #tpu.memory_space<vmem>>, vector<8x128xf32>
    %c0_17 = arith.constant 0 : index
    %c0_18 = arith.constant 0 : index
    %16 = vector.load %arg15[%c0_17, %c0_18] : memref<8x128xf32, #tpu.memory_space<vmem>>, vector<8x128xf32>
    %c0_i32_19 = arith.constant 0 : i32
    %17 = arith.addi %12, %c0_i32_19 : i32
    %c0_20 = arith.constant 0 : index
    %c0_21 = arith.constant 0 : index
    %18 = vector.load %arg5[%c0_20, %c0_21] : memref<128x1024xf32, #tpu.memory_space<vmem>>, vector<128x1024xf32>
    %cst_22 = arith.constant dense<0.000000e+00> : vector<8x1024xf32>
    %19 = tpu.matmul %13, %18, %cst_22 {dimension_numbers = #tpu.dot_dimension_numbers<[1], [0], [0], [1], [0, 0, 1, 1], [], []>} : vector<8x128xf32>, vector<128x1024xf32>, vector<8x1024xf32> -> vector<8x1024xf32>
    %c0_23 = arith.constant 0 : index
    %c0_24 = arith.constant 0 : index
    %20 = vector.load %arg6[%c0_23, %c0_24] : memref<128x512xf32, #tpu.memory_space<vmem>>, vector<128x512xf32>
    %cst_25 = arith.constant dense<0.000000e+00> : vector<8x512xf32>
    %21 = tpu.matmul %15, %20, %cst_25 {dimension_numbers = #tpu.dot_dimension_numbers<[1], [0], [0], [1], [0, 0, 1, 1], [], []>} : vector<8x128xf32>, vector<128x512xf32>, vector<8x512xf32> -> vector<8x512xf32>
    %22 = vector.broadcast %17 : i32 to vector<8x128xi32>
    %23 = vector.extract_strided_slice %19 {offsets = [0, 512], sizes = [8, 512], strides = [1, 1]} : vector<8x1024xf32> to vector<8x512xf32>
    %24 = arith.addf %23, %21 : vector<8x512xf32>
    %25 = vector.broadcast %11 : vector<1x512xf32> to vector<8x512xf32>
    %26 = arith.addf %24, %25 : vector<8x512xf32>
    %27 = vector.extract_strided_slice %26 {offsets = [0, 0], sizes = [8, 128], strides = [1, 1]} : vector<8x512xf32> to vector<8x128xf32>
    %28 = arith.negf %27 : vector<8x128xf32>
    %29 = math.exp %28 : vector<8x128xf32>
    %cst_26 = arith.constant 1.000000e+00 : f32
    %30 = vector.broadcast %cst_26 : f32 to vector<8x128xf32>
    %31 = arith.addf %30, %29 : vector<8x128xf32>
    %32 = arith.divf %30, %31 : vector<8x128xf32>
    %33 = vector.extract_strided_slice %26 {offsets = [0, 128], sizes = [8, 128], strides = [1, 1]} : vector<8x512xf32> to vector<8x128xf32>
    %34 = arith.negf %33 : vector<8x128xf32>
    %35 = math.exp %34 : vector<8x128xf32>
    %cst_27 = arith.constant 1.000000e+00 : f32
    %36 = vector.broadcast %cst_27 : f32 to vector<8x128xf32>
    %37 = arith.addf %36, %35 : vector<8x128xf32>
    %38 = arith.divf %36, %37 : vector<8x128xf32>
    %39 = vector.extract_strided_slice %26 {offsets = [0, 256], sizes = [8, 128], strides = [1, 1]} : vector<8x512xf32> to vector<8x128xf32>
    %40 = math.tanh %39 : vector<8x128xf32>
    %41 = vector.extract_strided_slice %26 {offsets = [0, 384], sizes = [8, 128], strides = [1, 1]} : vector<8x512xf32> to vector<8x128xf32>
    %42 = arith.negf %41 : vector<8x128xf32>
    %43 = math.exp %42 : vector<8x128xf32>
    %cst_28 = arith.constant 1.000000e+00 : f32
    %44 = vector.broadcast %cst_28 : f32 to vector<8x128xf32>
    %45 = arith.addf %44, %43 : vector<8x128xf32>
    %46 = arith.divf %44, %45 : vector<8x128xf32>
    %47 = arith.mulf %38, %16 : vector<8x128xf32>
    %48 = arith.mulf %32, %40 : vector<8x128xf32>
    %49 = arith.addf %47, %48 : vector<8x128xf32>
    %50 = math.tanh %49 : vector<8x128xf32>
    %51 = arith.mulf %46, %50 : vector<8x128xf32>
    %c1_i32 = arith.constant 1 : i32
    %52 = vector.broadcast %c1_i32 : i32 to vector<8x128xi32>
    %53 = arith.cmpi sge, %22, %52 : vector<8x128xi32>
    %54 = arith.select %53, %51, %15 : vector<8x128xi1>, vector<8x128xf32>
    %55 = arith.select %53, %49, %16 : vector<8x128xi1>, vector<8x128xf32>
    %c8_i32 = arith.constant 8 : i32
    %56 = arith.muli %c0_i32_19, %c8_i32 : i32
    %57 = tpu.assume_multiple %56, 8 : i32
    %58 = arith.index_cast %57 : i32 to index
    %c0_29 = arith.constant 0 : index
    %59 = vector.load %arg11[%58, %c0_29] : memref<32x512xf32, #tpu.memory_space<vmem>>, vector<8x512xf32>
    %60 = vector.extract_strided_slice %19 {offsets = [0, 0], sizes = [8, 512], strides = [1, 1]} : vector<8x1024xf32> to vector<8x512xf32>
    %61 = arith.addf %59, %60 : vector<8x512xf32>
    %62 = vector.extract_strided_slice %61 {offsets = [0, 0], sizes = [8, 128], strides = [1, 1]} : vector<8x512xf32> to vector<8x128xf32>
    %63 = arith.negf %62 : vector<8x128xf32>
    %64 = math.exp %63 : vector<8x128xf32>
    %cst_30 = arith.constant 1.000000e+00 : f32
    %65 = vector.broadcast %cst_30 : f32 to vector<8x128xf32>
    %66 = arith.addf %65, %64 : vector<8x128xf32>
    %67 = arith.divf %65, %66 : vector<8x128xf32>
    %68 = vector.extract_strided_slice %61 {offsets = [0, 128], sizes = [8, 128], strides = [1, 1]} : vector<8x512xf32> to vector<8x128xf32>
    %69 = arith.negf %68 : vector<8x128xf32>
    %70 = math.exp %69 : vector<8x128xf32>
    %cst_31 = arith.constant 1.000000e+00 : f32
    %71 = vector.broadcast %cst_31 : f32 to vector<8x128xf32>
    %72 = arith.addf %71, %70 : vector<8x128xf32>
    %73 = arith.divf %71, %72 : vector<8x128xf32>
    %74 = vector.extract_strided_slice %61 {offsets = [0, 256], sizes = [8, 128], strides = [1, 1]} : vector<8x512xf32> to vector<8x128xf32>
    %75 = math.tanh %74 : vector<8x128xf32>
    %76 = vector.extract_strided_slice %61 {offsets = [0, 384], sizes = [8, 128], strides = [1, 1]} : vector<8x512xf32> to vector<8x128xf32>
    %77 = arith.negf %76 : vector<8x128xf32>
    %78 = math.exp %77 : vector<8x128xf32>
    %cst_32 = arith.constant 1.000000e+00 : f32
    %79 = vector.broadcast %cst_32 : f32 to vector<8x128xf32>
    %80 = arith.addf %79, %78 : vector<8x128xf32>
    %81 = arith.divf %79, %80 : vector<8x128xf32>
    %82 = arith.mulf %73, %14 : vector<8x128xf32>
    %83 = arith.mulf %67, %75 : vector<8x128xf32>
    %84 = arith.addf %82, %83 : vector<8x128xf32>
    %85 = math.tanh %84 : vector<8x128xf32>
    %86 = arith.mulf %81, %85 : vector<8x128xf32>
    %c1_i32_33 = arith.constant 1 : i32
    %87 = arith.addi %12, %c1_i32_33 : i32
    %c0_34 = arith.constant 0 : index
    %c0_35 = arith.constant 0 : index
    %88 = vector.load %arg5[%c0_34, %c0_35] : memref<128x1024xf32, #tpu.memory_space<vmem>>, vector<128x1024xf32>
    %cst_36 = arith.constant dense<0.000000e+00> : vector<8x1024xf32>
    %89 = tpu.matmul %86, %88, %cst_36 {dimension_numbers = #tpu.dot_dimension_numbers<[1], [0], [0], [1], [0, 0, 1, 1], [], []>} : vector<8x128xf32>, vector<128x1024xf32>, vector<8x1024xf32> -> vector<8x1024xf32>
    %c0_37 = arith.constant 0 : index
    %c0_38 = arith.constant 0 : index
    %90 = vector.load %arg6[%c0_37, %c0_38] : memref<128x512xf32, #tpu.memory_space<vmem>>, vector<128x512xf32>
    %cst_39 = arith.constant dense<0.000000e+00> : vector<8x512xf32>
    %91 = tpu.matmul %54, %90, %cst_39 {dimension_numbers = #tpu.dot_dimension_numbers<[1], [0], [0], [1], [0, 0, 1, 1], [], []>} : vector<8x128xf32>, vector<128x512xf32>, vector<8x512xf32> -> vector<8x512xf32>
    %92 = vector.broadcast %87 : i32 to vector<8x128xi32>
    %93 = vector.extract_strided_slice %89 {offsets = [0, 512], sizes = [8, 512], strides = [1, 1]} : vector<8x1024xf32> to vector<8x512xf32>
    %94 = arith.addf %93, %91 : vector<8x512xf32>
    %95 = vector.broadcast %11 : vector<1x512xf32> to vector<8x512xf32>
    %96 = arith.addf %94, %95 : vector<8x512xf32>
    %97 = vector.extract_strided_slice %96 {offsets = [0, 0], sizes = [8, 128], strides = [1, 1]} : vector<8x512xf32> to vector<8x128xf32>
    %98 = arith.negf %97 : vector<8x128xf32>
    %99 = math.exp %98 : vector<8x128xf32>
    %cst_40 = arith.constant 1.000000e+00 : f32
    %100 = vector.broadcast %cst_40 : f32 to vector<8x128xf32>
    %101 = arith.addf %100, %99 : vector<8x128xf32>
    %102 = arith.divf %100, %101 : vector<8x128xf32>
    %103 = vector.extract_strided_slice %96 {offsets = [0, 128], sizes = [8, 128], strides = [1, 1]} : vector<8x512xf32> to vector<8x128xf32>
    %104 = arith.negf %103 : vector<8x128xf32>
    %105 = math.exp %104 : vector<8x128xf32>
    %cst_41 = arith.constant 1.000000e+00 : f32
    %106 = vector.broadcast %cst_41 : f32 to vector<8x128xf32>
    %107 = arith.addf %106, %105 : vector<8x128xf32>
    %108 = arith.divf %106, %107 : vector<8x128xf32>
    %109 = vector.extract_strided_slice %96 {offsets = [0, 256], sizes = [8, 128], strides = [1, 1]} : vector<8x512xf32> to vector<8x128xf32>
    %110 = math.tanh %109 : vector<8x128xf32>
    %111 = vector.extract_strided_slice %96 {offsets = [0, 384], sizes = [8, 128], strides = [1, 1]} : vector<8x512xf32> to vector<8x128xf32>
    %112 = arith.negf %111 : vector<8x128xf32>
    %113 = math.exp %112 : vector<8x128xf32>
    %cst_42 = arith.constant 1.000000e+00 : f32
    %114 = vector.broadcast %cst_42 : f32 to vector<8x128xf32>
    %115 = arith.addf %114, %113 : vector<8x128xf32>
    %116 = arith.divf %114, %115 : vector<8x128xf32>
    %117 = arith.mulf %108, %55 : vector<8x128xf32>
    %118 = arith.mulf %102, %110 : vector<8x128xf32>
    %119 = arith.addf %117, %118 : vector<8x128xf32>
    %120 = math.tanh %119 : vector<8x128xf32>
    %121 = arith.mulf %116, %120 : vector<8x128xf32>
    %c1_i32_43 = arith.constant 1 : i32
    %122 = vector.broadcast %c1_i32_43 : i32 to vector<8x128xi32>
    %123 = arith.cmpi sge, %92, %122 : vector<8x128xi32>
    %124 = arith.select %123, %121, %54 : vector<8x128xi1>, vector<8x128xf32>
    %125 = arith.select %123, %119, %55 : vector<8x128xi1>, vector<8x128xf32>
    %c8_i32_44 = arith.constant 8 : i32
    %126 = arith.muli %c1_i32_33, %c8_i32_44 : i32
    %127 = tpu.assume_multiple %126, 8 : i32
    %128 = arith.index_cast %127 : i32 to index
    %c0_45 = arith.constant 0 : index
    %129 = vector.load %arg11[%128, %c0_45] : memref<32x512xf32, #tpu.memory_space<vmem>>, vector<8x512xf32>
    %130 = vector.extract_strided_slice %89 {offsets = [0, 0], sizes = [8, 512], strides = [1, 1]} : vector<8x1024xf32> to vector<8x512xf32>
    %131 = arith.addf %129, %130 : vector<8x512xf32>
    %132 = vector.extract_strided_slice %131 {offsets = [0, 0], sizes = [8, 128], strides = [1, 1]} : vector<8x512xf32> to vector<8x128xf32>
    %133 = arith.negf %132 : vector<8x128xf32>
    %134 = math.exp %133 : vector<8x128xf32>
    %cst_46 = arith.constant 1.000000e+00 : f32
    %135 = vector.broadcast %cst_46 : f32 to vector<8x128xf32>
    %136 = arith.addf %135, %134 : vector<8x128xf32>
    %137 = arith.divf %135, %136 : vector<8x128xf32>
    %138 = vector.extract_strided_slice %131 {offsets = [0, 128], sizes = [8, 128], strides = [1, 1]} : vector<8x512xf32> to vector<8x128xf32>
    %139 = arith.negf %138 : vector<8x128xf32>
    %140 = math.exp %139 : vector<8x128xf32>
    %cst_47 = arith.constant 1.000000e+00 : f32
    %141 = vector.broadcast %cst_47 : f32 to vector<8x128xf32>
    %142 = arith.addf %141, %140 : vector<8x128xf32>
    %143 = arith.divf %141, %142 : vector<8x128xf32>
    %144 = vector.extract_strided_slice %131 {offsets = [0, 256], sizes = [8, 128], strides = [1, 1]} : vector<8x512xf32> to vector<8x128xf32>
    %145 = math.tanh %144 : vector<8x128xf32>
    %146 = vector.extract_strided_slice %131 {offsets = [0, 384], sizes = [8, 128], strides = [1, 1]} : vector<8x512xf32> to vector<8x128xf32>
    %147 = arith.negf %146 : vector<8x128xf32>
    %148 = math.exp %147 : vector<8x128xf32>
    %cst_48 = arith.constant 1.000000e+00 : f32
    %149 = vector.broadcast %cst_48 : f32 to vector<8x128xf32>
    %150 = arith.addf %149, %148 : vector<8x128xf32>
    %151 = arith.divf %149, %150 : vector<8x128xf32>
    %152 = arith.mulf %143, %84 : vector<8x128xf32>
    %153 = arith.mulf %137, %145 : vector<8x128xf32>
    %154 = arith.addf %152, %153 : vector<8x128xf32>
    %155 = math.tanh %154 : vector<8x128xf32>
    %156 = arith.mulf %151, %155 : vector<8x128xf32>
    %c2_i32 = arith.constant 2 : i32
    %157 = arith.addi %12, %c2_i32 : i32
    %c0_49 = arith.constant 0 : index
    %c0_50 = arith.constant 0 : index
    %158 = vector.load %arg5[%c0_49, %c0_50] : memref<128x1024xf32, #tpu.memory_space<vmem>>, vector<128x1024xf32>
    %cst_51 = arith.constant dense<0.000000e+00> : vector<8x1024xf32>
    %159 = tpu.matmul %156, %158, %cst_51 {dimension_numbers = #tpu.dot_dimension_numbers<[1], [0], [0], [1], [0, 0, 1, 1], [], []>} : vector<8x128xf32>, vector<128x1024xf32>, vector<8x1024xf32> -> vector<8x1024xf32>
    %c0_52 = arith.constant 0 : index
    %c0_53 = arith.constant 0 : index
    %160 = vector.load %arg6[%c0_52, %c0_53] : memref<128x512xf32, #tpu.memory_space<vmem>>, vector<128x512xf32>
    %cst_54 = arith.constant dense<0.000000e+00> : vector<8x512xf32>
    %161 = tpu.matmul %124, %160, %cst_54 {dimension_numbers = #tpu.dot_dimension_numbers<[1], [0], [0], [1], [0, 0, 1, 1], [], []>} : vector<8x128xf32>, vector<128x512xf32>, vector<8x512xf32> -> vector<8x512xf32>
    %162 = vector.broadcast %157 : i32 to vector<8x128xi32>
    %163 = vector.extract_strided_slice %159 {offsets = [0, 512], sizes = [8, 512], strides = [1, 1]} : vector<8x1024xf32> to vector<8x512xf32>
    %164 = arith.addf %163, %161 : vector<8x512xf32>
    %165 = vector.broadcast %11 : vector<1x512xf32> to vector<8x512xf32>
    %166 = arith.addf %164, %165 : vector<8x512xf32>
    %167 = vector.extract_strided_slice %166 {offsets = [0, 0], sizes = [8, 128], strides = [1, 1]} : vector<8x512xf32> to vector<8x128xf32>
    %168 = arith.negf %167 : vector<8x128xf32>
    %169 = math.exp %168 : vector<8x128xf32>
    %cst_55 = arith.constant 1.000000e+00 : f32
    %170 = vector.broadcast %cst_55 : f32 to vector<8x128xf32>
    %171 = arith.addf %170, %169 : vector<8x128xf32>
    %172 = arith.divf %170, %171 : vector<8x128xf32>
    %173 = vector.extract_strided_slice %166 {offsets = [0, 128], sizes = [8, 128], strides = [1, 1]} : vector<8x512xf32> to vector<8x128xf32>
    %174 = arith.negf %173 : vector<8x128xf32>
    %175 = math.exp %174 : vector<8x128xf32>
    %cst_56 = arith.constant 1.000000e+00 : f32
    %176 = vector.broadcast %cst_56 : f32 to vector<8x128xf32>
    %177 = arith.addf %176, %175 : vector<8x128xf32>
    %178 = arith.divf %176, %177 : vector<8x128xf32>
    %179 = vector.extract_strided_slice %166 {offsets = [0, 256], sizes = [8, 128], strides = [1, 1]} : vector<8x512xf32> to vector<8x128xf32>
    %180 = math.tanh %179 : vector<8x128xf32>
    %181 = vector.extract_strided_slice %166 {offsets = [0, 384], sizes = [8, 128], strides = [1, 1]} : vector<8x512xf32> to vector<8x128xf32>
    %182 = arith.negf %181 : vector<8x128xf32>
    %183 = math.exp %182 : vector<8x128xf32>
    %cst_57 = arith.constant 1.000000e+00 : f32
    %184 = vector.broadcast %cst_57 : f32 to vector<8x128xf32>
    %185 = arith.addf %184, %183 : vector<8x128xf32>
    %186 = arith.divf %184, %185 : vector<8x128xf32>
    %187 = arith.mulf %178, %125 : vector<8x128xf32>
    %188 = arith.mulf %172, %180 : vector<8x128xf32>
    %189 = arith.addf %187, %188 : vector<8x128xf32>
    %190 = math.tanh %189 : vector<8x128xf32>
    %191 = arith.mulf %186, %190 : vector<8x128xf32>
    %c1_i32_58 = arith.constant 1 : i32
    %192 = vector.broadcast %c1_i32_58 : i32 to vector<8x128xi32>
    %193 = arith.cmpi sge, %162, %192 : vector<8x128xi32>
    %194 = arith.select %193, %191, %124 : vector<8x128xi1>, vector<8x128xf32>
    %195 = arith.select %193, %189, %125 : vector<8x128xi1>, vector<8x128xf32>
    %c8_i32_59 = arith.constant 8 : i32
    %196 = arith.muli %c2_i32, %c8_i32_59 : i32
    %197 = tpu.assume_multiple %196, 8 : i32
    %198 = arith.index_cast %197 : i32 to index
    %c0_60 = arith.constant 0 : index
    %199 = vector.load %arg11[%198, %c0_60] : memref<32x512xf32, #tpu.memory_space<vmem>>, vector<8x512xf32>
    %200 = vector.extract_strided_slice %159 {offsets = [0, 0], sizes = [8, 512], strides = [1, 1]} : vector<8x1024xf32> to vector<8x512xf32>
    %201 = arith.addf %199, %200 : vector<8x512xf32>
    %202 = vector.extract_strided_slice %201 {offsets = [0, 0], sizes = [8, 128], strides = [1, 1]} : vector<8x512xf32> to vector<8x128xf32>
    %203 = arith.negf %202 : vector<8x128xf32>
    %204 = math.exp %203 : vector<8x128xf32>
    %cst_61 = arith.constant 1.000000e+00 : f32
    %205 = vector.broadcast %cst_61 : f32 to vector<8x128xf32>
    %206 = arith.addf %205, %204 : vector<8x128xf32>
    %207 = arith.divf %205, %206 : vector<8x128xf32>
    %208 = vector.extract_strided_slice %201 {offsets = [0, 128], sizes = [8, 128], strides = [1, 1]} : vector<8x512xf32> to vector<8x128xf32>
    %209 = arith.negf %208 : vector<8x128xf32>
    %210 = math.exp %209 : vector<8x128xf32>
    %cst_62 = arith.constant 1.000000e+00 : f32
    %211 = vector.broadcast %cst_62 : f32 to vector<8x128xf32>
    %212 = arith.addf %211, %210 : vector<8x128xf32>
    %213 = arith.divf %211, %212 : vector<8x128xf32>
    %214 = vector.extract_strided_slice %201 {offsets = [0, 256], sizes = [8, 128], strides = [1, 1]} : vector<8x512xf32> to vector<8x128xf32>
    %215 = math.tanh %214 : vector<8x128xf32>
    %216 = vector.extract_strided_slice %201 {offsets = [0, 384], sizes = [8, 128], strides = [1, 1]} : vector<8x512xf32> to vector<8x128xf32>
    %217 = arith.negf %216 : vector<8x128xf32>
    %218 = math.exp %217 : vector<8x128xf32>
    %cst_63 = arith.constant 1.000000e+00 : f32
    %219 = vector.broadcast %cst_63 : f32 to vector<8x128xf32>
    %220 = arith.addf %219, %218 : vector<8x128xf32>
    %221 = arith.divf %219, %220 : vector<8x128xf32>
    %222 = arith.mulf %213, %154 : vector<8x128xf32>
    %223 = arith.mulf %207, %215 : vector<8x128xf32>
    %224 = arith.addf %222, %223 : vector<8x128xf32>
    %225 = math.tanh %224 : vector<8x128xf32>
    %226 = arith.mulf %221, %225 : vector<8x128xf32>
    %c3_i32 = arith.constant 3 : i32
    %227 = arith.addi %12, %c3_i32 : i32
    %c0_64 = arith.constant 0 : index
    %c0_65 = arith.constant 0 : index
    %228 = vector.load %arg5[%c0_64, %c0_65] : memref<128x1024xf32, #tpu.memory_space<vmem>>, vector<128x1024xf32>
    %cst_66 = arith.constant dense<0.000000e+00> : vector<8x1024xf32>
    %229 = tpu.matmul %226, %228, %cst_66 {dimension_numbers = #tpu.dot_dimension_numbers<[1], [0], [0], [1], [0, 0, 1, 1], [], []>} : vector<8x128xf32>, vector<128x1024xf32>, vector<8x1024xf32> -> vector<8x1024xf32>
    %c0_67 = arith.constant 0 : index
    %c0_68 = arith.constant 0 : index
    %230 = vector.load %arg6[%c0_67, %c0_68] : memref<128x512xf32, #tpu.memory_space<vmem>>, vector<128x512xf32>
    %cst_69 = arith.constant dense<0.000000e+00> : vector<8x512xf32>
    %231 = tpu.matmul %194, %230, %cst_69 {dimension_numbers = #tpu.dot_dimension_numbers<[1], [0], [0], [1], [0, 0, 1, 1], [], []>} : vector<8x128xf32>, vector<128x512xf32>, vector<8x512xf32> -> vector<8x512xf32>
    %232 = vector.broadcast %227 : i32 to vector<8x128xi32>
    %233 = vector.extract_strided_slice %229 {offsets = [0, 512], sizes = [8, 512], strides = [1, 1]} : vector<8x1024xf32> to vector<8x512xf32>
    %234 = arith.addf %233, %231 : vector<8x512xf32>
    %235 = vector.broadcast %11 : vector<1x512xf32> to vector<8x512xf32>
    %236 = arith.addf %234, %235 : vector<8x512xf32>
    %237 = vector.extract_strided_slice %236 {offsets = [0, 0], sizes = [8, 128], strides = [1, 1]} : vector<8x512xf32> to vector<8x128xf32>
    %238 = arith.negf %237 : vector<8x128xf32>
    %239 = math.exp %238 : vector<8x128xf32>
    %cst_70 = arith.constant 1.000000e+00 : f32
    %240 = vector.broadcast %cst_70 : f32 to vector<8x128xf32>
    %241 = arith.addf %240, %239 : vector<8x128xf32>
    %242 = arith.divf %240, %241 : vector<8x128xf32>
    %243 = vector.extract_strided_slice %236 {offsets = [0, 128], sizes = [8, 128], strides = [1, 1]} : vector<8x512xf32> to vector<8x128xf32>
    %244 = arith.negf %243 : vector<8x128xf32>
    %245 = math.exp %244 : vector<8x128xf32>
    %cst_71 = arith.constant 1.000000e+00 : f32
    %246 = vector.broadcast %cst_71 : f32 to vector<8x128xf32>
    %247 = arith.addf %246, %245 : vector<8x128xf32>
    %248 = arith.divf %246, %247 : vector<8x128xf32>
    %249 = vector.extract_strided_slice %236 {offsets = [0, 256], sizes = [8, 128], strides = [1, 1]} : vector<8x512xf32> to vector<8x128xf32>
    %250 = math.tanh %249 : vector<8x128xf32>
    %251 = vector.extract_strided_slice %236 {offsets = [0, 384], sizes = [8, 128], strides = [1, 1]} : vector<8x512xf32> to vector<8x128xf32>
    %252 = arith.negf %251 : vector<8x128xf32>
    %253 = math.exp %252 : vector<8x128xf32>
    %cst_72 = arith.constant 1.000000e+00 : f32
    %254 = vector.broadcast %cst_72 : f32 to vector<8x128xf32>
    %255 = arith.addf %254, %253 : vector<8x128xf32>
    %256 = arith.divf %254, %255 : vector<8x128xf32>
    %257 = arith.mulf %248, %195 : vector<8x128xf32>
    %258 = arith.mulf %242, %250 : vector<8x128xf32>
    %259 = arith.addf %257, %258 : vector<8x128xf32>
    %260 = math.tanh %259 : vector<8x128xf32>
    %261 = arith.mulf %256, %260 : vector<8x128xf32>
    %c1_i32_73 = arith.constant 1 : i32
    %262 = vector.broadcast %c1_i32_73 : i32 to vector<8x128xi32>
    %263 = arith.cmpi sge, %232, %262 : vector<8x128xi32>
    %264 = arith.select %263, %261, %194 : vector<8x128xi1>, vector<8x128xf32>
    %265 = arith.select %263, %259, %195 : vector<8x128xi1>, vector<8x128xf32>
    %c8_i32_74 = arith.constant 8 : i32
    %266 = arith.muli %c3_i32, %c8_i32_74 : i32
    %267 = tpu.assume_multiple %266, 8 : i32
    %268 = arith.index_cast %267 : i32 to index
    %c0_75 = arith.constant 0 : index
    %269 = vector.load %arg11[%268, %c0_75] : memref<32x512xf32, #tpu.memory_space<vmem>>, vector<8x512xf32>
    %270 = vector.extract_strided_slice %229 {offsets = [0, 0], sizes = [8, 512], strides = [1, 1]} : vector<8x1024xf32> to vector<8x512xf32>
    %271 = arith.addf %269, %270 : vector<8x512xf32>
    %272 = vector.extract_strided_slice %271 {offsets = [0, 0], sizes = [8, 128], strides = [1, 1]} : vector<8x512xf32> to vector<8x128xf32>
    %273 = arith.negf %272 : vector<8x128xf32>
    %274 = math.exp %273 : vector<8x128xf32>
    %cst_76 = arith.constant 1.000000e+00 : f32
    %275 = vector.broadcast %cst_76 : f32 to vector<8x128xf32>
    %276 = arith.addf %275, %274 : vector<8x128xf32>
    %277 = arith.divf %275, %276 : vector<8x128xf32>
    %278 = vector.extract_strided_slice %271 {offsets = [0, 128], sizes = [8, 128], strides = [1, 1]} : vector<8x512xf32> to vector<8x128xf32>
    %279 = arith.negf %278 : vector<8x128xf32>
    %280 = math.exp %279 : vector<8x128xf32>
    %cst_77 = arith.constant 1.000000e+00 : f32
    %281 = vector.broadcast %cst_77 : f32 to vector<8x128xf32>
    %282 = arith.addf %281, %280 : vector<8x128xf32>
    %283 = arith.divf %281, %282 : vector<8x128xf32>
    %284 = vector.extract_strided_slice %271 {offsets = [0, 256], sizes = [8, 128], strides = [1, 1]} : vector<8x512xf32> to vector<8x128xf32>
    %285 = math.tanh %284 : vector<8x128xf32>
    %286 = vector.extract_strided_slice %271 {offsets = [0, 384], sizes = [8, 128], strides = [1, 1]} : vector<8x512xf32> to vector<8x128xf32>
    %287 = arith.negf %286 : vector<8x128xf32>
    %288 = math.exp %287 : vector<8x128xf32>
    %cst_78 = arith.constant 1.000000e+00 : f32
    %289 = vector.broadcast %cst_78 : f32 to vector<8x128xf32>
    %290 = arith.addf %289, %288 : vector<8x128xf32>
    %291 = arith.divf %289, %290 : vector<8x128xf32>
    %292 = arith.mulf %283, %224 : vector<8x128xf32>
    %293 = arith.mulf %277, %285 : vector<8x128xf32>
    %294 = arith.addf %292, %293 : vector<8x128xf32>
    %295 = math.tanh %294 : vector<8x128xf32>
    %296 = arith.mulf %291, %295 : vector<8x128xf32>
    %c4_i32_79 = arith.constant 4 : i32
    %c0_80 = arith.constant 0 : index
    %c0_81 = arith.constant 0 : index
    %297 = vector.load %arg12[%c0_80, %c0_81] : memref<8x128xf32, #tpu.memory_space<vmem>>, vector<8x128xf32>
    tpu.vector_store %arg12[%c0_80, %c0_81], %296 {strides = array<i32>} : memref<8x128xf32, #tpu.memory_space<vmem>>, vector<8x128xf32>,
    %c0_82 = arith.constant 0 : index
    %c0_83 = arith.constant 0 : index
    %298 = vector.load %arg13[%c0_82, %c0_83] : memref<8x128xf32, #tpu.memory_space<vmem>>, vector<8x128xf32>
    tpu.vector_store %arg13[%c0_82, %c0_83], %294 {strides = array<i32>} : memref<8x128xf32, #tpu.memory_space<vmem>>, vector<8x128xf32>,
    %c0_84 = arith.constant 0 : index
    %c0_85 = arith.constant 0 : index
    %299 = vector.load %arg14[%c0_84, %c0_85] : memref<8x128xf32, #tpu.memory_space<vmem>>, vector<8x128xf32>
    tpu.vector_store %arg14[%c0_84, %c0_85], %264 {strides = array<i32>} : memref<8x128xf32, #tpu.memory_space<vmem>>, vector<8x128xf32>,
    %c0_86 = arith.constant 0 : index
    %c0_87 = arith.constant 0 : index
    %300 = vector.load %arg15[%c0_86, %c0_87] : memref<8x128xf32, #tpu.memory_space<vmem>>, vector<8x128xf32>
    tpu.vector_store %arg15[%c0_86, %c0_87], %265 {strides = array<i32>} : memref<8x128xf32, #tpu.memory_space<vmem>>, vector<8x128xf32>,
    %c1_i32_88 = arith.constant 1 : i32
    %301 = arith.cmpi eq, %arg1, %c1_i32_88 : i32
    %302 = arith.extui %301 : i1 to i32
    %c0_i32_89 = arith.constant 0 : i32
    %303 = arith.cmpi ne, %302, %c0_i32_89 : i32
    scf.if %303 {
      %c0_90 = arith.constant 0 : index
      %c512 = arith.constant 512 : index
      %304 = vector.load %arg5[%c0_90, %c512] : memref<128x1024xf32, #tpu.memory_space<vmem>>, vector<128x512xf32>
      %cst_91 = arith.constant dense<0.000000e+00> : vector<8x512xf32>
      %305 = tpu.matmul %296, %304, %cst_91 {dimension_numbers = #tpu.dot_dimension_numbers<[1], [0], [0], [1], [0, 0, 1, 1], [], []>} : vector<8x128xf32>, vector<128x512xf32>, vector<8x512xf32> -> vector<8x512xf32>
      %c0_92 = arith.constant 0 : index
      %c0_93 = arith.constant 0 : index
      %306 = vector.load %arg6[%c0_92, %c0_93] : memref<128x512xf32, #tpu.memory_space<vmem>>, vector<128x512xf32>
      %cst_94 = arith.constant dense<0.000000e+00> : vector<8x512xf32>
      %307 = tpu.matmul %264, %306, %cst_94 {dimension_numbers = #tpu.dot_dimension_numbers<[1], [0], [0], [1], [0, 0, 1, 1], [], []>} : vector<8x128xf32>, vector<128x512xf32>, vector<8x512xf32> -> vector<8x512xf32>
      %308 = arith.addf %305, %307 : vector<8x512xf32>
      %309 = vector.broadcast %11 : vector<1x512xf32> to vector<8x512xf32>
      %310 = arith.addf %308, %309 : vector<8x512xf32>
      %311 = vector.extract_strided_slice %310 {offsets = [0, 0], sizes = [8, 128], strides = [1, 1]} : vector<8x512xf32> to vector<8x128xf32>
      %312 = arith.negf %311 : vector<8x128xf32>
      %313 = math.exp %312 : vector<8x128xf32>
      %cst_95 = arith.constant 1.000000e+00 : f32
      %314 = vector.broadcast %cst_95 : f32 to vector<8x128xf32>
      %315 = arith.addf %314, %313 : vector<8x128xf32>
      %316 = arith.divf %314, %315 : vector<8x128xf32>
      %317 = vector.extract_strided_slice %310 {offsets = [0, 128], sizes = [8, 128], strides = [1, 1]} : vector<8x512xf32> to vector<8x128xf32>
      %318 = arith.negf %317 : vector<8x128xf32>
      %319 = math.exp %318 : vector<8x128xf32>
      %cst_96 = arith.constant 1.000000e+00 : f32
      %320 = vector.broadcast %cst_96 : f32 to vector<8x128xf32>
      %321 = arith.addf %320, %319 : vector<8x128xf32>
      %322 = arith.divf %320, %321 : vector<8x128xf32>
      %323 = vector.extract_strided_slice %310 {offsets = [0, 256], sizes = [8, 128], strides = [1, 1]} : vector<8x512xf32> to vector<8x128xf32>
      %324 = math.tanh %323 : vector<8x128xf32>
      %325 = vector.extract_strided_slice %310 {offsets = [0, 384], sizes = [8, 128], strides = [1, 1]} : vector<8x512xf32> to vector<8x128xf32>
      %326 = arith.negf %325 : vector<8x128xf32>
      %327 = math.exp %326 : vector<8x128xf32>
      %cst_97 = arith.constant 1.000000e+00 : f32
      %328 = vector.broadcast %cst_97 : f32 to vector<8x128xf32>
      %329 = arith.addf %328, %327 : vector<8x128xf32>
      %330 = arith.divf %328, %329 : vector<8x128xf32>
      %331 = arith.mulf %322, %265 : vector<8x128xf32>
      %332 = arith.mulf %316, %324 : vector<8x128xf32>
      %333 = arith.addf %331, %332 : vector<8x128xf32>
      %334 = math.tanh %333 : vector<8x128xf32>
      %335 = arith.mulf %330, %334 : vector<8x128xf32>
      %c0_98 = arith.constant 0 : index
      %c0_99 = arith.constant 0 : index
      %336 = vector.load %arg8[%c0_98, %c0_99] : memref<128x128xf32, #tpu.memory_space<vmem>>, vector<128x128xf32>
      %cst_100 = arith.constant dense<0.000000e+00> : vector<8x128xf32>
      %337 = tpu.matmul %335, %336, %cst_100 {dimension_numbers = #tpu.dot_dimension_numbers<[1], [0], [0], [1], [0, 0, 1, 1], [], []>} : vector<8x128xf32>, vector<128x128xf32>, vector<8x128xf32> -> vector<8x128xf32>
      %c0_101 = arith.constant 0 : index
      %c0_102 = arith.constant 0 : index
      %338 = vector.load %arg9[%c0_101, %c0_102] : memref<1x128xf32, #tpu.memory_space<vmem>>, vector<1x128xf32>
      %339 = vector.broadcast %338 : vector<1x128xf32> to vector<8x128xf32>
      %340 = arith.addf %337, %339 : vector<8x128xf32>
      %c0_103 = arith.constant 0 : index
      %c0_104 = arith.constant 0 : index
      %341 = vector.load %arg10[%c0_103, %c0_104] : memref<8x128xf32, #tpu.memory_space<vmem>>, vector<8x128xf32>
      tpu.vector_store %arg10[%c0_103, %c0_104], %340 {strides = array<i32>} : memref<8x128xf32, #tpu.memory_space<vmem>>, vector<8x128xf32>,
    } else {
    }
    return
  }
  func.func @transform_0(%arg0: i32, %arg1: i32) -> (i32, i32, i32) {
    %c2_i32 = arith.constant 2 : i32
    %0 = arith.muli %arg0, %c2_i32 : i32
    %1 = arith.addi %0, %arg1 : i32
    %c0_i32 = arith.constant 0 : i32
    %c0_i32_0 = arith.constant 0 : i32
    %c0_i32_1 = arith.constant 0 : i32
    return %1, %c0_i32, %c0_i32_0 : i32, i32, i32
  }
  func.func @transform_1(%arg0: i32, %arg1: i32) -> (i32, i32) {
    %c0_i32 = arith.constant 0 : i32
    %c0_i32_0 = arith.constant 0 : i32
    %c0_i32_1 = arith.constant 0 : i32
    return %c0_i32, %c0_i32_0 : i32, i32
  }
  func.func @transform_2(%arg0: i32, %arg1: i32) -> (i32, i32) {
    %c0_i32 = arith.constant 0 : i32
    %c0_i32_0 = arith.constant 0 : i32
    %c0_i32_1 = arith.constant 0 : i32
    return %c0_i32, %c0_i32_0 : i32, i32
  }
  func.func @transform_3(%arg0: i32, %arg1: i32) -> (i32, i32) {
    %c0_i32 = arith.constant 0 : i32
    %c0_i32_0 = arith.constant 0 : i32
    %c0_i32_1 = arith.constant 0 : i32
    return %c0_i32, %c0_i32_0 : i32, i32
  }
  func.func @transform_4(%arg0: i32, %arg1: i32) -> (i32, i32) {
    %c0_i32 = arith.constant 0 : i32
    %c0_i32_0 = arith.constant 0 : i32
    %c0_i32_1 = arith.constant 0 : i32
    return %c0_i32, %c0_i32_0 : i32, i32
  }
  func.func @transform_5(%arg0: i32, %arg1: i32) -> (i32, i32) {
    %c0_i32 = arith.constant 0 : i32
    %c0_i32_0 = arith.constant 0 : i32
    %c0_i32_1 = arith.constant 0 : i32
    return %c0_i32, %c0_i32_0 : i32, i32
  }
  func.func @transform_6(%arg0: i32, %arg1: i32) -> (i32, i32) {
    %c0_i32 = arith.constant 0 : i32
    %c0_i32_0 = arith.constant 0 : i32
    %c0_i32_1 = arith.constant 0 : i32
    return %c0_i32, %c0_i32_0 : i32, i32
  }
  func.func @transform_7(%arg0: i32, %arg1: i32) -> (i32, i32) {
    %c0_i32 = arith.constant 0 : i32
    %c0_i32_0 = arith.constant 0 : i32
    %c0_i32_1 = arith.constant 0 : i32
    return %c0_i32, %c0_i32_0 : i32, i32
  }
  func.func @transform_8(%arg0: i32, %arg1: i32) -> (i32, i32) {
    %c0_i32 = arith.constant 0 : i32
    %c0_i32_0 = arith.constant 0 : i32
    return %arg0, %c0_i32 : i32, i32
  }
}

</mosaic_0001>

<llo_original>
// kernel: lstm_model_forward.1
$region0: #{lstm_model_forward.1}
  #allocation0 [shape = 'u32[]', space=smem, size = 0x4, offset = 0x4, fixed_abs, tag = 'smem constant byte address 0x4 - core index']
  #allocation1 [shape = 'u32[144,128]{1,0:T(1,128)}', space=vmem, size = 0x12000, scoped, tag = 'internal scratch']
  #allocation2 [shape = 'f32[32,512]{1,0:T(8,128)}', space=vmem, size = 0x10000, scoped, tag = 'scratch operand']
  #allocation3 [shape = 'f32[8,128]{1,0:T(8,128)}', space=vmem, size = 0x1000, scoped, tag = 'scratch operand']
  #allocation4 [shape = 'f32[8,128]{1,0:T(8,128)}', space=vmem, size = 0x1000, scoped, tag = 'scratch operand']
  #allocation5 [shape = 'f32[8,128]{1,0:T(8,128)}', space=vmem, size = 0x1000, scoped, tag = 'scratch operand']
  #allocation6 [shape = 'f32[8,128]{1,0:T(8,128)}', space=vmem, size = 0x1000, scoped, tag = 'scratch operand']
  %s0 = inlined_call_operand.vmem [shape: f32[2,32,8], index: 0, kind: input, shape index: {}]
  %s1 = inlined_call_operand.vmem [shape: f32[8,512], index: 1, kind: input, shape index: {}]
  %s2 = inlined_call_operand.vmem [shape: f32[1,512], index: 2, kind: input, shape index: {}]
  %s3 = inlined_call_operand.hbm [shape: f32[128,1024], index: 3, kind: input, shape index: {}]
  %s4 = inlined_call_operand.hbm [shape: f32[128,512], index: 4, kind: input, shape index: {}]
  %s5 = inlined_call_operand.vmem [shape: f32[1,512], index: 5, kind: input, shape index: {}]
  %s6 = inlined_call_operand.hbm [shape: f32[128,128], index: 6, kind: input, shape index: {}]
  %s7 = inlined_call_operand.vmem [shape: f32[1,128], index: 7, kind: input, shape index: {}]
  %s8 = inlined_call_operand.vmem [shape: f32[8,128], index: 8, kind: output, shape index: {}]
  %s9 = sld [smem:[#allocation0]]
  $region85: #{lstm_model_forward.1} parent=0
    _
  %s11 = ssub.s32 1, %s9
  %s12 = scalar_select 0, %s11, %s9
  $region1: #{lstm_model_forward.1} parent=0
    #allocation7 [shape = 'u8[524288]{0}', space=vmem, size = 0x80000, scoped, tag = 'input window, operand 3, single buffered']
    #allocation8 [shape = 's32[2]{0}', space=sflag, size = 0x8, scoped, tag = 'scoped memory for lstm_model_forward.1']
    #allocation9 [shape = 'u8[262144]{0}', space=vmem, size = 0x40000, scoped, tag = 'input window, operand 4, single buffered']
    #allocation10 [shape = 's32[1]{0}', space=sflag, size = 0x4, scoped, tag = 'scoped memory for lstm_model_forward.1']
    #allocation11 [shape = 'u8[65536]{0}', space=vmem, size = 0x10000, scoped, tag = 'input window, operand 6, single buffered']
    %13 = vsyncpa [#allocation8], 0
    %14 = vsyncpa [#allocation10], 0
    loop: start=0, step=1, limit=4
    $region2: #{lstm_model_forward.1} parent=1 // loop_pre_header
      _
    $region3: #{lstm_model_forward.1} parent=1 // loop_header
      %s16 = sphi 0, %s20
      %p17 = scmp.ge.s32.totalorder %s16, 4
      %s23 = sphi 0, %s35
      %s24 = sphi 0, %s31
      %s25 = sphi 0, %s23
      %s26 = sphi 0, %s24
      %s27 = sphi 0, %s25
      %s28 = sphi 0, %s26
      %s42 = sphi 0, %s44
      %s45 = sphi 0, %s42
      %s46 = sphi 0, %s45
      %s62 = sphi 0, %s46
      %s66 = sphi 0, %s66
      %s68 = sphi 0, %s66
      %s69 = sphi 0, %s68
      %s83 = sphi 0, %s69
      %s87 = sphi 0, %s87
      %s89 = sphi 0, %s87
      %s90 = sphi 0, %s89
      %s104 = sphi 0, %s90
      %s108 = sphi 0, %s108
      %s110 = sphi 0, %s108
      %s111 = sphi 0, %s110
      %s125 = sphi 0, %s111
      %s129 = sphi 0, %s129
      %s131 = sphi 0, %s129
      %s132 = sphi 0, %s131
      %s146 = sphi 0, %s132
      %s150 = sphi 0, %s150
      %s152 = sphi 0, %s150
      %s153 = sphi 0, %s152
      %s167 = sphi 0, %s153
      %s171 = sphi 0, %s171
      %s173 = sphi 0, %s171
      %s174 = sphi 0, %s173
      %s188 = sphi 0, %s174
      %s192 = sphi 0, %s192
      %s194 = sphi 0, %s192
      %s195 = sphi 0, %s194
      %s209 = sphi 0, %s195
      %s215 = sphi 0, %s217
      %s218 = sphi 0, %s215
      %s219 = sphi 0, %s218
      %s235 = sphi 0, %s219
    $region4: #{lstm_model_forward.1} parent=1 // loop_header_branch
      %19 = sbr.rel (%p17) target = $region8
    $region5: #{lstm_model_forward.1} parent=1 // loop_body
      %s21 = ssub.s32 %s16, 1
      %s22 = ssub.s32 %s16, 2
      %s29 = sadd.s32 1, %s24
      %p30 = scmp.ge.s32.totalorder %s29, 2
      %s31 = scalar_select %p30, 0, %s29
      %s32 = sadd.s32 1, %s23
      %s33 = scalar_select %p30, %s32, %s23
      %p34 = scmp.ge.s32.totalorder %s33, 1
      %s35 = scalar_select %p34, 0, %s33
      %s36 = smul.u32 %s23, 2
      %s37 = sadd.s32 %s36, %s24
      %s38 = smul.u32 %s35, 2
      %s39 = sadd.s32 %s38, %s31
      %s40 = ssub.s32 %s37, %s39
      %p41 = scmp.eq.s32.totalorder %s40, 0
      %s43 = sadd.s32 %s42, 1
      %s44 = scalar_select %p41, %s42, %s43
      %p47 = pneg %p41
      %p48 = scmp.eq.s32.totalorder %s16, 1
      %p49 = por %p47, %p48
      %p50 = scmp.ne.s32.totalorder %s42, %s45
      %p51 = scmp.eq.s32.totalorder %s16, 0
      %p52 = por %p50, %p51
      %p53 = scmp.ne.s32.totalorder %s42, %s45
      %p54 = scmp.eq.s32.totalorder %s21, 1
      %p55 = por %p53, %p54
      %p56 = scmp.ne.s32.totalorder %s45, %s46
      %p57 = scmp.eq.s32.totalorder %s21, 0
      %p58 = por %p56, %p57
      %p59 = scmp.ne.s32.totalorder %s45, %s46
      %p60 = scmp.eq.s32.totalorder %s22, 1
      %p61 = por %p59, %p60
      %p63 = scmp.ne.s32.totalorder %s46, %s62
      %p64 = scmp.eq.s32.totalorder %s22, 0
      %p65 = por %p63, %p64
      %s67 = sadd.s32 %s66, 1
      %p70 = scmp.eq.s32.totalorder %s16, 1
      %p71 = scmp.ne.s32.totalorder %s66, %s68
      %p72 = scmp.eq.s32.totalorder %s16, 0
      %p73 = por %p71, %p72
      %p74 = scmp.ne.s32.totalorder %s66, %s68
      %p75 = scmp.eq.s32.totalorder %s21, 1
      %p76 = por %p74, %p75
      %p77 = scmp.ne.s32.totalorder %s68, %s69
      %p78 = scmp.eq.s32.totalorder %s21, 0
      %p79 = por %p77, %p78
      %p80 = scmp.ne.s32.totalorder %s68, %s69
      %p81 = scmp.eq.s32.totalorder %s22, 1
      %p82 = por %p80, %p81
      %p84 = scmp.ne.s32.totalorder %s69, %s83
      %p85 = scmp.eq.s32.totalorder %s22, 0
      %p86 = por %p84, %p85
      %s88 = sadd.s32 %s87, 1
      %p91 = scmp.eq.s32.totalorder %s16, 1
      %p92 = scmp.ne.s32.totalorder %s87, %s89
      %p93 = scmp.eq.s32.totalorder %s16, 0
      %p94 = por %p92, %p93
      %p95 = scmp.ne.s32.totalorder %s87, %s89
      %p96 = scmp.eq.s32.totalorder %s21, 1
      %p97 = por %p95, %p96
      %p98 = scmp.ne.s32.totalorder %s89, %s90
      %p99 = scmp.eq.s32.totalorder %s21, 0
      %p100 = por %p98, %p99
      %p101 = scmp.ne.s32.totalorder %s89, %s90
      %p102 = scmp.eq.s32.totalorder %s22, 1
      %p103 = por %p101, %p102
      %p105 = scmp.ne.s32.totalorder %s90, %s104
      %p106 = scmp.eq.s32.totalorder %s22, 0
      %p107 = por %p105, %p106
      %s109 = sadd.s32 %s108, 1
      %p112 = scmp.eq.s32.totalorder %s16, 1
      %p113 = scmp.ne.s32.totalorder %s108, %s110
      %p114 = scmp.eq.s32.totalorder %s16, 0
      %p115 = por %p113, %p114
      %p116 = scmp.ne.s32.totalorder %s108, %s110
      %p117 = scmp.eq.s32.totalorder %s21, 1
      %p118 = por %p116, %p117
      %p119 = scmp.ne.s32.totalorder %s110, %s111
      %p120 = scmp.eq.s32.totalorder %s21, 0
      %p121 = por %p119, %p120
      %p122 = scmp.ne.s32.totalorder %s110, %s111
      %p123 = scmp.eq.s32.totalorder %s22, 1
      %p124 = por %p122, %p123
      %p126 = scmp.ne.s32.totalorder %s111, %s125
      %p127 = scmp.eq.s32.totalorder %s22, 0
      %p128 = por %p126, %p127
      %s130 = sadd.s32 %s129, 1
      %p133 = scmp.eq.s32.totalorder %s16, 1
      %p134 = scmp.ne.s32.totalorder %s129, %s131
      %p135 = scmp.eq.s32.totalorder %s16, 0
      %p136 = por %p134, %p135
      %p137 = scmp.ne.s32.totalorder %s129, %s131
      %p138 = scmp.eq.s32.totalorder %s21, 1
      %p139 = por %p137, %p138
      %p140 = scmp.ne.s32.totalorder %s131, %s132
      %p141 = scmp.eq.s32.totalorder %s21, 0
      %p142 = por %p140, %p141
      %p143 = scmp.ne.s32.totalorder %s131, %s132
      %p144 = scmp.eq.s32.totalorder %s22, 1
      %p145 = por %p143, %p144
      %p147 = scmp.ne.s32.totalorder %s132, %s146
      %p148 = scmp.eq.s32.totalorder %s22, 0
      %p149 = por %p147, %p148
      %s151 = sadd.s32 %s150, 1
      %p154 = scmp.eq.s32.totalorder %s16, 1
      %p155 = scmp.ne.s32.totalorder %s150, %s152
      %p156 = scmp.eq.s32.totalorder %s16, 0
      %p157 = por %p155, %p156
      %p158 = scmp.ne.s32.totalorder %s150, %s152
      %p159 = scmp.eq.s32.totalorder %s21, 1
      %p160 = por %p158, %p159
      %p161 = scmp.ne.s32.totalorder %s152, %s153
      %p162 = scmp.eq.s32.totalorder %s21, 0
      %p163 = por %p161, %p162
      %p164 = scmp.ne.s32.totalorder %s152, %s153
      %p165 = scmp.eq.s32.totalorder %s22, 1
      %p166 = por %p164, %p165
      %p168 = scmp.ne.s32.totalorder %s153, %s167
      %p169 = scmp.eq.s32.totalorder %s22, 0
      %p170 = por %p168, %p169
      %s172 = sadd.s32 %s171, 1
      %p175 = scmp.eq.s32.totalorder %s16, 1
      %p176 = scmp.ne.s32.totalorder %s171, %s173
      %p177 = scmp.eq.s32.totalorder %s16, 0
      %p178 = por %p176, %p177
      %p179 = scmp.ne.s32.totalorder %s171, %s173
      %p180 = scmp.eq.s32.totalorder %s21, 1
      %p181 = por %p179, %p180
      %p182 = scmp.ne.s32.totalorder %s173, %s174
      %p183 = scmp.eq.s32.totalorder %s21, 0
      %p184 = por %p182, %p183
      %p185 = scmp.ne.s32.totalorder %s173, %s174
      %p186 = scmp.eq.s32.totalorder %s22, 1
      %p187 = por %p185, %p186
      %p189 = scmp.ne.s32.totalorder %s174, %s188
      %p190 = scmp.eq.s32.totalorder %s22, 0
      %p191 = por %p189, %p190
      %s193 = sadd.s32 %s192, 1
      %p196 = scmp.eq.s32.totalorder %s16, 1
      %p197 = scmp.ne.s32.totalorder %s192, %s194
      %p198 = scmp.eq.s32.totalorder %s16, 0
      %p199 = por %p197, %p198
      %p200 = scmp.ne.s32.totalorder %s192, %s194
      %p201 = scmp.eq.s32.totalorder %s21, 1
      %p202 = por %p200, %p201
      %p203 = scmp.ne.s32.totalorder %s194, %s195
      %p204 = scmp.eq.s32.totalorder %s21, 0
      %p205 = por %p203, %p204
      %p206 = scmp.ne.s32.totalorder %s194, %s195
      %p207 = scmp.eq.s32.totalorder %s22, 1
      %p208 = por %p206, %p207
      %p210 = scmp.ne.s32.totalorder %s195, %s209
      %p211 = scmp.eq.s32.totalorder %s22, 0
      %p212 = por %p210, %p211
      %s213 = ssub.s32 %s23, %s35
      %p214 = scmp.eq.s32.totalorder %s213, 0
      %s216 = sadd.s32 %s215, 1
      %s217 = scalar_select %p214, %s215, %s216
      %p220 = pneg %p214
      %p221 = scmp.eq.s32.totalorder %s16, 1
      %p222 = por %p220, %p221
      %p223 = scmp.ne.s32.totalorder %s215, %s218
      %p224 = scmp.eq.s32.totalorder %s16, 0
      %p225 = por %p223, %p224
      %p226 = scmp.ne.s32.totalorder %s215, %s218
      %p227 = scmp.eq.s32.totalorder %s21, 1
      %p228 = por %p226, %p227
      %p229 = scmp.ne.s32.totalorder %s218, %s219
      %p230 = scmp.eq.s32.totalorder %s21, 0
      %p231 = por %p229, %p230
      %p232 = scmp.ne.s32.totalorder %s218, %s219
      %p233 = scmp.eq.s32.totalorder %s22, 1
      %p234 = por %p232, %p233
      %p236 = scmp.ne.s32.totalorder %s219, %s235
      %p237 = scmp.eq.s32.totalorder %s22, 0
      %p238 = por %p236, %p237
      %p239 = scmp.le.s32.totalorder 1, %s16
      %p240 = scmp.lt.s32.totalorder %s16, 3
      %p241 = pnand %p239, %p240
      %p242 = pneg %p241
      // Predicated region
      $region9: #{lstm_model_forward.1} parent=5 // pred_check
        _
      $region10: #{lstm_model_forward.1} parent=5 // pred_check_branch
        %244 = sbr.rel (%p241) target = $region12
      $region11: #{lstm_model_forward.1} parent=5 // pred_region
        %s245 = ssub.s32 %s16, 1
        // Predicated region
        $region13: #{lstm_model_forward.1} parent=11 // pred_check
          %p246 = pneg %p79
        $region14: #{lstm_model_forward.1} parent=11 // pred_check_branch
          %248 = sbr.rel (%p246) target = $region16
        $region15: #{lstm_model_forward.1} parent=11 // pred_region
          _
        $region16: #{lstm_model_forward.1} parent=11 // pred_fallthru
          _
        // Predicated region
        $region17: #{lstm_model_forward.1} parent=11 // pred_check
          %p249 = pneg %p100
        $region18: #{lstm_model_forward.1} parent=11 // pred_check_branch
          %251 = sbr.rel (%p249) target = $region20
        $region19: #{lstm_model_forward.1} parent=11 // pred_region
          _
        $region20: #{lstm_model_forward.1} parent=11 // pred_fallthru
          _
        // Predicated region
        $region21: #{lstm_model_forward.1} parent=11 // pred_check
          %p252 = pneg %p121
        $region22: #{lstm_model_forward.1} parent=11 // pred_check_branch
          %254 = sbr.rel (%p252) target = $region24
        $region23: #{lstm_model_forward.1} parent=11 // pred_region
          %s256 = ssub.s32 16384, 16384
          %257 = vsyncadd [#allocation8], %s256
          %s258 = sshll.u32 [#allocation7], 4
          %s259 = int_to_ptr.vmem [resolvable:$true] %s258
          %264 = dma.hbm_to_vmem [thread:$0]  %s3, 16384, %s259, [#allocation8], 1024, 1024, 64
        $region24: #{lstm_model_forward.1} parent=11 // pred_fallthru
          _
        // Predicated region
        $region25: #{lstm_model_forward.1} parent=11 // pred_check
          %p265 = pneg %p142
        $region26: #{lstm_model_forward.1} parent=11 // pred_check_branch
          %267 = sbr.rel (%p265) target = $region28
        $region27: #{lstm_model_forward.1} parent=11 // pred_region
          %s269 = ssub.s32 8192, 8192
          %270 = vsyncadd [#allocation10], %s269
          %s271 = sshll.u32 [#allocation9], 4
          %s272 = int_to_ptr.vmem [resolvable:$true] %s271
          %277 = dma.hbm_to_vmem [thread:$0]  %s4, 8192, %s272, [#allocation10], 512, 512, 32
        $region28: #{lstm_model_forward.1} parent=11 // pred_fallthru
          _
        // Predicated region
        $region29: #{lstm_model_forward.1} parent=11 // pred_check
          %p278 = pneg %p163
        $region30: #{lstm_model_forward.1} parent=11 // pred_check_branch
          %280 = sbr.rel (%p278) target = $region32
        $region31: #{lstm_model_forward.1} parent=11 // pred_region
          _
        $region32: #{lstm_model_forward.1} parent=11 // pred_fallthru
          _
        // Predicated region
        $region33: #{lstm_model_forward.1} parent=11 // pred_check
          %p281 = pneg %p184
        $region34: #{lstm_model_forward.1} parent=11 // pred_check_branch
          %283 = sbr.rel (%p281) target = $region36
        $region35: #{lstm_model_forward.1} parent=11 // pred_region
          %s285 = ssub.s32 2048, 2048
          %286 = vsyncadd [#allocation10], %s285
          %s287 = sshll.u32 [#allocation11], 4
          %s288 = int_to_ptr.vmem [resolvable:$true] %s287
          %293 = dma.hbm_to_vmem [thread:$0]  %s6, 2048, %s288, [#allocation10], 128, 128, 8
        $region36: #{lstm_model_forward.1} parent=11 // pred_fallthru
          _
        // Predicated region
        $region37: #{lstm_model_forward.1} parent=11 // pred_check
          %p294 = pneg %p205
        $region38: #{lstm_model_forward.1} parent=11 // pred_check_branch
          %296 = sbr.rel (%p294) target = $region40
        $region39: #{lstm_model_forward.1} parent=11 // pred_region
          _
        $region40: #{lstm_model_forward.1} parent=11 // pred_fallthru
          _
      $region12: #{lstm_model_forward.1} parent=5 // pred_fallthru
        _
      %p297 = scmp.lt.s32.totalorder %s16, 2
      // Predicated region
      $region41: #{lstm_model_forward.1} parent=5 // pred_check
        %p298 = pneg %p297
      $region42: #{lstm_model_forward.1} parent=5 // pred_check_branch
        %300 = sbr.rel (%p298) target = $region44
      $region43: #{lstm_model_forward.1} parent=5 // pred_region
        // Predicated region
        $region45: #{lstm_model_forward.1} parent=43 // pred_check
          %p301 = pneg %p52
        $region46: #{lstm_model_forward.1} parent=43 // pred_check_branch
          %303 = sbr.rel (%p301) target = $region48
        $region47: #{lstm_model_forward.1} parent=43 // pred_region
          %s304 = smul.u32 %s23, 2
          %s305 = sadd.s32 %s304, %s24
          %p306 = scmp.lt.s32.totalorder %s305, 1
          %s307 = scalar_select %p306, %s305, 1
          %s308 = smul.addr %s307, 4
          %s309 = smul.addr %s308, 8
          %s310 = scalar_lea.vmem %s0, %s309
          %s311 = smul.u32 %s23, 2
          %s312 = sadd.s32 %s311, %s24
        $region48: #{lstm_model_forward.1} parent=43 // pred_fallthru
          _
      $region44: #{lstm_model_forward.1} parent=5 // pred_fallthru
        _
      %p313 = scmp.le.s32.totalorder 1, %s16
      %p314 = scmp.lt.s32.totalorder %s16, 3
      %p315 = pnand %p313, %p314
      %p316 = pneg %p315
      // Predicated region
      $region49: #{lstm_model_forward.1} parent=5 // pred_check
        _
      $region50: #{lstm_model_forward.1} parent=5 // pred_check_branch
        %318 = sbr.rel (%p315) target = $region52
      $region51: #{lstm_model_forward.1} parent=5 // pred_region
        %s319 = ssub.s32 %s16, 1
        // Predicated region
        $region53: #{lstm_model_forward.1} parent=51 // pred_check
          %p320 = pneg %p121
        $region54: #{lstm_model_forward.1} parent=51 // pred_check_branch
          %322 = sbr.rel (%p320) target = $region56
        $region55: #{lstm_model_forward.1} parent=51 // pred_region
          %323 = dma.done [#allocation8], 16384
        $region56: #{lstm_model_forward.1} parent=51 // pred_fallthru
          _
        // Predicated region
        $region57: #{lstm_model_forward.1} parent=51 // pred_check
          %p324 = pneg %p142
        $region58: #{lstm_model_forward.1} parent=51 // pred_check_branch
          %326 = sbr.rel (%p324) target = $region60
        $region59: #{lstm_model_forward.1} parent=51 // pred_region
          %327 = dma.done [#allocation10], 8192
        $region60: #{lstm_model_forward.1} parent=51 // pred_fallthru
          _
        // Predicated region
        $region61: #{lstm_model_forward.1} parent=51 // pred_check
          %p328 = pneg %p184
        $region62: #{lstm_model_forward.1} parent=51 // pred_check_branch
          %330 = sbr.rel (%p328) target = $region64
        $region63: #{lstm_model_forward.1} parent=51 // pred_region
          %331 = dma.done [#allocation10], 2048
        $region64: #{lstm_model_forward.1} parent=51 // pred_fallthru
          _
        %s332 = smul.u32 %s25, 2
        %s333 = sadd.s32 %s332, %s26
        %p334 = scmp.lt.s32.totalorder %s333, 1
        %s335 = scalar_select %p334, %s333, 1
        %s336 = smul.addr %s335, 4
        %s337 = smul.addr %s336, 8
        %s338 = scalar_lea.vmem %s0, %s337
        %p339 = pneg %p58
        %p340 = pneg %p55
        %p341 = pneg %p79
        %p342 = pneg %p76
        %p343 = pneg %p100
        %p344 = pneg %p97
        %p345 = pneg %p121
        %p346 = pneg %p118
        %p347 = pneg %p142
        %p348 = pneg %p139
        %p349 = pneg %p163
        %p350 = pneg %p160
        %p351 = pneg %p184
        %p352 = pneg %p181
        %p353 = pneg %p205
        %p354 = pneg %p202
        %p355 = pneg %p231
        %p356 = pneg %p228
        %p357 = scmp.lt.s32.totalorder %s25, 0
        %s358 = scalar_select %p357, %s25, 0
        %s359 = smul.addr %s358, 8
        %s360 = scalar_lea.vmem %s8, %s359
        %s361 = smul.u32 %s25, 2
        %s362 = sadd.s32 %s361, %s26
        %p363 = scmp.lt.s32.totalorder %s362, 1
        %s364 = scalar_select %p363, %s362, 1
        %s365 = smul.addr %s364, 4
        %s366 = smul.addr %s365, 8
        %s367 = scalar_lea.vmem %s0, %s366
        %s368 = smul.u32 %s25, 2
        %s369 = sadd.s32 %s368, %s26
        %p370 = scmp.lt.s32.totalorder %s25, 0
        %s371 = scalar_select %p370, %s25, 0
        %s372 = smul.addr %s371, 8
        %s373 = scalar_lea.vmem %s8, %s372
        %p374 = scmp.eq.s32.totalorder %s26, 0
        // Predicated region
        $region65: #{lstm_model_forward.1} parent=51 // pred_check
          %p375 = pneg %p374
        $region66: #{lstm_model_forward.1} parent=51 // pred_check_branch
          %377 = sbr.rel (%p375) target = $region68
        $region67: #{lstm_model_forward.1} parent=51 // pred_region
          %378 = vst [vmem:[#allocation3] sm:$0xff] 0.0
          %379 = vst [vmem:[#allocation4] sm:$0xff] 0.0
          %380 = vst [vmem:[#allocation5] sm:$0xff] 0.0
          %381 = vst [vmem:[#allocation6] sm:$0xff] 0.0
        $region68: #{lstm_model_forward.1} parent=51 // pred_fallthru
          _
        %v382 = vld [vmem:[%s367] sm:$0xff]
        %v383 = vld [vmem:[%s367 + $0x8] sm:$0xff]
        %v384 = vld [vmem:[%s367 + $0x10] sm:$0xff]
        %v385 = vld [vmem:[%s367 + $0x18] sm:$0xff]
        %v386 = vld [vmem:[%s1] sm:$0xff]
        %v387 = vld [vmem:[%s1 + $0x8] sm:$0xff]
        %v388 = vld [vmem:[%s1 + $0x10] sm:$0xff]
        %v389 = vld [vmem:[%s1 + $0x18] sm:$0xff]
        %v390 = vld [vmem:[%s2] sm:$0xf]
        %v392 = vlaneseq
        %v393 = vshrl.u32 %v392, 7
        %v394 = vsub.s32 0, %v393
        %v395 = vrot.slane %v390, %v394
        %v396 = vlaneseq
        %v397 = vshrl.u32 %v396, 7
        %v398 = vsub.s32 1, %v397
        %v399 = vrot.slane %v390, %v398
        %v400 = vlaneseq
        %v401 = vshrl.u32 %v400, 7
        %v402 = vsub.s32 2, %v401
        %v403 = vrot.slane %v390, %v402
        %v404 = vlaneseq
        %v405 = vshrl.u32 %v404, 7
        %v406 = vsub.s32 3, %v405
        %v407 = vrot.slane %v390, %v406
        %vm412 = vcmask 64512
        %v414 = vsel %vm412, %v382, 0
        %v417 = vsel %vm412, %v383, 0
        %v420 = vsel %vm412, %v384, 0
        %v423 = vsel %vm412, %v385, 0
        %425 = vmatprep.subr.mxu0 0.0
        %426 = vmatpush1.msra.mxu0 0.0
        %427 = vmatprep.subr.mxu0 0.0
        %428 = vmatpush1.msra.mxu0 0.0
        %429 = vmatprep.subr.mxu0 0.0
        %430 = vmatpush1.msra.mxu0 0.0
        %431 = vmatprep.subr.mxu0 0.0
        %432 = vmatpush1.msra.mxu0 0.0
        %433 = vmatprep.subr.mxu0 0.0
        %434 = vmatpush1.msra.mxu0 0.0
        %435 = vmatprep.subr.mxu0 0.0
        %436 = vmatpush1.msra.mxu0 0.0
        %437 = vmatprep.subr.mxu0 0.0
        %438 = vmatpush1.msra.mxu0 0.0
        %439 = vmatprep.subr.mxu0 0.0
        %440 = vmatpush1.msra.mxu0 0.0
        %441 = vmatprep.subr.mxu0 0.0
        %442 = vmatpush1.msra.mxu0 0.0
        %443 = vmatprep.subr.mxu0 0.0
        %444 = vmatpush1.msra.mxu0 0.0
        %445 = vmatprep.subr.mxu0 0.0
        %446 = vmatpush1.msra.mxu0 0.0
        %447 = vmatprep.subr.mxu0 0.0
        %448 = vmatpush1.msra.mxu0 0.0
        %449 = vmatprep.subr.mxu0 0.0
        %450 = vmatpush1.msra.mxu0 0.0
        %451 = vmatprep.subr.mxu0 0.0
        %452 = vmatpush1.msra.mxu0 0.0
        %453 = vmatprep.subr.mxu0 0.0
        %454 = vmatpush1.msra.mxu0 0.0
        %455 = vmatprep.subr.mxu0 %v387
        %456 = vmatpush1.msra.mxu0 %v386
        %457 = vmatprep.subr.mxu0 0.0
        %458 = vmatpush2.msra.mxu0 0.0
        %459 = vmatprep.subr.mxu0 0.0
        %460 = vmatpush2.msra.mxu0 0.0
        %461 = vmatprep.subr.mxu0 0.0
        %462 = vmatpush2.msra.mxu0 0.0
        %463 = vmatprep.subr.mxu0 0.0
        %464 = vmatpush2.msra.mxu0 0.0
        %465 = vmatprep.subr.mxu0 0.0
        %466 = vmatpush2.msra.mxu0 0.0
        %467 = vmatprep.subr.mxu0 0.0
        %468 = vmatpush2.msra.mxu0 0.0
        %469 = vmatprep.subr.mxu0 0.0
        %470 = vmatpush2.msra.mxu0 0.0
        %471 = vmatprep.subr.mxu0 0.0
        %472 = vmatpush2.msra.mxu0 0.0
        %473 = vmatprep.subr.mxu0 0.0
        %474 = vmatpush2.msra.mxu0 0.0
        %475 = vmatprep.subr.mxu0 0.0
        %476 = vmatpush2.msra.mxu0 0.0
        %477 = vmatprep.subr.mxu0 0.0
        %478 = vmatpush2.msra.mxu0 0.0
        %479 = vmatprep.subr.mxu0 0.0
        %480 = vmatpush2.msra.mxu0 0.0
        %481 = vmatprep.subr.mxu0 0.0
        %482 = vmatpush2.msra.mxu0 0.0
        %483 = vmatprep.subr.mxu0 0.0
        %484 = vmatpush2.msra.mxu0 0.0
        %485 = vmatprep.subr.mxu0 0.0
        %486 = vmatpush2.msra.mxu0 0.0
        %487 = vmatprep.subr.mxu0 0.0
        %488 = vmatpush2.msra.mxu0 0.0
        %489 = vmatprep.mubr.f32.mxu0 0.0
        %490 = vmatmul.mubr.f32.gmra.mxu0 %v414
        %v491 = vpop.f32.mrf.mxu0
        %v492 = vadd.f32 %v395, %v491
        %v493 = vpop.f32.mrf.mxu0
        %v494 = vadd.f32 %v399, %v493
        %495 = vmatprep.mubr.f32.mxu0 0.0
        %496 = vmatmul.mubr.f32.gmra.mxu0 %v417
        %v497 = vpop.f32.mrf.mxu0
        %v498 = vadd.f32 %v395, %v497
        %v499 = vpop.f32.mrf.mxu0
        %v500 = vadd.f32 %v399, %v499
        %501 = vmatprep.mubr.f32.mxu0 0.0
        %502 = vmatmul.mubr.f32.gmra.mxu0 %v420
        %v503 = vpop.f32.mrf.mxu0
        %v504 = vadd.f32 %v395, %v503
        %v505 = vpop.f32.mrf.mxu0
        %v506 = vadd.f32 %v399, %v505
        %507 = vmatprep.mubr.f32.mxu0 0.0
        %508 = vmatmul.mubr.f32.gmra.mxu0 %v423
        %v509 = vpop.f32.mrf.mxu0
        %v510 = vadd.f32 %v395, %v509
        %v511 = vpop.f32.mrf.mxu0
        %v512 = vadd.f32 %v399, %v511
        %513 = vdwg.mxu0
        %514 = vmatprep.subr.mxu0 0.0
        %515 = vmatpush1.msra.mxu0 0.0
        %516 = vmatprep.subr.mxu0 0.0
        %517 = vmatpush1.msra.mxu0 0.0
        %518 = vmatprep.subr.mxu0 0.0
        %519 = vmatpush1.msra.mxu0 0.0
        %520 = vmatprep.subr.mxu0 0.0
        %521 = vmatpush1.msra.mxu0 0.0
        %522 = vmatprep.subr.mxu0 0.0
        %523 = vmatpush1.msra.mxu0 0.0
        %524 = vmatprep.subr.mxu0 0.0
        %525 = vmatpush1.msra.mxu0 0.0
        %526 = vmatprep.subr.mxu0 0.0
        %527 = vmatpush1.msra.mxu0 0.0
        %528 = vmatprep.subr.mxu0 0.0
        %529 = vmatpush1.msra.mxu0 0.0
        %530 = vmatprep.subr.mxu0 0.0
        %531 = vmatpush1.msra.mxu0 0.0
        %532 = vmatprep.subr.mxu0 0.0
        %533 = vmatpush1.msra.mxu0 0.0
        %534 = vmatprep.subr.mxu0 0.0
        %535 = vmatpush1.msra.mxu0 0.0
        %536 = vmatprep.subr.mxu0 0.0
        %537 = vmatpush1.msra.mxu0 0.0
        %538 = vmatprep.subr.mxu0 0.0
        %539 = vmatpush1.msra.mxu0 0.0
        %540 = vmatprep.subr.mxu0 0.0
        %541 = vmatpush1.msra.mxu0 0.0
        %542 = vmatprep.subr.mxu0 0.0
        %543 = vmatpush1.msra.mxu0 0.0
        %544 = vmatprep.subr.mxu0 %v389
        %545 = vmatpush1.msra.mxu0 %v388
        %546 = vmatprep.subr.mxu0 0.0
        %547 = vmatpush2.msra.mxu0 0.0
        %548 = vmatprep.subr.mxu0 0.0
        %549 = vmatpush2.msra.mxu0 0.0
        %550 = vmatprep.subr.mxu0 0.0
        %551 = vmatpush2.msra.mxu0 0.0
        %552 = vmatprep.subr.mxu0 0.0
        %553 = vmatpush2.msra.mxu0 0.0
        %554 = vmatprep.subr.mxu0 0.0
        %555 = vmatpush2.msra.mxu0 0.0
        %556 = vmatprep.subr.mxu0 0.0
        %557 = vmatpush2.msra.mxu0 0.0
        %558 = vmatprep.subr.mxu0 0.0
        %559 = vmatpush2.msra.mxu0 0.0
        %560 = vmatprep.subr.mxu0 0.0
        %561 = vmatpush2.msra.mxu0 0.0
        %562 = vmatprep.subr.mxu0 0.0
        %563 = vmatpush2.msra.mxu0 0.0
        %564 = vmatprep.subr.mxu0 0.0
        %565 = vmatpush2.msra.mxu0 0.0
        %566 = vmatprep.subr.mxu0 0.0
        %567 = vmatpush2.msra.mxu0 0.0
        %568 = vmatprep.subr.mxu0 0.0
        %569 = vmatpush2.msra.mxu0 0.0
        %570 = vmatprep.subr.mxu0 0.0
        %571 = vmatpush2.msra.mxu0 0.0
        %572 = vmatprep.subr.mxu0 0.0
        %573 = vmatpush2.msra.mxu0 0.0
        %574 = vmatprep.subr.mxu0 0.0
        %575 = vmatpush2.msra.mxu0 0.0
        %576 = vmatprep.subr.mxu0 0.0
        %577 = vmatpush2.msra.mxu0 0.0
        %578 = vmatprep.mubr.f32.mxu0 0.0
        %579 = vmatmul.mubr.f32.gmra.mxu0 %v414
        %v580 = vpop.f32.mrf.mxu0
        %v581 = vadd.f32 %v403, %v580
        %v582 = vpop.f32.mrf.mxu0
        %v583 = vadd.f32 %v407, %v582
        %584 = vmatprep.mubr.f32.mxu0 0.0
        %585 = vmatmul.mubr.f32.gmra.mxu0 %v417
        %v586 = vpop.f32.mrf.mxu0
        %v587 = vadd.f32 %v403, %v586
        %v588 = vpop.f32.mrf.mxu0
        %v589 = vadd.f32 %v407, %v588
        %590 = vmatprep.mubr.f32.mxu0 0.0
        %591 = vmatmul.mubr.f32.gmra.mxu0 %v420
        %v592 = vpop.f32.mrf.mxu0
        %v593 = vadd.f32 %v403, %v592
        %v594 = vpop.f32.mrf.mxu0
        %v595 = vadd.f32 %v407, %v594
        %596 = vmatprep.mubr.f32.mxu0 0.0
        %597 = vmatmul.mubr.f32.gmra.mxu0 %v423
        %v598 = vpop.f32.mrf.mxu0
        %v599 = vadd.f32 %v403, %v598
        %v600 = vpop.f32.mrf.mxu0
        %v601 = vadd.f32 %v407, %v600
        %602 = vdwg.mxu0
        %603 = vst [vmem:[#allocation2] sm:$0xff] %v492
        %604 = vst [vmem:[#allocation2 + $0x8] sm:$0xff] %v494
        %605 = vst [vmem:[#allocation2 + $0x10] sm:$0xff] %v581
        %606 = vst [vmem:[#allocation2 + $0x18] sm:$0xff] %v583
        %607 = vst [vmem:[#allocation2 + $0x20] sm:$0xff] %v498
        %608 = vst [vmem:[#allocation2 + $0x28] sm:$0xff] %v500
        %609 = vst [vmem:[#allocation2 + $0x30] sm:$0xff] %v587
        %610 = vst [vmem:[#allocation2 + $0x38] sm:$0xff] %v589
        %611 = vst [vmem:[#allocation2 + $0x40] sm:$0xff] %v504
        %612 = vst [vmem:[#allocation2 + $0x48] sm:$0xff] %v506
        %613 = vst [vmem:[#allocation2 + $0x50] sm:$0xff] %v593
        %614 = vst [vmem:[#allocation2 + $0x58] sm:$0xff] %v595
        %615 = vst [vmem:[#allocation2 + $0x60] sm:$0xff] %v510
        %616 = vst [vmem:[#allocation2 + $0x68] sm:$0xff] %v512
        %617 = vst [vmem:[#allocation2 + $0x70] sm:$0xff] %v599
        %618 = vst [vmem:[#allocation2 + $0x78] sm:$0xff] %v601
        %v619 = vld [vmem:[%s5] sm:$0xf]
        %s620 = smul.u32 %s26, 4
        %v621 = vld [vmem:[#allocation3] sm:$0xff]
        %v622 = vld [vmem:[#allocation4] sm:$0xff]
        %v623 = vld [vmem:[#allocation5] sm:$0xff]
        %v624 = vld [vmem:[#allocation6] sm:$0xff]
        %v625 = vld [vmem:[#allocation7] sm:$0xff]
        %v626 = vld [vmem:[#allocation7 + $0x8] sm:$0xff]
        %v627 = vld [vmem:[#allocation7 + $0x10] sm:$0xff]
        %v628 = vld [vmem:[#allocation7 + $0x18] sm:$0xff]
        %v629 = vld [vmem:[#allocation7 + $0x20] sm:$0xff]
        %v630 = vld [vmem:[#allocation7 + $0x28] sm:$0xff]
        %v631 = vld [vmem:[#allocation7 + $0x30] sm:$0xff]
        %v632 = vld [vmem:[#allocation7 + $0x38] sm:$0xff]
        %v633 = vld [vmem:[#allocation7 + $0x40] sm:$0xff]
        %v634 = vld [vmem:[#allocation7 + $0x48] sm:$0xff]
        %v635 = vld [vmem:[#allocation7 + $0x50] sm:$0xff]
        %v636 = vld [vmem:[#allocation7 + $0x58] sm:$0xff]
        %v637 = vld [vmem:[#allocation7 + $0x60] sm:$0xff]
        %v638 = vld [vmem:[#allocation7 + $0x68] sm:$0xff]
        %v639 = vld [vmem:[#allocation7 + $0x70] sm:$0xff]
        %v640 = vld [vmem:[#allocation7 + $0x78] sm:$0xff]
        %v641 = vld [vmem:[#allocation7 + $0x80] sm:$0xff]
        %v642 = vld [vmem:[#allocation7 + $0x88] sm:$0xff]
        %v643 = vld [vmem:[#allocation7 + $0x90] sm:$0xff]
        %v644 = vld [vmem:[#allocation7 + $0x98] sm:$0xff]
        %v645 = vld [vmem:[#allocation7 + $0xa0] sm:$0xff]
        %v646 = vld [vmem:[#allocation7 + $0xa8] sm:$0xff]
        %v647 = vld [vmem:[#allocation7 + $0xb0] sm:$0xff]
        %v648 = vld [vmem:[#allocation7 + $0xb8] sm:$0xff]
        %v649 = vld [vmem:[#allocation7 + $0xc0] sm:$0xff]
        %v650 = vld [vmem:[#allocation7 + $0xc8] sm:$0xff]
        %v651 = vld [vmem:[#allocation7 + $0xd0] sm:$0xff]
        %v652 = vld [vmem:[#allocation7 + $0xd8] sm:$0xff]
        %v653 = vld [vmem:[#allocation7 + $0xe0] sm:$0xff]
        %v654 = vld [vmem:[#allocation7 + $0xe8] sm:$0xff]
        %v655 = vld [vmem:[#allocation7 + $0xf0] sm:$0xff]
        %v656 = vld [vmem:[#allocation7 + $0xf8] sm:$0xff]
        %v657 = vld [vmem:[#allocation7 + $0x100] sm:$0xff]
        %v658 = vld [vmem:[#allocation7 + $0x108] sm:$0xff]
        %v659 = vld [vmem:[#allocation7 + $0x110] sm:$0xff]
        %v660 = vld [vmem:[#allocation7 + $0x118] sm:$0xff]
        %v661 = vld [vmem:[#allocation7 + $0x120] sm:$0xff]
        %v662 = vld [vmem:[#allocation7 + $0x128] sm:$0xff]
        %v663 = vld [vmem:[#allocation7 + $0x130] sm:$0xff]
        %v664 = vld [vmem:[#allocation7 + $0x138] sm:$0xff]
        %v665 = vld [vmem:[#allocation7 + $0x140] sm:$0xff]
        %v666 = vld [vmem:[#allocation7 + $0x148] sm:$0xff]
        %v667 = vld [vmem:[#allocation7 + $0x150] sm:$0xff]
        %v668 = vld [vmem:[#allocation7 + $0x158] sm:$0xff]
        %v669 = vld [vmem:[#allocation7 + $0x160] sm:$0xff]
        %v670 = vld [vmem:[#allocation7 + $0x168] sm:$0xff]
        %v671 = vld [vmem:[#allocation7 + $0x170] sm:$0xff]
        %v672 = vld [vmem:[#allocation7 + $0x178] sm:$0xff]
        %v673 = vld [vmem:[#allocation7 + $0x180] sm:$0xff]
        %v674 = vld [vmem:[#allocation7 + $0x188] sm:$0xff]
        %v675 = vld [vmem:[#allocation7 + $0x190] sm:$0xff]
        %v676 = vld [vmem:[#allocation7 + $0x198] sm:$0xff]
        %v677 = vld [vmem:[#allocation7 + $0x1a0] sm:$0xff]
        %v678 = vld [vmem:[#allocation7 + $0x1a8] sm:$0xff]
        %v679 = vld [vmem:[#allocation7 + $0x1b0] sm:$0xff]
        %v680 = vld [vmem:[#allocation7 + $0x1b8] sm:$0xff]
        %v681 = vld [vmem:[#allocation7 + $0x1c0] sm:$0xff]
        %v682 = vld [vmem:[#allocation7 + $0x1c8] sm:$0xff]
        %v683 = vld [vmem:[#allocation7 + $0x1d0] sm:$0xff]
        %v684 = vld [vmem:[#allocation7 + $0x1d8] sm:$0xff]
        %v685 = vld [vmem:[#allocation7 + $0x1e0] sm:$0xff]
        %v686 = vld [vmem:[#allocation7 + $0x1e8] sm:$0xff]
        %v687 = vld [vmem:[#allocation7 + $0x1f0] sm:$0xff]
        %v688 = vld [vmem:[#allocation7 + $0x1f8] sm:$0xff]
        %v689 = vld [vmem:[#allocation7 + $0x200] sm:$0xff]
        %v690 = vld [vmem:[#allocation7 + $0x208] sm:$0xff]
        %v691 = vld [vmem:[#allocation7 + $0x210] sm:$0xff]
        %v692 = vld [vmem:[#allocation7 + $0x218] sm:$0xff]
        %v693 = vld [vmem:[#allocation7 + $0x220] sm:$0xff]
        %v694 = vld [vmem:[#allocation7 + $0x228] sm:$0xff]
        %v695 = vld [vmem:[#allocation7 + $0x230] sm:$0xff]
        %v696 = vld [vmem:[#allocation7 + $0x238] sm:$0xff]
        %v697 = vld [vmem:[#allocation7 + $0x240] sm:$0xff]
        %v698 = vld [vmem:[#allocation7 + $0x248] sm:$0xff]
        %v699 = vld [vmem:[#allocation7 + $0x250] sm:$0xff]
        %v700 = vld [vmem:[#allocation7 + $0x258] sm:$0xff]
        %v701 = vld [vmem:[#allocation7 + $0x260] sm:$0xff]
        %v702 = vld [vmem:[#allocation7 + $0x268] sm:$0xff]
        %v703 = vld [vmem:[#allocation7 + $0x270] sm:$0xff]
        %v704 = vld [vmem:[#allocation7 + $0x278] sm:$0xff]
        %v705 = vld [vmem:[#allocation7 + $0x280] sm:$0xff]
        %v706 = vld [vmem:[#allocation7 + $0x288] sm:$0xff]
        %v707 = vld [vmem:[#allocation7 + $0x290] sm:$0xff]
        %v708 = vld [vmem:[#allocation7 + $0x298] sm:$0xff]
        %v709 = vld [vmem:[#allocation7 + $0x2a0] sm:$0xff]
        %v710 = vld [vmem:[#allocation7 + $0x2a8] sm:$0xff]
        %v711 = vld [vmem:[#allocation7 + $0x2b0] sm:$0xff]
        %v712 = vld [vmem:[#allocation7 + $0x2b8] sm:$0xff]
        %v713 = vld [vmem:[#allocation7 + $0x2c0] sm:$0xff]
        %v714 = vld [vmem:[#allocation7 + $0x2c8] sm:$0xff]
        %v715 = vld [vmem:[#allocation7 + $0x2d0] sm:$0xff]
        %v716 = vld [vmem:[#allocation7 + $0x2d8] sm:$0xff]
        %v717 = vld [vmem:[#allocation7 + $0x2e0] sm:$0xff]
        %v718 = vld [vmem:[#allocation7 + $0x2e8] sm:$0xff]
        %v719 = vld [vmem:[#allocation7 + $0x2f0] sm:$0xff]
        %v720 = vld [vmem:[#allocation7 + $0x2f8] sm:$0xff]
        %v721 = vld [vmem:[#allocation7 + $0x300] sm:$0xff]
        %v722 = vld [vmem:[#allocation7 + $0x308] sm:$0xff]
        %v723 = vld [vmem:[#allocation7 + $0x310] sm:$0xff]
        %v724 = vld [vmem:[#allocation7 + $0x318] sm:$0xff]
        %v725 = vld [vmem:[#allocation7 + $0x320] sm:$0xff]
        %v726 = vld [vmem:[#allocation7 + $0x328] sm:$0xff]
        %v727 = vld [vmem:[#allocation7 + $0x330] sm:$0xff]
        %v728 = vld [vmem:[#allocation7 + $0x338] sm:$0xff]
        %v729 = vld [vmem:[#allocation7 + $0x340] sm:$0xff]
        %v730 = vld [vmem:[#allocation7 + $0x348] sm:$0xff]
        %v731 = vld [vmem:[#allocation7 + $0x350] sm:$0xff]
        %v732 = vld [vmem:[#allocation7 + $0x358] sm:$0xff]
        %v733 = vld [vmem:[#allocation7 + $0x360] sm:$0xff]
        %v734 = vld [vmem:[#allocation7 + $0x368] sm:$0xff]
        %v735 = vld [vmem:[#allocation7 + $0x370] sm:$0xff]
        %v736 = vld [vmem:[#allocation7 + $0x378] sm:$0xff]
        %v737 = vld [vmem:[#allocation7 + $0x380] sm:$0xff]
        %v738 = vld [vmem:[#allocation7 + $0x388] sm:$0xff]
        %v739 = vld [vmem:[#allocation7 + $0x390] sm:$0xff]
        %v740 = vld [vmem:[#allocation7 + $0x398] sm:$0xff]
        %v741 = vld [vmem:[#allocation7 + $0x3a0] sm:$0xff]
        %v742 = vld [vmem:[#allocation7 + $0x3a8] sm:$0xff]
        %v743 = vld [vmem:[#allocation7 + $0x3b0] sm:$0xff]
        %v744 = vld [vmem:[#allocation7 + $0x3b8] sm:$0xff]
        %v745 = vld [vmem:[#allocation7 + $0x3c0] sm:$0xff]
        %v746 = vld [vmem:[#allocation7 + $0x3c8] sm:$0xff]
        %v747 = vld [vmem:[#allocation7 + $0x3d0] sm:$0xff]
        %v748 = vld [vmem:[#allocation7 + $0x3d8] sm:$0xff]
        %v749 = vld [vmem:[#allocation7 + $0x3e0] sm:$0xff]
        %v750 = vld [vmem:[#allocation7 + $0x3e8] sm:$0xff]
        %v751 = vld [vmem:[#allocation7 + $0x3f0] sm:$0xff]
        %v752 = vld [vmem:[#allocation7 + $0x3f8] sm:$0xff]
        %753 = vmatprep.subr.mxu0 %v746
        %754 = vmatpush1.msra.mxu0 %v745
        %755 = vmatprep.subr.mxu0 %v738
        %756 = vmatpush1.msra.mxu0 %v737
        %757 = vmatprep.subr.mxu0 %v730
        %758 = vmatpush1.msra.mxu0 %v729
        %759 = vmatprep.subr.mxu0 %v722
        %760 = vmatpush1.msra.mxu0 %v721
        %761 = vmatprep.subr.mxu0 %v714
        %762 = vmatpush1.msra.mxu0 %v713
        %763 = vmatprep.subr.mxu0 %v706
        %764 = vmatpush1.msra.mxu0 %v705
        %765 = vmatprep.subr.mxu0 %v698
        %766 = vmatpush1.msra.mxu0 %v697
        %767 = vmatprep.subr.mxu0 %v690
        %768 = vmatpush1.msra.mxu0 %v689
        %769 = vmatprep.subr.mxu0 %v682
        %770 = vmatpush1.msra.mxu0 %v681
        %771 = vmatprep.subr.mxu0 %v674
        %772 = vmatpush1.msra.mxu0 %v673
        %773 = vmatprep.subr.mxu0 %v666
        %774 = vmatpush1.msra.mxu0 %v665
        %775 = vmatprep.subr.mxu0 %v658
        %776 = vmatpush1.msra.mxu0 %v657
        %777 = vmatprep.subr.mxu0 %v650
        %778 = vmatpush1.msra.mxu0 %v649
        %779 = vmatprep.subr.mxu0 %v642
        %780 = vmatpush1.msra.mxu0 %v641
        %781 = vmatprep.subr.mxu0 %v634
        %782 = vmatpush1.msra.mxu0 %v633
        %783 = vmatprep.subr.mxu0 %v626
        %784 = vmatpush1.msra.mxu0 %v625
        %785 = vmatprep.subr.mxu0 0.0
        %786 = vmatpush2.msra.mxu0 0.0
        %787 = vmatprep.subr.mxu0 0.0
        %788 = vmatpush2.msra.mxu0 0.0
        %789 = vmatprep.subr.mxu0 0.0
        %790 = vmatpush2.msra.mxu0 0.0
        %791 = vmatprep.subr.mxu0 0.0
        %792 = vmatpush2.msra.mxu0 0.0
        %793 = vmatprep.subr.mxu0 0.0
        %794 = vmatpush2.msra.mxu0 0.0
        %795 = vmatprep.subr.mxu0 0.0
        %796 = vmatpush2.msra.mxu0 0.0
        %797 = vmatprep.subr.mxu0 0.0
        %798 = vmatpush2.msra.mxu0 0.0
        %799 = vmatprep.subr.mxu0 0.0
        %800 = vmatpush2.msra.mxu0 0.0
        %801 = vmatprep.subr.mxu0 0.0
        %802 = vmatpush2.msra.mxu0 0.0
        %803 = vmatprep.subr.mxu0 0.0
        %804 = vmatpush2.msra.mxu0 0.0
        %805 = vmatprep.subr.mxu0 0.0
        %806 = vmatpush2.msra.mxu0 0.0
        %807 = vmatprep.subr.mxu0 0.0
        %808 = vmatpush2.msra.mxu0 0.0
        %809 = vmatprep.subr.mxu0 0.0
        %810 = vmatpush2.msra.mxu0 0.0
        %811 = vmatprep.subr.mxu0 0.0
        %812 = vmatpush2.msra.mxu0 0.0
        %813 = vmatprep.subr.mxu0 0.0
        %814 = vmatpush2.msra.mxu0 0.0
        %815 = vmatprep.subr.mxu0 0.0
        %816 = vmatpush2.msra.mxu0 0.0
        %817 = vmatprep.mubr.f32.mxu0 0.0
        %818 = vmatmul.mubr.f32.gmra.mxu0 %v621
        %v819 = vpop.f32.mrf.mxu0
        %v820 = vadd.f32 0.0, %v819
        %v821 = vpop.f32.mrf.mxu0
        %v822 = vadd.f32 0.0, %v821
        %823 = vdwg.mxu0
        %824 = vmatprep.subr.mxu0 %v748
        %825 = vmatpush1.msra.mxu0 %v747
        %826 = vmatprep.subr.mxu0 %v740
        %827 = vmatpush1.msra.mxu0 %v739
        %828 = vmatprep.subr.mxu0 %v732
        %829 = vmatpush1.msra.mxu0 %v731
        %830 = vmatprep.subr.mxu0 %v724
        %831 = vmatpush1.msra.mxu0 %v723
        %832 = vmatprep.subr.mxu0 %v716
        %833 = vmatpush1.msra.mxu0 %v715
        %834 = vmatprep.subr.mxu0 %v708
        %835 = vmatpush1.msra.mxu0 %v707
        %836 = vmatprep.subr.mxu0 %v700
        %837 = vmatpush1.msra.mxu0 %v699
        %838 = vmatprep.subr.mxu0 %v692
        %839 = vmatpush1.msra.mxu0 %v691
        %840 = vmatprep.subr.mxu0 %v684
        %841 = vmatpush1.msra.mxu0 %v683
        %842 = vmatprep.subr.mxu0 %v676
        %843 = vmatpush1.msra.mxu0 %v675
        %844 = vmatprep.subr.mxu0 %v668
        %845 = vmatpush1.msra.mxu0 %v667
        %846 = vmatprep.subr.mxu0 %v660
        %847 = vmatpush1.msra.mxu0 %v659
        %848 = vmatprep.subr.mxu0 %v652
        %849 = vmatpush1.msra.mxu0 %v651
        %850 = vmatprep.subr.mxu0 %v644
        %851 = vmatpush1.msra.mxu0 %v643
        %852 = vmatprep.subr.mxu0 %v636
        %853 = vmatpush1.msra.mxu0 %v635
        %854 = vmatprep.subr.mxu0 %v628
        %855 = vmatpush1.msra.mxu0 %v627
        %856 = vmatprep.subr.mxu0 0.0
        %857 = vmatpush2.msra.mxu0 0.0
        %858 = vmatprep.subr.mxu0 0.0
        %859 = vmatpush2.msra.mxu0 0.0
        %860 = vmatprep.subr.mxu0 0.0
        %861 = vmatpush2.msra.mxu0 0.0
        %862 = vmatprep.subr.mxu0 0.0
        %863 = vmatpush2.msra.mxu0 0.0
        %864 = vmatprep.subr.mxu0 0.0
        %865 = vmatpush2.msra.mxu0 0.0
        %866 = vmatprep.subr.mxu0 0.0
        %867 = vmatpush2.msra.mxu0 0.0
        %868 = vmatprep.subr.mxu0 0.0
        %869 = vmatpush2.msra.mxu0 0.0
        %870 = vmatprep.subr.mxu0 0.0
        %871 = vmatpush2.msra.mxu0 0.0
        %872 = vmatprep.subr.mxu0 0.0
        %873 = vmatpush2.msra.mxu0 0.0
        %874 = vmatprep.subr.mxu0 0.0
        %875 = vmatpush2.msra.mxu0 0.0
        %876 = vmatprep.subr.mxu0 0.0
        %877 = vmatpush2.msra.mxu0 0.0
        %878 = vmatprep.subr.mxu0 0.0
        %879 = vmatpush2.msra.mxu0 0.0
        %880 = vmatprep.subr.mxu0 0.0
        %881 = vmatpush2.msra.mxu0 0.0
        %882 = vmatprep.subr.mxu0 0.0
        %883 = vmatpush2.msra.mxu0 0.0
        %884 = vmatprep.subr.mxu0 0.0
        %885 = vmatpush2.msra.mxu0 0.0
        %886 = vmatprep.subr.mxu0 0.0
        %887 = vmatpush2.msra.mxu0 0.0
        %888 = vmatprep.mubr.f32.mxu0 0.0
        %889 = vmatmul.mubr.f32.gmra.mxu0 %v621
        %v890 = vpop.f32.mrf.mxu0
        %v891 = vadd.f32 0.0, %v890
        %v892 = vpop.f32.mrf.mxu0
        %v893 = vadd.f32 0.0, %v892
        %894 = vdwg.mxu0
        %895 = vmatprep.subr.mxu0 %v750
        %896 = vmatpush1.msra.mxu0 %v749
        %897 = vmatprep.subr.mxu0 %v742
        %898 = vmatpush1.msra.mxu0 %v741
        %899 = vmatprep.subr.mxu0 %v734
        %900 = vmatpush1.msra.mxu0 %v733
        %901 = vmatprep.subr.mxu0 %v726
        %902 = vmatpush1.msra.mxu0 %v725
        %903 = vmatprep.subr.mxu0 %v718
        %904 = vmatpush1.msra.mxu0 %v717
        %905 = vmatprep.subr.mxu0 %v710
        %906 = vmatpush1.msra.mxu0 %v709
        %907 = vmatprep.subr.mxu0 %v702
        %908 = vmatpush1.msra.mxu0 %v701
        %909 = vmatprep.subr.mxu0 %v694
        %910 = vmatpush1.msra.mxu0 %v693
        %911 = vmatprep.subr.mxu0 %v686
        %912 = vmatpush1.msra.mxu0 %v685
        %913 = vmatprep.subr.mxu0 %v678
        %914 = vmatpush1.msra.mxu0 %v677
        %915 = vmatprep.subr.mxu0 %v670
        %916 = vmatpush1.msra.mxu0 %v669
        %917 = vmatprep.subr.mxu0 %v662
        %918 = vmatpush1.msra.mxu0 %v661
        %919 = vmatprep.subr.mxu0 %v654
        %920 = vmatpush1.msra.mxu0 %v653
        %921 = vmatprep.subr.mxu0 %v646
        %922 = vmatpush1.msra.mxu0 %v645
        %923 = vmatprep.subr.mxu0 %v638
        %924 = vmatpush1.msra.mxu0 %v637
        %925 = vmatprep.subr.mxu0 %v630
        %926 = vmatpush1.msra.mxu0 %v629
        %927 = vmatprep.subr.mxu0 0.0
        %928 = vmatpush2.msra.mxu0 0.0
        %929 = vmatprep.subr.mxu0 0.0
        %930 = vmatpush2.msra.mxu0 0.0
        %931 = vmatprep.subr.mxu0 0.0
        %932 = vmatpush2.msra.mxu0 0.0
        %933 = vmatprep.subr.mxu0 0.0
        %934 = vmatpush2.msra.mxu0 0.0
        %935 = vmatprep.subr.mxu0 0.0
        %936 = vmatpush2.msra.mxu0 0.0
        %937 = vmatprep.subr.mxu0 0.0
        %938 = vmatpush2.msra.mxu0 0.0
        %939 = vmatprep.subr.mxu0 0.0
        %940 = vmatpush2.msra.mxu0 0.0
        %941 = vmatprep.subr.mxu0 0.0
        %942 = vmatpush2.msra.mxu0 0.0
        %943 = vmatprep.subr.mxu0 0.0
        %944 = vmatpush2.msra.mxu0 0.0
        %945 = vmatprep.subr.mxu0 0.0
        %946 = vmatpush2.msra.mxu0 0.0
        %947 = vmatprep.subr.mxu0 0.0
        %948 = vmatpush2.msra.mxu0 0.0
        %949 = vmatprep.subr.mxu0 0.0
        %950 = vmatpush2.msra.mxu0 0.0
        %951 = vmatprep.subr.mxu0 0.0
        %952 = vmatpush2.msra.mxu0 0.0
        %953 = vmatprep.subr.mxu0 0.0
        %954 = vmatpush2.msra.mxu0 0.0
        %955 = vmatprep.subr.mxu0 0.0
        %956 = vmatpush2.msra.mxu0 0.0
        %957 = vmatprep.subr.mxu0 0.0
        %958 = vmatpush2.msra.mxu0 0.0
        %959 = vmatprep.mubr.f32.mxu0 0.0
        %960 = vmatmul.mubr.f32.gmra.mxu0 %v621
        %v961 = vpop.f32.mrf.mxu0
        %v962 = vadd.f32 0.0, %v961
        %v963 = vpop.f32.mrf.mxu0
        %v964 = vadd.f32 0.0, %v963
        %965 = vdwg.mxu0
        %966 = vmatprep.subr.mxu0 %v752
        %967 = vmatpush1.msra.mxu0 %v751
        %968 = vmatprep.subr.mxu0 %v744
        %969 = vmatpush1.msra.mxu0 %v743
        %970 = vmatprep.subr.mxu0 %v736
        %971 = vmatpush1.msra.mxu0 %v735
        %972 = vmatprep.subr.mxu0 %v728
        %973 = vmatpush1.msra.mxu0 %v727
        %974 = vmatprep.subr.mxu0 %v720
        %975 = vmatpush1.msra.mxu0 %v719
        %976 = vmatprep.subr.mxu0 %v712
        %977 = vmatpush1.msra.mxu0 %v711
        %978 = vmatprep.subr.mxu0 %v704
        %979 = vmatpush1.msra.mxu0 %v703
        %980 = vmatprep.subr.mxu0 %v696
        %981 = vmatpush1.msra.mxu0 %v695
        %982 = vmatprep.subr.mxu0 %v688
        %983 = vmatpush1.msra.mxu0 %v687
        %984 = vmatprep.subr.mxu0 %v680
        %985 = vmatpush1.msra.mxu0 %v679
        %986 = vmatprep.subr.mxu0 %v672
        %987 = vmatpush1.msra.mxu0 %v671
        %988 = vmatprep.subr.mxu0 %v664
        %989 = vmatpush1.msra.mxu0 %v663
        %990 = vmatprep.subr.mxu0 %v656
        %991 = vmatpush1.msra.mxu0 %v655
        %992 = vmatprep.subr.mxu0 %v648
        %993 = vmatpush1.msra.mxu0 %v647
        %994 = vmatprep.subr.mxu0 %v640
        %995 = vmatpush1.msra.mxu0 %v639
        %996 = vmatprep.subr.mxu0 %v632
        %997 = vmatpush1.msra.mxu0 %v631
        %998 = vmatprep.subr.mxu0 0.0
        %999 = vmatpush2.msra.mxu0 0.0
        %1000 = vmatprep.subr.mxu0 0.0
        %1001 = vmatpush2.msra.mxu0 0.0
        %1002 = vmatprep.subr.mxu0 0.0
        %1003 = vmatpush2.msra.mxu0 0.0
        %1004 = vmatprep.subr.mxu0 0.0
        %1005 = vmatpush2.msra.mxu0 0.0
        %1006 = vmatprep.subr.mxu0 0.0
        %1007 = vmatpush2.msra.mxu0 0.0
        %1008 = vmatprep.subr.mxu0 0.0
        %1009 = vmatpush2.msra.mxu0 0.0
        %1010 = vmatprep.subr.mxu0 0.0
        %1011 = vmatpush2.msra.mxu0 0.0
        %1012 = vmatprep.subr.mxu0 0.0
        %1013 = vmatpush2.msra.mxu0 0.0
        %1014 = vmatprep.subr.mxu0 0.0
        %1015 = vmatpush2.msra.mxu0 0.0
        %1016 = vmatprep.subr.mxu0 0.0
        %1017 = vmatpush2.msra.mxu0 0.0
        %1018 = vmatprep.subr.mxu0 0.0
        %1019 = vmatpush2.msra.mxu0 0.0
        %1020 = vmatprep.subr.mxu0 0.0
        %1021 = vmatpush2.msra.mxu0 0.0
        %1022 = vmatprep.subr.mxu0 0.0
        %1023 = vmatpush2.msra.mxu0 0.0
        %1024 = vmatprep.subr.mxu0 0.0
        %1025 = vmatpush2.msra.mxu0 0.0
        %1026 = vmatprep.subr.mxu0 0.0
        %1027 = vmatpush2.msra.mxu0 0.0
        %1028 = vmatprep.subr.mxu0 0.0
        %1029 = vmatpush2.msra.mxu0 0.0
        %1030 = vmatprep.mubr.f32.mxu0 0.0
        %1031 = vmatmul.mubr.f32.gmra.mxu0 %v621
        %v1032 = vpop.f32.mrf.mxu0
        %v1033 = vadd.f32 0.0, %v1032
        %v1034 = vpop.f32.mrf.mxu0
        %v1035 = vadd.f32 0.0, %v1034
        %1036 = vdwg.mxu0
        %v1037 = vld [vmem:[#allocation9] sm:$0xff]
        %v1038 = vld [vmem:[#allocation9 + $0x8] sm:$0xff]
        %v1039 = vld [vmem:[#allocation9 + $0x10] sm:$0xff]
        %v1040 = vld [vmem:[#allocation9 + $0x18] sm:$0xff]
        %v1041 = vld [vmem:[#allocation9 + $0x20] sm:$0xff]
        %v1042 = vld [vmem:[#allocation9 + $0x28] sm:$0xff]
        %v1043 = vld [vmem:[#allocation9 + $0x30] sm:$0xff]
        %v1044 = vld [vmem:[#allocation9 + $0x38] sm:$0xff]
        %v1045 = vld [vmem:[#allocation9 + $0x40] sm:$0xff]
        %v1046 = vld [vmem:[#allocation9 + $0x48] sm:$0xff]
        %v1047 = vld [vmem:[#allocation9 + $0x50] sm:$0xff]
        %v1048 = vld [vmem:[#allocation9 + $0x58] sm:$0xff]
        %v1049 = vld [vmem:[#allocation9 + $0x60] sm:$0xff]
        %v1050 = vld [vmem:[#allocation9 + $0x68] sm:$0xff]
        %v1051 = vld [vmem:[#allocation9 + $0x70] sm:$0xff]
        %v1052 = vld [vmem:[#allocation9 + $0x78] sm:$0xff]
        %v1053 = vld [vmem:[#allocation9 + $0x80] sm:$0xff]
        %v1054 = vld [vmem:[#allocation9 + $0x88] sm:$0xff]
        %v1055 = vld [vmem:[#allocation9 + $0x90] sm:$0xff]
        %v1056 = vld [vmem:[#allocation9 + $0x98] sm:$0xff]
        %v1057 = vld [vmem:[#allocation9 + $0xa0] sm:$0xff]
        %v1058 = vld [vmem:[#allocation9 + $0xa8] sm:$0xff]
        %v1059 = vld [vmem:[#allocation9 + $0xb0] sm:$0xff]
        %v1060 = vld [vmem:[#allocation9 + $0xb8] sm:$0xff]
        %v1061 = vld [vmem:[#allocation9 + $0xc0] sm:$0xff]
        %v1062 = vld [vmem:[#allocation9 + $0xc8] sm:$0xff]
        %v1063 = vld [vmem:[#allocation9 + $0xd0] sm:$0xff]
        %v1064 = vld [vmem:[#allocation9 + $0xd8] sm:$0xff]
        %v1065 = vld [vmem:[#allocation9 + $0xe0] sm:$0xff]
        %v1066 = vld [vmem:[#allocation9 + $0xe8] sm:$0xff]
        %v1067 = vld [vmem:[#allocation9 + $0xf0] sm:$0xff]
        %v1068 = vld [vmem:[#allocation9 + $0xf8] sm:$0xff]
        %v1069 = vld [vmem:[#allocation9 + $0x100] sm:$0xff]
        %v1070 = vld [vmem:[#allocation9 + $0x108] sm:$0xff]
        %v1071 = vld [vmem:[#allocation9 + $0x110] sm:$0xff]
        %v1072 = vld [vmem:[#allocation9 + $0x118] sm:$0xff]
        %v1073 = vld [vmem:[#allocation9 + $0x120] sm:$0xff]
        %v1074 = vld [vmem:[#allocation9 + $0x128] sm:$0xff]
        %v1075 = vld [vmem:[#allocation9 + $0x130] sm:$0xff]
        %v1076 = vld [vmem:[#allocation9 + $0x138] sm:$0xff]
        %v1077 = vld [vmem:[#allocation9 + $0x140] sm:$0xff]
        %v1078 = vld [vmem:[#allocation9 + $0x148] sm:$0xff]
        %v1079 = vld [vmem:[#allocation9 + $0x150] sm:$0xff]
        %v1080 = vld [vmem:[#allocation9 + $0x158] sm:$0xff]
        %v1081 = vld [vmem:[#allocation9 + $0x160] sm:$0xff]
        %v1082 = vld [vmem:[#allocation9 + $0x168] sm:$0xff]
        %v1083 = vld [vmem:[#allocation9 + $0x170] sm:$0xff]
        %v1084 = vld [vmem:[#allocation9 + $0x178] sm:$0xff]
        %v1085 = vld [vmem:[#allocation9 + $0x180] sm:$0xff]
        %v1086 = vld [vmem:[#allocation9 + $0x188] sm:$0xff]
        %v1087 = vld [vmem:[#allocation9 + $0x190] sm:$0xff]
        %v1088 = vld [vmem:[#allocation9 + $0x198] sm:$0xff]
        %v1089 = vld [vmem:[#allocation9 + $0x1a0] sm:$0xff]
        %v1090 = vld [vmem:[#allocation9 + $0x1a8] sm:$0xff]
        %v1091 = vld [vmem:[#allocation9 + $0x1b0] sm:$0xff]
        %v1092 = vld [vmem:[#allocation9 + $0x1b8] sm:$0xff]
        %v1093 = vld [vmem:[#allocation9 + $0x1c0] sm:$0xff]
        %v1094 = vld [vmem:[#allocation9 + $0x1c8] sm:$0xff]
        %v1095 = vld [vmem:[#allocation9 + $0x1d0] sm:$0xff]
        %v1096 = vld [vmem:[#allocation9 + $0x1d8] sm:$0xff]
        %v1097 = vld [vmem:[#allocation9 + $0x1e0] sm:$0xff]
        %v1098 = vld [vmem:[#allocation9 + $0x1e8] sm:$0xff]
        %v1099 = vld [vmem:[#allocation9 + $0x1f0] sm:$0xff]
        %v1100 = vld [vmem:[#allocation9 + $0x1f8] sm:$0xff]
        %1101 = vmatprep.subr.mxu0 %v1098
        %1102 = vmatpush1.msra.mxu0 %v1097
        %1103 = vmatprep.subr.mxu0 %v1094
        %1104 = vmatpush1.msra.mxu0 %v1093
        %1105 = vmatprep.subr.mxu0 %v1090
        %1106 = vmatpush1.msra.mxu0 %v1089
        %1107 = vmatprep.subr.mxu0 %v1086
        %1108 = vmatpush1.msra.mxu0 %v1085
        %1109 = vmatprep.subr.mxu0 %v1082
        %1110 = vmatpush1.msra.mxu0 %v1081
        %1111 = vmatprep.subr.mxu0 %v1078
        %1112 = vmatpush1.msra.mxu0 %v1077
        %1113 = vmatprep.subr.mxu0 %v1074
        %1114 = vmatpush1.msra.mxu0 %v1073
        %1115 = vmatprep.subr.mxu0 %v1070
        %1116 = vmatpush1.msra.mxu0 %v1069
        %1117 = vmatprep.subr.mxu0 %v1066
        %1118 = vmatpush1.msra.mxu0 %v1065
        %1119 = vmatprep.subr.mxu0 %v1062
        %1120 = vmatpush1.msra.mxu0 %v1061
        %1121 = vmatprep.subr.mxu0 %v1058
        %1122 = vmatpush1.msra.mxu0 %v1057
        %1123 = vmatprep.subr.mxu0 %v1054
        %1124 = vmatpush1.msra.mxu0 %v1053
        %1125 = vmatprep.subr.mxu0 %v1050
        %1126 = vmatpush1.msra.mxu0 %v1049
        %1127 = vmatprep.subr.mxu0 %v1046
        %1128 = vmatpush1.msra.mxu0 %v1045
        %1129 = vmatprep.subr.mxu0 %v1042
        %1130 = vmatpush1.msra.mxu0 %v1041
        %1131 = vmatprep.subr.mxu0 %v1038
        %1132 = vmatpush1.msra.mxu0 %v1037
        %1133 = vmatprep.subr.mxu0 0.0
        %1134 = vmatpush2.msra.mxu0 0.0
        %1135 = vmatprep.subr.mxu0 0.0
        %1136 = vmatpush2.msra.mxu0 0.0
        %1137 = vmatprep.subr.mxu0 0.0
        %1138 = vmatpush2.msra.mxu0 0.0
        %1139 = vmatprep.subr.mxu0 0.0
        %1140 = vmatpush2.msra.mxu0 0.0
        %1141 = vmatprep.subr.mxu0 0.0
        %1142 = vmatpush2.msra.mxu0 0.0
        %1143 = vmatprep.subr.mxu0 0.0
        %1144 = vmatpush2.msra.mxu0 0.0
        %1145 = vmatprep.subr.mxu0 0.0
        %1146 = vmatpush2.msra.mxu0 0.0
        %1147 = vmatprep.subr.mxu0 0.0
        %1148 = vmatpush2.msra.mxu0 0.0
        %1149 = vmatprep.subr.mxu0 0.0
        %1150 = vmatpush2.msra.mxu0 0.0
        %1151 = vmatprep.subr.mxu0 0.0
        %1152 = vmatpush2.msra.mxu0 0.0
        %1153 = vmatprep.subr.mxu0 0.0
        %1154 = vmatpush2.msra.mxu0 0.0
        %1155 = vmatprep.subr.mxu0 0.0
        %1156 = vmatpush2.msra.mxu0 0.0
        %1157 = vmatprep.subr.mxu0 0.0
        %1158 = vmatpush2.msra.mxu0 0.0
        %1159 = vmatprep.subr.mxu0 0.0
        %1160 = vmatpush2.msra.mxu0 0.0
        %1161 = vmatprep.subr.mxu0 0.0
        %1162 = vmatpush2.msra.mxu0 0.0
        %1163 = vmatprep.subr.mxu0 0.0
        %1164 = vmatpush2.msra.mxu0 0.0
        %1165 = vmatprep.mubr.f32.mxu0 0.0
        %1166 = vmatmul.mubr.f32.gmra.mxu0 %v623
        %v1167 = vpop.f32.mrf.mxu0
        %v1168 = vadd.f32 0.0, %v1167
        %v1169 = vpop.f32.mrf.mxu0
        %v1170 = vadd.f32 0.0, %v1169
        %1171 = vdwg.mxu0
        %1172 = vmatprep.subr.mxu0 %v1100
        %1173 = vmatpush1.msra.mxu0 %v1099
        %1174 = vmatprep.subr.mxu0 %v1096
        %1175 = vmatpush1.msra.mxu0 %v1095
        %1176 = vmatprep.subr.mxu0 %v1092
        %1177 = vmatpush1.msra.mxu0 %v1091
        %1178 = vmatprep.subr.mxu0 %v1088
        %1179 = vmatpush1.msra.mxu0 %v1087
        %1180 = vmatprep.subr.mxu0 %v1084
        %1181 = vmatpush1.msra.mxu0 %v1083
        %1182 = vmatprep.subr.mxu0 %v1080
        %1183 = vmatpush1.msra.mxu0 %v1079
        %1184 = vmatprep.subr.mxu0 %v1076
        %1185 = vmatpush1.msra.mxu0 %v1075
        %1186 = vmatprep.subr.mxu0 %v1072
        %1187 = vmatpush1.msra.mxu0 %v1071
        %1188 = vmatprep.subr.mxu0 %v1068
        %1189 = vmatpush1.msra.mxu0 %v1067
        %1190 = vmatprep.subr.mxu0 %v1064
        %1191 = vmatpush1.msra.mxu0 %v1063
        %1192 = vmatprep.subr.mxu0 %v1060
        %1193 = vmatpush1.msra.mxu0 %v1059
        %1194 = vmatprep.subr.mxu0 %v1056
        %1195 = vmatpush1.msra.mxu0 %v1055
        %1196 = vmatprep.subr.mxu0 %v1052
        %1197 = vmatpush1.msra.mxu0 %v1051
        %1198 = vmatprep.subr.mxu0 %v1048
        %1199 = vmatpush1.msra.mxu0 %v1047
        %1200 = vmatprep.subr.mxu0 %v1044
        %1201 = vmatpush1.msra.mxu0 %v1043
        %1202 = vmatprep.subr.mxu0 %v1040
        %1203 = vmatpush1.msra.mxu0 %v1039
        %1204 = vmatprep.subr.mxu0 0.0
        %1205 = vmatpush2.msra.mxu0 0.0
        %1206 = vmatprep.subr.mxu0 0.0
        %1207 = vmatpush2.msra.mxu0 0.0
        %1208 = vmatprep.subr.mxu0 0.0
        %1209 = vmatpush2.msra.mxu0 0.0
        %1210 = vmatprep.subr.mxu0 0.0
        %1211 = vmatpush2.msra.mxu0 0.0
        %1212 = vmatprep.subr.mxu0 0.0
        %1213 = vmatpush2.msra.mxu0 0.0
        %1214 = vmatprep.subr.mxu0 0.0
        %1215 = vmatpush2.msra.mxu0 0.0
        %1216 = vmatprep.subr.mxu0 0.0
        %1217 = vmatpush2.msra.mxu0 0.0
        %1218 = vmatprep.subr.mxu0 0.0
        %1219 = vmatpush2.msra.mxu0 0.0
        %1220 = vmatprep.subr.mxu0 0.0
        %1221 = vmatpush2.msra.mxu0 0.0
        %1222 = vmatprep.subr.mxu0 0.0
        %1223 = vmatpush2.msra.mxu0 0.0
        %1224 = vmatprep.subr.mxu0 0.0
        %1225 = vmatpush2.msra.mxu0 0.0
        %1226 = vmatprep.subr.mxu0 0.0
        %1227 = vmatpush2.msra.mxu0 0.0
        %1228 = vmatprep.subr.mxu0 0.0
        %1229 = vmatpush2.msra.mxu0 0.0
        %1230 = vmatprep.subr.mxu0 0.0
        %1231 = vmatpush2.msra.mxu0 0.0
        %1232 = vmatprep.subr.mxu0 0.0
        %1233 = vmatpush2.msra.mxu0 0.0
        %1234 = vmatprep.subr.mxu0 0.0
        %1235 = vmatpush2.msra.mxu0 0.0
        %1236 = vmatprep.mubr.f32.mxu0 0.0
        %1237 = vmatmul.mubr.f32.gmra.mxu0 %v623
        %v1238 = vpop.f32.mrf.mxu0
        %v1239 = vadd.f32 0.0, %v1238
        %v1240 = vpop.f32.mrf.mxu0
        %v1241 = vadd.f32 0.0, %v1240
        %1242 = vdwg.mxu0
        %v1243 = vstv %s620
        %v1244 = vadd.f32 %v962, %v1168
        %v1245 = vadd.f32 %v964, %v1170
        %v1246 = vadd.f32 %v1033, %v1239
        %v1247 = vadd.f32 %v1035, %v1241
        %v1249 = vlaneseq
        %v1250 = vshrl.u32 %v1249, 7
        %v1251 = vsub.s32 0, %v1250
        %v1252 = vrot.slane %v619, %v1251
        %v1253 = vlaneseq
        %v1254 = vshrl.u32 %v1253, 7
        %v1255 = vsub.s32 1, %v1254
        %v1256 = vrot.slane %v619, %v1255
        %v1257 = vlaneseq
        %v1258 = vshrl.u32 %v1257, 7
        %v1259 = vsub.s32 2, %v1258
        %v1260 = vrot.slane %v619, %v1259
        %v1261 = vlaneseq
        %v1262 = vshrl.u32 %v1261, 7
        %v1263 = vsub.s32 3, %v1262
        %v1264 = vrot.slane %v619, %v1263
        %v1269 = vadd.f32 %v1244, %v1252
        %v1270 = vadd.f32 %v1245, %v1256
        %v1271 = vadd.f32 %v1246, %v1260
        %v1272 = vadd.f32 %v1247, %v1264
        %v1273 = vxor.u32 %v1269, 2147483648
        %v1274 = vmul.f32 %v1273, 1.442695
        %v1275 = vpow.pop %v1274
        %v1276 = vadd.f32 %v1275, 1.0
        %v1277 = vrcp.pop %v1276
        %v1278 = vmul.f32 1.0, %v1277
        %v1279 = vxor.u32 %v1270, 2147483648
        %v1280 = vmul.f32 %v1279, 1.442695
        %v1281 = vpow.pop %v1280
        %v1282 = vadd.f32 %v1281, 1.0
        %v1283 = vrcp.pop %v1282
        %v1284 = vmul.f32 1.0, %v1283
        %v1285 = vtanh.pop %v1271
        %v1286 = vxor.u32 %v1272, 2147483648
        %v1287 = vmul.f32 %v1286, 1.442695
        %v1288 = vpow.pop %v1287
        %v1289 = vadd.f32 %v1288, 1.0
        %v1290 = vrcp.pop %v1289
        %v1291 = vmul.f32 1.0, %v1290
        %v1292 = vmul.f32 %v1284, %v624
        %v1293 = vmul.f32 %v1278, %v1285
        %v1294 = vadd.f32 %v1292, %v1293
        %v1295 = vtanh.pop %v1294
        %v1296 = vmul.f32 %v1291, %v1295
        %vm1297 = vcmp.ge.s32.totalorder %v1243, 1
        %v1298 = vsel %vm1297, %v1296, %v623
        %v1299 = vsel %vm1297, %v1294, %v624
        %s1300 = smul.u32 0, 4
        %s1301 = smul.addr %s1300, 8
        %s1302 = scalar_lea.vmem [#allocation2], %s1301
        %v1303 = vld [vmem:[%s1302] sm:$0xff]
        %v1304 = vld [vmem:[%s1302 + $0x8] sm:$0xff]
        %v1305 = vld [vmem:[%s1302 + $0x10] sm:$0xff]
        %v1306 = vld [vmem:[%s1302 + $0x18] sm:$0xff]
        %v1307 = vadd.f32 %v1303, %v820
        %v1308 = vadd.f32 %v1304, %v822
        %v1309 = vadd.f32 %v1305, %v891
        %v1310 = vadd.f32 %v1306, %v893
        %v1311 = vxor.u32 %v1307, 2147483648
        %v1312 = vmul.f32 %v1311, 1.442695
        %v1313 = vpow.pop %v1312
        %v1314 = vadd.f32 %v1313, 1.0
        %v1315 = vrcp.pop %v1314
        %v1316 = vmul.f32 1.0, %v1315
        %v1317 = vxor.u32 %v1308, 2147483648
        %v1318 = vmul.f32 %v1317, 1.442695
        %v1319 = vpow.pop %v1318
        %v1320 = vadd.f32 %v1319, 1.0
        %v1321 = vrcp.pop %v1320
        %v1322 = vmul.f32 1.0, %v1321
        %v1323 = vtanh.pop %v1309
        %v1324 = vxor.u32 %v1310, 2147483648
        %v1325 = vmul.f32 %v1324, 1.442695
        %v1326 = vpow.pop %v1325
        %v1327 = vadd.f32 %v1326, 1.0
        %v1328 = vrcp.pop %v1327
        %v1329 = vmul.f32 1.0, %v1328
        %v1330 = vmul.f32 %v1322, %v622
        %v1331 = vmul.f32 %v1316, %v1323
        %v1332 = vadd.f32 %v1330, %v1331
        %v1333 = vtanh.pop %v1332
        %v1334 = vmul.f32 %v1329, %v1333
        %s1335 = sadd.s32 %s620, 1
        %1336 = vmatprep.subr.mxu0 %v746
        %1337 = vmatpush1.msra.mxu0 %v745
        %1338 = vmatprep.subr.mxu0 %v738
        %1339 = vmatpush1.msra.mxu0 %v737
        %1340 = vmatprep.subr.mxu0 %v730
        %1341 = vmatpush1.msra.mxu0 %v729
        %1342 = vmatprep.subr.mxu0 %v722
        %1343 = vmatpush1.msra.mxu0 %v721
        %1344 = vmatprep.subr.mxu0 %v714
        %1345 = vmatpush1.msra.mxu0 %v713
        %1346 = vmatprep.subr.mxu0 %v706
        %1347 = vmatpush1.msra.mxu0 %v705
        %1348 = vmatprep.subr.mxu0 %v698
        %1349 = vmatpush1.msra.mxu0 %v697
        %1350 = vmatprep.subr.mxu0 %v690
        %1351 = vmatpush1.msra.mxu0 %v689
        %1352 = vmatprep.subr.mxu0 %v682
        %1353 = vmatpush1.msra.mxu0 %v681
        %1354 = vmatprep.subr.mxu0 %v674
        %1355 = vmatpush1.msra.mxu0 %v673
        %1356 = vmatprep.subr.mxu0 %v666
        %1357 = vmatpush1.msra.mxu0 %v665
        %1358 = vmatprep.subr.mxu0 %v658
        %1359 = vmatpush1.msra.mxu0 %v657
        %1360 = vmatprep.subr.mxu0 %v650
        %1361 = vmatpush1.msra.mxu0 %v649
        %1362 = vmatprep.subr.mxu0 %v642
        %1363 = vmatpush1.msra.mxu0 %v641
        %1364 = vmatprep.subr.mxu0 %v634
        %1365 = vmatpush1.msra.mxu0 %v633
        %1366 = vmatprep.subr.mxu0 %v626
        %1367 = vmatpush1.msra.mxu0 %v625
        %1368 = vmatprep.subr.mxu0 0.0
        %1369 = vmatpush2.msra.mxu0 0.0
        %1370 = vmatprep.subr.mxu0 0.0
        %1371 = vmatpush2.msra.mxu0 0.0
        %1372 = vmatprep.subr.mxu0 0.0
        %1373 = vmatpush2.msra.mxu0 0.0
        %1374 = vmatprep.subr.mxu0 0.0
        %1375 = vmatpush2.msra.mxu0 0.0
        %1376 = vmatprep.subr.mxu0 0.0
        %1377 = vmatpush2.msra.mxu0 0.0
        %1378 = vmatprep.subr.mxu0 0.0
        %1379 = vmatpush2.msra.mxu0 0.0
        %1380 = vmatprep.subr.mxu0 0.0
        %1381 = vmatpush2.msra.mxu0 0.0
        %1382 = vmatprep.subr.mxu0 0.0
        %1383 = vmatpush2.msra.mxu0 0.0
        %1384 = vmatprep.subr.mxu0 0.0
        %1385 = vmatpush2.msra.mxu0 0.0
        %1386 = vmatprep.subr.mxu0 0.0
        %1387 = vmatpush2.msra.mxu0 0.0
        %1388 = vmatprep.subr.mxu0 0.0
        %1389 = vmatpush2.msra.mxu0 0.0
        %1390 = vmatprep.subr.mxu0 0.0
        %1391 = vmatpush2.msra.mxu0 0.0
        %1392 = vmatprep.subr.mxu0 0.0
        %1393 = vmatpush2.msra.mxu0 0.0
        %1394 = vmatprep.subr.mxu0 0.0
        %1395 = vmatpush2.msra.mxu0 0.0
        %1396 = vmatprep.subr.mxu0 0.0
        %1397 = vmatpush2.msra.mxu0 0.0
        %1398 = vmatprep.subr.mxu0 0.0
        %1399 = vmatpush2.msra.mxu0 0.0
        %1400 = vmatprep.mubr.f32.mxu0 0.0
        %1401 = vmatmul.mubr.f32.gmra.mxu0 %v1334
        %v1402 = vpop.f32.mrf.mxu0
        %v1403 = vadd.f32 0.0, %v1402
        %v1404 = vpop.f32.mrf.mxu0
        %v1405 = vadd.f32 0.0, %v1404
        %1406 = vdwg.mxu0
        %1407 = vmatprep.subr.mxu0 %v748
        %1408 = vmatpush1.msra.mxu0 %v747
        %1409 = vmatprep.subr.mxu0 %v740
        %1410 = vmatpush1.msra.mxu0 %v739
        %1411 = vmatprep.subr.mxu0 %v732
        %1412 = vmatpush1.msra.mxu0 %v731
        %1413 = vmatprep.subr.mxu0 %v724
        %1414 = vmatpush1.msra.mxu0 %v723
        %1415 = vmatprep.subr.mxu0 %v716
        %1416 = vmatpush1.msra.mxu0 %v715
        %1417 = vmatprep.subr.mxu0 %v708
        %1418 = vmatpush1.msra.mxu0 %v707
        %1419 = vmatprep.subr.mxu0 %v700
        %1420 = vmatpush1.msra.mxu0 %v699
        %1421 = vmatprep.subr.mxu0 %v692
        %1422 = vmatpush1.msra.mxu0 %v691
        %1423 = vmatprep.subr.mxu0 %v684
        %1424 = vmatpush1.msra.mxu0 %v683
        %1425 = vmatprep.subr.mxu0 %v676
        %1426 = vmatpush1.msra.mxu0 %v675
        %1427 = vmatprep.subr.mxu0 %v668
        %1428 = vmatpush1.msra.mxu0 %v667
        %1429 = vmatprep.subr.mxu0 %v660
        %1430 = vmatpush1.msra.mxu0 %v659
        %1431 = vmatprep.subr.mxu0 %v652
        %1432 = vmatpush1.msra.mxu0 %v651
        %1433 = vmatprep.subr.mxu0 %v644
        %1434 = vmatpush1.msra.mxu0 %v643
        %1435 = vmatprep.subr.mxu0 %v636
        %1436 = vmatpush1.msra.mxu0 %v635
        %1437 = vmatprep.subr.mxu0 %v628
        %1438 = vmatpush1.msra.mxu0 %v627
        %1439 = vmatprep.subr.mxu0 0.0
        %1440 = vmatpush2.msra.mxu0 0.0
        %1441 = vmatprep.subr.mxu0 0.0
        %1442 = vmatpush2.msra.mxu0 0.0
        %1443 = vmatprep.subr.mxu0 0.0
        %1444 = vmatpush2.msra.mxu0 0.0
        %1445 = vmatprep.subr.mxu0 0.0
        %1446 = vmatpush2.msra.mxu0 0.0
        %1447 = vmatprep.subr.mxu0 0.0
        %1448 = vmatpush2.msra.mxu0 0.0
        %1449 = vmatprep.subr.mxu0 0.0
        %1450 = vmatpush2.msra.mxu0 0.0
        %1451 = vmatprep.subr.mxu0 0.0
        %1452 = vmatpush2.msra.mxu0 0.0
        %1453 = vmatprep.subr.mxu0 0.0
        %1454 = vmatpush2.msra.mxu0 0.0
        %1455 = vmatprep.subr.mxu0 0.0
        %1456 = vmatpush2.msra.mxu0 0.0
        %1457 = vmatprep.subr.mxu0 0.0
        %1458 = vmatpush2.msra.mxu0 0.0
        %1459 = vmatprep.subr.mxu0 0.0
        %1460 = vmatpush2.msra.mxu0 0.0
        %1461 = vmatprep.subr.mxu0 0.0
        %1462 = vmatpush2.msra.mxu0 0.0
        %1463 = vmatprep.subr.mxu0 0.0
        %1464 = vmatpush2.msra.mxu0 0.0
        %1465 = vmatprep.subr.mxu0 0.0
        %1466 = vmatpush2.msra.mxu0 0.0
        %1467 = vmatprep.subr.mxu0 0.0
        %1468 = vmatpush2.msra.mxu0 0.0
        %1469 = vmatprep.subr.mxu0 0.0
        %1470 = vmatpush2.msra.mxu0 0.0
        %1471 = vmatprep.mubr.f32.mxu0 0.0
        %1472 = vmatmul.mubr.f32.gmra.mxu0 %v1334
        %v1473 = vpop.f32.mrf.mxu0
        %v1474 = vadd.f32 0.0, %v1473
        %v1475 = vpop.f32.mrf.mxu0
        %v1476 = vadd.f32 0.0, %v1475
        %1477 = vdwg.mxu0
        %1478 = vmatprep.subr.mxu0 %v750
        %1479 = vmatpush1.msra.mxu0 %v749
        %1480 = vmatprep.subr.mxu0 %v742
        %1481 = vmatpush1.msra.mxu0 %v741
        %1482 = vmatprep.subr.mxu0 %v734
        %1483 = vmatpush1.msra.mxu0 %v733
        %1484 = vmatprep.subr.mxu0 %v726
        %1485 = vmatpush1.msra.mxu0 %v725
        %1486 = vmatprep.subr.mxu0 %v718
        %1487 = vmatpush1.msra.mxu0 %v717
        %1488 = vmatprep.subr.mxu0 %v710
        %1489 = vmatpush1.msra.mxu0 %v709
        %1490 = vmatprep.subr.mxu0 %v702
        %1491 = vmatpush1.msra.mxu0 %v701
        %1492 = vmatprep.subr.mxu0 %v694
        %1493 = vmatpush1.msra.mxu0 %v693
        %1494 = vmatprep.subr.mxu0 %v686
        %1495 = vmatpush1.msra.mxu0 %v685
        %1496 = vmatprep.subr.mxu0 %v678
        %1497 = vmatpush1.msra.mxu0 %v677
        %1498 = vmatprep.subr.mxu0 %v670
        %1499 = vmatpush1.msra.mxu0 %v669
        %1500 = vmatprep.subr.mxu0 %v662
        %1501 = vmatpush1.msra.mxu0 %v661
        %1502 = vmatprep.subr.mxu0 %v654
        %1503 = vmatpush1.msra.mxu0 %v653
        %1504 = vmatprep.subr.mxu0 %v646
        %1505 = vmatpush1.msra.mxu0 %v645
        %1506 = vmatprep.subr.mxu0 %v638
        %1507 = vmatpush1.msra.mxu0 %v637
        %1508 = vmatprep.subr.mxu0 %v630
        %1509 = vmatpush1.msra.mxu0 %v629
        %1510 = vmatprep.subr.mxu0 0.0
        %1511 = vmatpush2.msra.mxu0 0.0
        %1512 = vmatprep.subr.mxu0 0.0
        %1513 = vmatpush2.msra.mxu0 0.0
        %1514 = vmatprep.subr.mxu0 0.0
        %1515 = vmatpush2.msra.mxu0 0.0
        %1516 = vmatprep.subr.mxu0 0.0
        %1517 = vmatpush2.msra.mxu0 0.0
        %1518 = vmatprep.subr.mxu0 0.0
        %1519 = vmatpush2.msra.mxu0 0.0
        %1520 = vmatprep.subr.mxu0 0.0
        %1521 = vmatpush2.msra.mxu0 0.0
        %1522 = vmatprep.subr.mxu0 0.0
        %1523 = vmatpush2.msra.mxu0 0.0
        %1524 = vmatprep.subr.mxu0 0.0
        %1525 = vmatpush2.msra.mxu0 0.0
        %1526 = vmatprep.subr.mxu0 0.0
        %1527 = vmatpush2.msra.mxu0 0.0
        %1528 = vmatprep.subr.mxu0 0.0
        %1529 = vmatpush2.msra.mxu0 0.0
        %1530 = vmatprep.subr.mxu0 0.0
        %1531 = vmatpush2.msra.mxu0 0.0
        %1532 = vmatprep.subr.mxu0 0.0
        %1533 = vmatpush2.msra.mxu0 0.0
        %1534 = vmatprep.subr.mxu0 0.0
        %1535 = vmatpush2.msra.mxu0 0.0
        %1536 = vmatprep.subr.mxu0 0.0
        %1537 = vmatpush2.msra.mxu0 0.0
        %1538 = vmatprep.subr.mxu0 0.0
        %1539 = vmatpush2.msra.mxu0 0.0
        %1540 = vmatprep.subr.mxu0 0.0
        %1541 = vmatpush2.msra.mxu0 0.0
        %1542 = vmatprep.mubr.f32.mxu0 0.0
        %1543 = vmatmul.mubr.f32.gmra.mxu0 %v1334
        %v1544 = vpop.f32.mrf.mxu0
        %v1545 = vadd.f32 0.0, %v1544
        %v1546 = vpop.f32.mrf.mxu0
        %v1547 = vadd.f32 0.0, %v1546
        %1548 = vdwg.mxu0
        %1549 = vmatprep.subr.mxu0 %v752
        %1550 = vmatpush1.msra.mxu0 %v751
        %1551 = vmatprep.subr.mxu0 %v744
        %1552 = vmatpush1.msra.mxu0 %v743
        %1553 = vmatprep.subr.mxu0 %v736
        %1554 = vmatpush1.msra.mxu0 %v735
        %1555 = vmatprep.subr.mxu0 %v728
        %1556 = vmatpush1.msra.mxu0 %v727
        %1557 = vmatprep.subr.mxu0 %v720
        %1558 = vmatpush1.msra.mxu0 %v719
        %1559 = vmatprep.subr.mxu0 %v712
        %1560 = vmatpush1.msra.mxu0 %v711
        %1561 = vmatprep.subr.mxu0 %v704
        %1562 = vmatpush1.msra.mxu0 %v703
        %1563 = vmatprep.subr.mxu0 %v696
        %1564 = vmatpush1.msra.mxu0 %v695
        %1565 = vmatprep.subr.mxu0 %v688
        %1566 = vmatpush1.msra.mxu0 %v687
        %1567 = vmatprep.subr.mxu0 %v680
        %1568 = vmatpush1.msra.mxu0 %v679
        %1569 = vmatprep.subr.mxu0 %v672
        %1570 = vmatpush1.msra.mxu0 %v671
        %1571 = vmatprep.subr.mxu0 %v664
        %1572 = vmatpush1.msra.mxu0 %v663
        %1573 = vmatprep.subr.mxu0 %v656
        %1574 = vmatpush1.msra.mxu0 %v655
        %1575 = vmatprep.subr.mxu0 %v648
        %1576 = vmatpush1.msra.mxu0 %v647
        %1577 = vmatprep.subr.mxu0 %v640
        %1578 = vmatpush1.msra.mxu0 %v639
        %1579 = vmatprep.subr.mxu0 %v632
        %1580 = vmatpush1.msra.mxu0 %v631
        %1581 = vmatprep.subr.mxu0 0.0
        %1582 = vmatpush2.msra.mxu0 0.0
        %1583 = vmatprep.subr.mxu0 0.0
        %1584 = vmatpush2.msra.mxu0 0.0
        %1585 = vmatprep.subr.mxu0 0.0
        %1586 = vmatpush2.msra.mxu0 0.0
        %1587 = vmatprep.subr.mxu0 0.0
        %1588 = vmatpush2.msra.mxu0 0.0
        %1589 = vmatprep.subr.mxu0 0.0
        %1590 = vmatpush2.msra.mxu0 0.0
        %1591 = vmatprep.subr.mxu0 0.0
        %1592 = vmatpush2.msra.mxu0 0.0
        %1593 = vmatprep.subr.mxu0 0.0
        %1594 = vmatpush2.msra.mxu0 0.0
        %1595 = vmatprep.subr.mxu0 0.0
        %1596 = vmatpush2.msra.mxu0 0.0
        %1597 = vmatprep.subr.mxu0 0.0
        %1598 = vmatpush2.msra.mxu0 0.0
        %1599 = vmatprep.subr.mxu0 0.0
        %1600 = vmatpush2.msra.mxu0 0.0
        %1601 = vmatprep.subr.mxu0 0.0
        %1602 = vmatpush2.msra.mxu0 0.0
        %1603 = vmatprep.subr.mxu0 0.0
        %1604 = vmatpush2.msra.mxu0 0.0
        %1605 = vmatprep.subr.mxu0 0.0
        %1606 = vmatpush2.msra.mxu0 0.0
        %1607 = vmatprep.subr.mxu0 0.0
        %1608 = vmatpush2.msra.mxu0 0.0
        %1609 = vmatprep.subr.mxu0 0.0
        %1610 = vmatpush2.msra.mxu0 0.0
        %1611 = vmatprep.subr.mxu0 0.0
        %1612 = vmatpush2.msra.mxu0 0.0
        %1613 = vmatprep.mubr.f32.mxu0 0.0
        %1614 = vmatmul.mubr.f32.gmra.mxu0 %v1334
        %v1615 = vpop.f32.mrf.mxu0
        %v1616 = vadd.f32 0.0, %v1615
        %v1617 = vpop.f32.mrf.mxu0
        %v1618 = vadd.f32 0.0, %v1617
        %1619 = vdwg.mxu0
        %1620 = vmatprep.subr.mxu0 %v1098
        %1621 = vmatpush1.msra.mxu0 %v1097
        %1622 = vmatprep.subr.mxu0 %v1094
        %1623 = vmatpush1.msra.mxu0 %v1093
        %1624 = vmatprep.subr.mxu0 %v1090
        %1625 = vmatpush1.msra.mxu0 %v1089
        %1626 = vmatprep.subr.mxu0 %v1086
        %1627 = vmatpush1.msra.mxu0 %v1085
        %1628 = vmatprep.subr.mxu0 %v1082
        %1629 = vmatpush1.msra.mxu0 %v1081
        %1630 = vmatprep.subr.mxu0 %v1078
        %1631 = vmatpush1.msra.mxu0 %v1077
        %1632 = vmatprep.subr.mxu0 %v1074
        %1633 = vmatpush1.msra.mxu0 %v1073
        %1634 = vmatprep.subr.mxu0 %v1070
        %1635 = vmatpush1.msra.mxu0 %v1069
        %1636 = vmatprep.subr.mxu0 %v1066
        %1637 = vmatpush1.msra.mxu0 %v1065
        %1638 = vmatprep.subr.mxu0 %v1062
        %1639 = vmatpush1.msra.mxu0 %v1061
        %1640 = vmatprep.subr.mxu0 %v1058
        %1641 = vmatpush1.msra.mxu0 %v1057
        %1642 = vmatprep.subr.mxu0 %v1054
        %1643 = vmatpush1.msra.mxu0 %v1053
        %1644 = vmatprep.subr.mxu0 %v1050
        %1645 = vmatpush1.msra.mxu0 %v1049
        %1646 = vmatprep.subr.mxu0 %v1046
        %1647 = vmatpush1.msra.mxu0 %v1045
        %1648 = vmatprep.subr.mxu0 %v1042
        %1649 = vmatpush1.msra.mxu0 %v1041
        %1650 = vmatprep.subr.mxu0 %v1038
        %1651 = vmatpush1.msra.mxu0 %v1037
        %1652 = vmatprep.subr.mxu0 0.0
        %1653 = vmatpush2.msra.mxu0 0.0
        %1654 = vmatprep.subr.mxu0 0.0
        %1655 = vmatpush2.msra.mxu0 0.0
        %1656 = vmatprep.subr.mxu0 0.0
        %1657 = vmatpush2.msra.mxu0 0.0
        %1658 = vmatprep.subr.mxu0 0.0
        %1659 = vmatpush2.msra.mxu0 0.0
        %1660 = vmatprep.subr.mxu0 0.0
        %1661 = vmatpush2.msra.mxu0 0.0
        %1662 = vmatprep.subr.mxu0 0.0
        %1663 = vmatpush2.msra.mxu0 0.0
        %1664 = vmatprep.subr.mxu0 0.0
        %1665 = vmatpush2.msra.mxu0 0.0
        %1666 = vmatprep.subr.mxu0 0.0
        %1667 = vmatpush2.msra.mxu0 0.0
        %1668 = vmatprep.subr.mxu0 0.0
        %1669 = vmatpush2.msra.mxu0 0.0
        %1670 = vmatprep.subr.mxu0 0.0
        %1671 = vmatpush2.msra.mxu0 0.0
        %1672 = vmatprep.subr.mxu0 0.0
        %1673 = vmatpush2.msra.mxu0 0.0
        %1674 = vmatprep.subr.mxu0 0.0
        %1675 = vmatpush2.msra.mxu0 0.0
        %1676 = vmatprep.subr.mxu0 0.0
        %1677 = vmatpush2.msra.mxu0 0.0
        %1678 = vmatprep.subr.mxu0 0.0
        %1679 = vmatpush2.msra.mxu0 0.0
        %1680 = vmatprep.subr.mxu0 0.0
        %1681 = vmatpush2.msra.mxu0 0.0
        %1682 = vmatprep.subr.mxu0 0.0
        %1683 = vmatpush2.msra.mxu0 0.0
        %1684 = vmatprep.mubr.f32.mxu0 0.0
        %1685 = vmatmul.mubr.f32.gmra.mxu0 %v1298
        %v1686 = vpop.f32.mrf.mxu0
        %v1687 = vadd.f32 0.0, %v1686
        %v1688 = vpop.f32.mrf.mxu0
        %v1689 = vadd.f32 0.0, %v1688
        %1690 = vdwg.mxu0
        %1691 = vmatprep.subr.mxu0 %v1100
        %1692 = vmatpush1.msra.mxu0 %v1099
        %1693 = vmatprep.subr.mxu0 %v1096
        %1694 = vmatpush1.msra.mxu0 %v1095
        %1695 = vmatprep.subr.mxu0 %v1092
        %1696 = vmatpush1.msra.mxu0 %v1091
        %1697 = vmatprep.subr.mxu0 %v1088
        %1698 = vmatpush1.msra.mxu0 %v1087
        %1699 = vmatprep.subr.mxu0 %v1084
        %1700 = vmatpush1.msra.mxu0 %v1083
        %1701 = vmatprep.subr.mxu0 %v1080
        %1702 = vmatpush1.msra.mxu0 %v1079
        %1703 = vmatprep.subr.mxu0 %v1076
        %1704 = vmatpush1.msra.mxu0 %v1075
        %1705 = vmatprep.subr.mxu0 %v1072
        %1706 = vmatpush1.msra.mxu0 %v1071
        %1707 = vmatprep.subr.mxu0 %v1068
        %1708 = vmatpush1.msra.mxu0 %v1067
        %1709 = vmatprep.subr.mxu0 %v1064
        %1710 = vmatpush1.msra.mxu0 %v1063
        %1711 = vmatprep.subr.mxu0 %v1060
        %1712 = vmatpush1.msra.mxu0 %v1059
        %1713 = vmatprep.subr.mxu0 %v1056
        %1714 = vmatpush1.msra.mxu0 %v1055
        %1715 = vmatprep.subr.mxu0 %v1052
        %1716 = vmatpush1.msra.mxu0 %v1051
        %1717 = vmatprep.subr.mxu0 %v1048
        %1718 = vmatpush1.msra.mxu0 %v1047
        %1719 = vmatprep.subr.mxu0 %v1044
        %1720 = vmatpush1.msra.mxu0 %v1043
        %1721 = vmatprep.subr.mxu0 %v1040
        %1722 = vmatpush1.msra.mxu0 %v1039
        %1723 = vmatprep.subr.mxu0 0.0
        %1724 = vmatpush2.msra.mxu0 0.0
        %1725 = vmatprep.subr.mxu0 0.0
        %1726 = vmatpush2.msra.mxu0 0.0
        %1727 = vmatprep.subr.mxu0 0.0
        %1728 = vmatpush2.msra.mxu0 0.0
        %1729 = vmatprep.subr.mxu0 0.0
        %1730 = vmatpush2.msra.mxu0 0.0
        %1731 = vmatprep.subr.mxu0 0.0
        %1732 = vmatpush2.msra.mxu0 0.0
        %1733 = vmatprep.subr.mxu0 0.0
        %1734 = vmatpush2.msra.mxu0 0.0
        %1735 = vmatprep.subr.mxu0 0.0
        %1736 = vmatpush2.msra.mxu0 0.0
        %1737 = vmatprep.subr.mxu0 0.0
        %1738 = vmatpush2.msra.mxu0 0.0
        %1739 = vmatprep.subr.mxu0 0.0
        %1740 = vmatpush2.msra.mxu0 0.0
        %1741 = vmatprep.subr.mxu0 0.0
        %1742 = vmatpush2.msra.mxu0 0.0
        %1743 = vmatprep.subr.mxu0 0.0
        %1744 = vmatpush2.msra.mxu0 0.0
        %1745 = vmatprep.subr.mxu0 0.0
        %1746 = vmatpush2.msra.mxu0 0.0
        %1747 = vmatprep.subr.mxu0 0.0
        %1748 = vmatpush2.msra.mxu0 0.0
        %1749 = vmatprep.subr.mxu0 0.0
        %1750 = vmatpush2.msra.mxu0 0.0
        %1751 = vmatprep.subr.mxu0 0.0
        %1752 = vmatpush2.msra.mxu0 0.0
        %1753 = vmatprep.subr.mxu0 0.0
        %1754 = vmatpush2.msra.mxu0 0.0
        %1755 = vmatprep.mubr.f32.mxu0 0.0
        %1756 = vmatmul.mubr.f32.gmra.mxu0 %v1298
        %v1757 = vpop.f32.mrf.mxu0
        %v1758 = vadd.f32 0.0, %v1757
        %v1759 = vpop.f32.mrf.mxu0
        %v1760 = vadd.f32 0.0, %v1759
        %1761 = vdwg.mxu0
        %v1762 = vstv %s1335
        %v1763 = vadd.f32 %v1545, %v1687
        %v1764 = vadd.f32 %v1547, %v1689
        %v1765 = vadd.f32 %v1616, %v1758
        %v1766 = vadd.f32 %v1618, %v1760
        %v1767 = vadd.f32 %v1763, %v1252
        %v1768 = vadd.f32 %v1764, %v1256
        %v1769 = vadd.f32 %v1765, %v1260
        %v1770 = vadd.f32 %v1766, %v1264
        %v1771 = vxor.u32 %v1767, 2147483648
        %v1772 = vmul.f32 %v1771, 1.442695
        %v1773 = vpow.pop %v1772
        %v1774 = vadd.f32 %v1773, 1.0
        %v1775 = vrcp.pop %v1774
        %v1776 = vmul.f32 1.0, %v1775
        %v1777 = vxor.u32 %v1768, 2147483648
        %v1778 = vmul.f32 %v1777, 1.442695
        %v1779 = vpow.pop %v1778
        %v1780 = vadd.f32 %v1779, 1.0
        %v1781 = vrcp.pop %v1780
        %v1782 = vmul.f32 1.0, %v1781
        %v1783 = vtanh.pop %v1769
        %v1784 = vxor.u32 %v1770, 2147483648
        %v1785 = vmul.f32 %v1784, 1.442695
        %v1786 = vpow.pop %v1785
        %v1787 = vadd.f32 %v1786, 1.0
        %v1788 = vrcp.pop %v1787
        %v1789 = vmul.f32 1.0, %v1788
        %v1790 = vmul.f32 %v1782, %v1299
        %v1791 = vmul.f32 %v1776, %v1783
        %v1792 = vadd.f32 %v1790, %v1791
        %v1793 = vtanh.pop %v1792
        %v1794 = vmul.f32 %v1789, %v1793
        %vm1795 = vcmp.ge.s32.totalorder %v1762, 1
        %v1796 = vsel %vm1795, %v1794, %v1298
        %v1797 = vsel %vm1795, %v1792, %v1299
        %s1798 = smul.u32 1, 4
        %s1799 = smul.addr %s1798, 8
        %s1800 = scalar_lea.vmem [#allocation2], %s1799
        %v1801 = vld [vmem:[%s1800] sm:$0xff]
        %v1802 = vld [vmem:[%s1800 + $0x8] sm:$0xff]
        %v1803 = vld [vmem:[%s1800 + $0x10] sm:$0xff]
        %v1804 = vld [vmem:[%s1800 + $0x18] sm:$0xff]
        %v1805 = vadd.f32 %v1801, %v1403
        %v1806 = vadd.f32 %v1802, %v1405
        %v1807 = vadd.f32 %v1803, %v1474
        %v1808 = vadd.f32 %v1804, %v1476
        %v1809 = vxor.u32 %v1805, 2147483648
        %v1810 = vmul.f32 %v1809, 1.442695
        %v1811 = vpow.pop %v1810
        %v1812 = vadd.f32 %v1811, 1.0
        %v1813 = vrcp.pop %v1812
        %v1814 = vmul.f32 1.0, %v1813
        %v1815 = vxor.u32 %v1806, 2147483648
        %v1816 = vmul.f32 %v1815, 1.442695
        %v1817 = vpow.pop %v1816
        %v1818 = vadd.f32 %v1817, 1.0
        %v1819 = vrcp.pop %v1818
        %v1820 = vmul.f32 1.0, %v1819
        %v1821 = vtanh.pop %v1807
        %v1822 = vxor.u32 %v1808, 2147483648
        %v1823 = vmul.f32 %v1822, 1.442695
        %v1824 = vpow.pop %v1823
        %v1825 = vadd.f32 %v1824, 1.0
        %v1826 = vrcp.pop %v1825
        %v1827 = vmul.f32 1.0, %v1826
        %v1828 = vmul.f32 %v1820, %v1332
        %v1829 = vmul.f32 %v1814, %v1821
        %v1830 = vadd.f32 %v1828, %v1829
        %v1831 = vtanh.pop %v1830
        %v1832 = vmul.f32 %v1827, %v1831
        %s1833 = sadd.s32 %s620, 2
        %1834 = vmatprep.subr.mxu0 %v746
        %1835 = vmatpush1.msra.mxu0 %v745
        %1836 = vmatprep.subr.mxu0 %v738
        %1837 = vmatpush1.msra.mxu0 %v737
        %1838 = vmatprep.subr.mxu0 %v730
        %1839 = vmatpush1.msra.mxu0 %v729
        %1840 = vmatprep.subr.mxu0 %v722
        %1841 = vmatpush1.msra.mxu0 %v721
        %1842 = vmatprep.subr.mxu0 %v714
        %1843 = vmatpush1.msra.mxu0 %v713
        %1844 = vmatprep.subr.mxu0 %v706
        %1845 = vmatpush1.msra.mxu0 %v705
        %1846 = vmatprep.subr.mxu0 %v698
        %1847 = vmatpush1.msra.mxu0 %v697
        %1848 = vmatprep.subr.mxu0 %v690
        %1849 = vmatpush1.msra.mxu0 %v689
        %1850 = vmatprep.subr.mxu0 %v682
        %1851 = vmatpush1.msra.mxu0 %v681
        %1852 = vmatprep.subr.mxu0 %v674
        %1853 = vmatpush1.msra.mxu0 %v673
        %1854 = vmatprep.subr.mxu0 %v666
        %1855 = vmatpush1.msra.mxu0 %v665
        %1856 = vmatprep.subr.mxu0 %v658
        %1857 = vmatpush1.msra.mxu0 %v657
        %1858 = vmatprep.subr.mxu0 %v650
        %1859 = vmatpush1.msra.mxu0 %v649
        %1860 = vmatprep.subr.mxu0 %v642
        %1861 = vmatpush1.msra.mxu0 %v641
        %1862 = vmatprep.subr.mxu0 %v634
        %1863 = vmatpush1.msra.mxu0 %v633
        %1864 = vmatprep.subr.mxu0 %v626
        %1865 = vmatpush1.msra.mxu0 %v625
        %1866 = vmatprep.subr.mxu0 0.0
        %1867 = vmatpush2.msra.mxu0 0.0
        %1868 = vmatprep.subr.mxu0 0.0
        %1869 = vmatpush2.msra.mxu0 0.0
        %1870 = vmatprep.subr.mxu0 0.0
        %1871 = vmatpush2.msra.mxu0 0.0
        %1872 = vmatprep.subr.mxu0 0.0
        %1873 = vmatpush2.msra.mxu0 0.0
        %1874 = vmatprep.subr.mxu0 0.0
        %1875 = vmatpush2.msra.mxu0 0.0
        %1876 = vmatprep.subr.mxu0 0.0
        %1877 = vmatpush2.msra.mxu0 0.0
        %1878 = vmatprep.subr.mxu0 0.0
        %1879 = vmatpush2.msra.mxu0 0.0
        %1880 = vmatprep.subr.mxu0 0.0
        %1881 = vmatpush2.msra.mxu0 0.0
        %1882 = vmatprep.subr.mxu0 0.0
        %1883 = vmatpush2.msra.mxu0 0.0
        %1884 = vmatprep.subr.mxu0 0.0
        %1885 = vmatpush2.msra.mxu0 0.0
        %1886 = vmatprep.subr.mxu0 0.0
        %1887 = vmatpush2.msra.mxu0 0.0
        %1888 = vmatprep.subr.mxu0 0.0
        %1889 = vmatpush2.msra.mxu0 0.0
        %1890 = vmatprep.subr.mxu0 0.0
        %1891 = vmatpush2.msra.mxu0 0.0
        %1892 = vmatprep.subr.mxu0 0.0
        %1893 = vmatpush2.msra.mxu0 0.0
        %1894 = vmatprep.subr.mxu0 0.0
        %1895 = vmatpush2.msra.mxu0 0.0
        %1896 = vmatprep.subr.mxu0 0.0
        %1897 = vmatpush2.msra.mxu0 0.0
        %1898 = vmatprep.mubr.f32.mxu0 0.0
        %1899 = vmatmul.mubr.f32.gmra.mxu0 %v1832
        %v1900 = vpop.f32.mrf.mxu0
        %v1901 = vadd.f32 0.0, %v1900
        %v1902 = vpop.f32.mrf.mxu0
        %v1903 = vadd.f32 0.0, %v1902
        %1904 = vdwg.mxu0
        %1905 = vmatprep.subr.mxu0 %v748
        %1906 = vmatpush1.msra.mxu0 %v747
        %1907 = vmatprep.subr.mxu0 %v740
        %1908 = vmatpush1.msra.mxu0 %v739
        %1909 = vmatprep.subr.mxu0 %v732
        %1910 = vmatpush1.msra.mxu0 %v731
        %1911 = vmatprep.subr.mxu0 %v724
        %1912 = vmatpush1.msra.mxu0 %v723
        %1913 = vmatprep.subr.mxu0 %v716
        %1914 = vmatpush1.msra.mxu0 %v715
        %1915 = vmatprep.subr.mxu0 %v708
        %1916 = vmatpush1.msra.mxu0 %v707
        %1917 = vmatprep.subr.mxu0 %v700
        %1918 = vmatpush1.msra.mxu0 %v699
        %1919 = vmatprep.subr.mxu0 %v692
        %1920 = vmatpush1.msra.mxu0 %v691
        %1921 = vmatprep.subr.mxu0 %v684
        %1922 = vmatpush1.msra.mxu0 %v683
        %1923 = vmatprep.subr.mxu0 %v676
        %1924 = vmatpush1.msra.mxu0 %v675
        %1925 = vmatprep.subr.mxu0 %v668
        %1926 = vmatpush1.msra.mxu0 %v667
        %1927 = vmatprep.subr.mxu0 %v660
        %1928 = vmatpush1.msra.mxu0 %v659
        %1929 = vmatprep.subr.mxu0 %v652
        %1930 = vmatpush1.msra.mxu0 %v651
        %1931 = vmatprep.subr.mxu0 %v644
        %1932 = vmatpush1.msra.mxu0 %v643
        %1933 = vmatprep.subr.mxu0 %v636
        %1934 = vmatpush1.msra.mxu0 %v635
        %1935 = vmatprep.subr.mxu0 %v628
        %1936 = vmatpush1.msra.mxu0 %v627
        %1937 = vmatprep.subr.mxu0 0.0
        %1938 = vmatpush2.msra.mxu0 0.0
        %1939 = vmatprep.subr.mxu0 0.0
        %1940 = vmatpush2.msra.mxu0 0.0
        %1941 = vmatprep.subr.mxu0 0.0
        %1942 = vmatpush2.msra.mxu0 0.0
        %1943 = vmatprep.subr.mxu0 0.0
        %1944 = vmatpush2.msra.mxu0 0.0
        %1945 = vmatprep.subr.mxu0 0.0
        %1946 = vmatpush2.msra.mxu0 0.0
        %1947 = vmatprep.subr.mxu0 0.0
        %1948 = vmatpush2.msra.mxu0 0.0
        %1949 = vmatprep.subr.mxu0 0.0
        %1950 = vmatpush2.msra.mxu0 0.0
        %1951 = vmatprep.subr.mxu0 0.0
        %1952 = vmatpush2.msra.mxu0 0.0
        %1953 = vmatprep.subr.mxu0 0.0
        %1954 = vmatpush2.msra.mxu0 0.0
        %1955 = vmatprep.subr.mxu0 0.0
        %1956 = vmatpush2.msra.mxu0 0.0
        %1957 = vmatprep.subr.mxu0 0.0
        %1958 = vmatpush2.msra.mxu0 0.0
        %1959 = vmatprep.subr.mxu0 0.0
        %1960 = vmatpush2.msra.mxu0 0.0
        %1961 = vmatprep.subr.mxu0 0.0
        %1962 = vmatpush2.msra.mxu0 0.0
        %1963 = vmatprep.subr.mxu0 0.0
        %1964 = vmatpush2.msra.mxu0 0.0
        %1965 = vmatprep.subr.mxu0 0.0
        %1966 = vmatpush2.msra.mxu0 0.0
        %1967 = vmatprep.subr.mxu0 0.0
        %1968 = vmatpush2.msra.mxu0 0.0
        %1969 = vmatprep.mubr.f32.mxu0 0.0
        %1970 = vmatmul.mubr.f32.gmra.mxu0 %v1832
        %v1971 = vpop.f32.mrf.mxu0
        %v1972 = vadd.f32 0.0, %v1971
        %v1973 = vpop.f32.mrf.mxu0
        %v1974 = vadd.f32 0.0, %v1973
        %1975 = vdwg.mxu0
        %1976 = vmatprep.subr.mxu0 %v750
        %1977 = vmatpush1.msra.mxu0 %v749
        %1978 = vmatprep.subr.mxu0 %v742
        %1979 = vmatpush1.msra.mxu0 %v741
        %1980 = vmatprep.subr.mxu0 %v734
        %1981 = vmatpush1.msra.mxu0 %v733
        %1982 = vmatprep.subr.mxu0 %v726
        %1983 = vmatpush1.msra.mxu0 %v725
        %1984 = vmatprep.subr.mxu0 %v718
        %1985 = vmatpush1.msra.mxu0 %v717
        %1986 = vmatprep.subr.mxu0 %v710
        %1987 = vmatpush1.msra.mxu0 %v709
        %1988 = vmatprep.subr.mxu0 %v702
        %1989 = vmatpush1.msra.mxu0 %v701
        %1990 = vmatprep.subr.mxu0 %v694
        %1991 = vmatpush1.msra.mxu0 %v693
        %1992 = vmatprep.subr.mxu0 %v686
        %1993 = vmatpush1.msra.mxu0 %v685
        %1994 = vmatprep.subr.mxu0 %v678
        %1995 = vmatpush1.msra.mxu0 %v677
        %1996 = vmatprep.subr.mxu0 %v670
        %1997 = vmatpush1.msra.mxu0 %v669
        %1998 = vmatprep.subr.mxu0 %v662
        %1999 = vmatpush1.msra.mxu0 %v661
        %2000 = vmatprep.subr.mxu0 %v654
        %2001 = vmatpush1.msra.mxu0 %v653
        %2002 = vmatprep.subr.mxu0 %v646
        %2003 = vmatpush1.msra.mxu0 %v645
        %2004 = vmatprep.subr.mxu0 %v638
        %2005 = vmatpush1.msra.mxu0 %v637
        %2006 = vmatprep.subr.mxu0 %v630
        %2007 = vmatpush1.msra.mxu0 %v629
        %2008 = vmatprep.subr.mxu0 0.0
        %2009 = vmatpush2.msra.mxu0 0.0
        %2010 = vmatprep.subr.mxu0 0.0
        %2011 = vmatpush2.msra.mxu0 0.0
        %2012 = vmatprep.subr.mxu0 0.0
        %2013 = vmatpush2.msra.mxu0 0.0
        %2014 = vmatprep.subr.mxu0 0.0
        %2015 = vmatpush2.msra.mxu0 0.0
        %2016 = vmatprep.subr.mxu0 0.0
        %2017 = vmatpush2.msra.mxu0 0.0
        %2018 = vmatprep.subr.mxu0 0.0
        %2019 = vmatpush2.msra.mxu0 0.0
        %2020 = vmatprep.subr.mxu0 0.0
        %2021 = vmatpush2.msra.mxu0 0.0
        %2022 = vmatprep.subr.mxu0 0.0
        %2023 = vmatpush2.msra.mxu0 0.0
        %2024 = vmatprep.subr.mxu0 0.0
        %2025 = vmatpush2.msra.mxu0 0.0
        %2026 = vmatprep.subr.mxu0 0.0
        %2027 = vmatpush2.msra.mxu0 0.0
        %2028 = vmatprep.subr.mxu0 0.0
        %2029 = vmatpush2.msra.mxu0 0.0
        %2030 = vmatprep.subr.mxu0 0.0
        %2031 = vmatpush2.msra.mxu0 0.0
        %2032 = vmatprep.subr.mxu0 0.0
        %2033 = vmatpush2.msra.mxu0 0.0
        %2034 = vmatprep.subr.mxu0 0.0
        %2035 = vmatpush2.msra.mxu0 0.0
        %2036 = vmatprep.subr.mxu0 0.0
        %2037 = vmatpush2.msra.mxu0 0.0
        %2038 = vmatprep.subr.mxu0 0.0
        %2039 = vmatpush2.msra.mxu0 0.0
        %2040 = vmatprep.mubr.f32.mxu0 0.0
        %2041 = vmatmul.mubr.f32.gmra.mxu0 %v1832
        %v2042 = vpop.f32.mrf.mxu0
        %v2043 = vadd.f32 0.0, %v2042
        %v2044 = vpop.f32.mrf.mxu0
        %v2045 = vadd.f32 0.0, %v2044
        %2046 = vdwg.mxu0
        %2047 = vmatprep.subr.mxu0 %v752
        %2048 = vmatpush1.msra.mxu0 %v751
        %2049 = vmatprep.subr.mxu0 %v744
        %2050 = vmatpush1.msra.mxu0 %v743
        %2051 = vmatprep.subr.mxu0 %v736
        %2052 = vmatpush1.msra.mxu0 %v735
        %2053 = vmatprep.subr.mxu0 %v728
        %2054 = vmatpush1.msra.mxu0 %v727
        %2055 = vmatprep.subr.mxu0 %v720
        %2056 = vmatpush1.msra.mxu0 %v719
        %2057 = vmatprep.subr.mxu0 %v712
        %2058 = vmatpush1.msra.mxu0 %v711
        %2059 = vmatprep.subr.mxu0 %v704
        %2060 = vmatpush1.msra.mxu0 %v703
        %2061 = vmatprep.subr.mxu0 %v696
        %2062 = vmatpush1.msra.mxu0 %v695
        %2063 = vmatprep.subr.mxu0 %v688
        %2064 = vmatpush1.msra.mxu0 %v687
        %2065 = vmatprep.subr.mxu0 %v680
        %2066 = vmatpush1.msra.mxu0 %v679
        %2067 = vmatprep.subr.mxu0 %v672
        %2068 = vmatpush1.msra.mxu0 %v671
        %2069 = vmatprep.subr.mxu0 %v664
        %2070 = vmatpush1.msra.mxu0 %v663
        %2071 = vmatprep.subr.mxu0 %v656
        %2072 = vmatpush1.msra.mxu0 %v655
        %2073 = vmatprep.subr.mxu0 %v648
        %2074 = vmatpush1.msra.mxu0 %v647
        %2075 = vmatprep.subr.mxu0 %v640
        %2076 = vmatpush1.msra.mxu0 %v639
        %2077 = vmatprep.subr.mxu0 %v632
        %2078 = vmatpush1.msra.mxu0 %v631
        %2079 = vmatprep.subr.mxu0 0.0
        %2080 = vmatpush2.msra.mxu0 0.0
        %2081 = vmatprep.subr.mxu0 0.0
        %2082 = vmatpush2.msra.mxu0 0.0
        %2083 = vmatprep.subr.mxu0 0.0
        %2084 = vmatpush2.msra.mxu0 0.0
        %2085 = vmatprep.subr.mxu0 0.0
        %2086 = vmatpush2.msra.mxu0 0.0
        %2087 = vmatprep.subr.mxu0 0.0
        %2088 = vmatpush2.msra.mxu0 0.0
        %2089 = vmatprep.subr.mxu0 0.0
        %2090 = vmatpush2.msra.mxu0 0.0
        %2091 = vmatprep.subr.mxu0 0.0
        %2092 = vmatpush2.msra.mxu0 0.0
        %2093 = vmatprep.subr.mxu0 0.0
        %2094 = vmatpush2.msra.mxu0 0.0
        %2095 = vmatprep.subr.mxu0 0.0
        %2096 = vmatpush2.msra.mxu0 0.0
        %2097 = vmatprep.subr.mxu0 0.0
        %2098 = vmatpush2.msra.mxu0 0.0
        %2099 = vmatprep.subr.mxu0 0.0
        %2100 = vmatpush2.msra.mxu0 0.0
        %2101 = vmatprep.subr.mxu0 0.0
        %2102 = vmatpush2.msra.mxu0 0.0
        %2103 = vmatprep.subr.mxu0 0.0
        %2104 = vmatpush2.msra.mxu0 0.0
        %2105 = vmatprep.subr.mxu0 0.0
        %2106 = vmatpush2.msra.mxu0 0.0
        %2107 = vmatprep.subr.mxu0 0.0
        %2108 = vmatpush2.msra.mxu0 0.0
        %2109 = vmatprep.subr.mxu0 0.0
        %2110 = vmatpush2.msra.mxu0 0.0
        %2111 = vmatprep.mubr.f32.mxu0 0.0
        %2112 = vmatmul.mubr.f32.gmra.mxu0 %v1832
        %v2113 = vpop.f32.mrf.mxu0
        %v2114 = vadd.f32 0.0, %v2113
        %v2115 = vpop.f32.mrf.mxu0
        %v2116 = vadd.f32 0.0, %v2115
        %2117 = vdwg.mxu0
        %2118 = vmatprep.subr.mxu0 %v1098
        %2119 = vmatpush1.msra.mxu0 %v1097
        %2120 = vmatprep.subr.mxu0 %v1094
        %2121 = vmatpush1.msra.mxu0 %v1093
        %2122 = vmatprep.subr.mxu0 %v1090
        %2123 = vmatpush1.msra.mxu0 %v1089
        %2124 = vmatprep.subr.mxu0 %v1086
        %2125 = vmatpush1.msra.mxu0 %v1085
        %2126 = vmatprep.subr.mxu0 %v1082
        %2127 = vmatpush1.msra.mxu0 %v1081
        %2128 = vmatprep.subr.mxu0 %v1078
        %2129 = vmatpush1.msra.mxu0 %v1077
        %2130 = vmatprep.subr.mxu0 %v1074
        %2131 = vmatpush1.msra.mxu0 %v1073
        %2132 = vmatprep.subr.mxu0 %v1070
        %2133 = vmatpush1.msra.mxu0 %v1069
        %2134 = vmatprep.subr.mxu0 %v1066
        %2135 = vmatpush1.msra.mxu0 %v1065
        %2136 = vmatprep.subr.mxu0 %v1062
        %2137 = vmatpush1.msra.mxu0 %v1061
        %2138 = vmatprep.subr.mxu0 %v1058
        %2139 = vmatpush1.msra.mxu0 %v1057
        %2140 = vmatprep.subr.mxu0 %v1054
        %2141 = vmatpush1.msra.mxu0 %v1053
        %2142 = vmatprep.subr.mxu0 %v1050
        %2143 = vmatpush1.msra.mxu0 %v1049
        %2144 = vmatprep.subr.mxu0 %v1046
        %2145 = vmatpush1.msra.mxu0 %v1045
        %2146 = vmatprep.subr.mxu0 %v1042
        %2147 = vmatpush1.msra.mxu0 %v1041
        %2148 = vmatprep.subr.mxu0 %v1038
        %2149 = vmatpush1.msra.mxu0 %v1037
        %2150 = vmatprep.subr.mxu0 0.0
        %2151 = vmatpush2.msra.mxu0 0.0
        %2152 = vmatprep.subr.mxu0 0.0
        %2153 = vmatpush2.msra.mxu0 0.0
        %2154 = vmatprep.subr.mxu0 0.0
        %2155 = vmatpush2.msra.mxu0 0.0
        %2156 = vmatprep.subr.mxu0 0.0
        %2157 = vmatpush2.msra.mxu0 0.0
        %2158 = vmatprep.subr.mxu0 0.0
        %2159 = vmatpush2.msra.mxu0 0.0
        %2160 = vmatprep.subr.mxu0 0.0
        %2161 = vmatpush2.msra.mxu0 0.0
        %2162 = vmatprep.subr.mxu0 0.0
        %2163 = vmatpush2.msra.mxu0 0.0
        %2164 = vmatprep.subr.mxu0 0.0
        %2165 = vmatpush2.msra.mxu0 0.0
        %2166 = vmatprep.subr.mxu0 0.0
        %2167 = vmatpush2.msra.mxu0 0.0
        %2168 = vmatprep.subr.mxu0 0.0
        %2169 = vmatpush2.msra.mxu0 0.0
        %2170 = vmatprep.subr.mxu0 0.0
        %2171 = vmatpush2.msra.mxu0 0.0
        %2172 = vmatprep.subr.mxu0 0.0
        %2173 = vmatpush2.msra.mxu0 0.0
        %2174 = vmatprep.subr.mxu0 0.0
        %2175 = vmatpush2.msra.mxu0 0.0
        %2176 = vmatprep.subr.mxu0 0.0
        %2177 = vmatpush2.msra.mxu0 0.0
        %2178 = vmatprep.subr.mxu0 0.0
        %2179 = vmatpush2.msra.mxu0 0.0
        %2180 = vmatprep.subr.mxu0 0.0
        %2181 = vmatpush2.msra.mxu0 0.0
        %2182 = vmatprep.mubr.f32.mxu0 0.0
        %2183 = vmatmul.mubr.f32.gmra.mxu0 %v1796
        %v2184 = vpop.f32.mrf.mxu0
        %v2185 = vadd.f32 0.0, %v2184
        %v2186 = vpop.f32.mrf.mxu0
        %v2187 = vadd.f32 0.0, %v2186
        %2188 = vdwg.mxu0
        %2189 = vmatprep.subr.mxu0 %v1100
        %2190 = vmatpush1.msra.mxu0 %v1099
        %2191 = vmatprep.subr.mxu0 %v1096
        %2192 = vmatpush1.msra.mxu0 %v1095
        %2193 = vmatprep.subr.mxu0 %v1092
        %2194 = vmatpush1.msra.mxu0 %v1091
        %2195 = vmatprep.subr.mxu0 %v1088
        %2196 = vmatpush1.msra.mxu0 %v1087
        %2197 = vmatprep.subr.mxu0 %v1084
        %2198 = vmatpush1.msra.mxu0 %v1083
        %2199 = vmatprep.subr.mxu0 %v1080
        %2200 = vmatpush1.msra.mxu0 %v1079
        %2201 = vmatprep.subr.mxu0 %v1076
        %2202 = vmatpush1.msra.mxu0 %v1075
        %2203 = vmatprep.subr.mxu0 %v1072
        %2204 = vmatpush1.msra.mxu0 %v1071
        %2205 = vmatprep.subr.mxu0 %v1068
        %2206 = vmatpush1.msra.mxu0 %v1067
        %2207 = vmatprep.subr.mxu0 %v1064
        %2208 = vmatpush1.msra.mxu0 %v1063
        %2209 = vmatprep.subr.mxu0 %v1060
        %2210 = vmatpush1.msra.mxu0 %v1059
        %2211 = vmatprep.subr.mxu0 %v1056
        %2212 = vmatpush1.msra.mxu0 %v1055
        %2213 = vmatprep.subr.mxu0 %v1052
        %2214 = vmatpush1.msra.mxu0 %v1051
        %2215 = vmatprep.subr.mxu0 %v1048
        %2216 = vmatpush1.msra.mxu0 %v1047
        %2217 = vmatprep.subr.mxu0 %v1044
        %2218 = vmatpush1.msra.mxu0 %v1043
        %2219 = vmatprep.subr.mxu0 %v1040
        %2220 = vmatpush1.msra.mxu0 %v1039
        %2221 = vmatprep.subr.mxu0 0.0
        %2222 = vmatpush2.msra.mxu0 0.0
        %2223 = vmatprep.subr.mxu0 0.0
        %2224 = vmatpush2.msra.mxu0 0.0
        %2225 = vmatprep.subr.mxu0 0.0
        %2226 = vmatpush2.msra.mxu0 0.0
        %2227 = vmatprep.subr.mxu0 0.0
        %2228 = vmatpush2.msra.mxu0 0.0
        %2229 = vmatprep.subr.mxu0 0.0
        %2230 = vmatpush2.msra.mxu0 0.0
        %2231 = vmatprep.subr.mxu0 0.0
        %2232 = vmatpush2.msra.mxu0 0.0
        %2233 = vmatprep.subr.mxu0 0.0
        %2234 = vmatpush2.msra.mxu0 0.0
        %2235 = vmatprep.subr.mxu0 0.0
        %2236 = vmatpush2.msra.mxu0 0.0
        %2237 = vmatprep.subr.mxu0 0.0
        %2238 = vmatpush2.msra.mxu0 0.0
        %2239 = vmatprep.subr.mxu0 0.0
        %2240 = vmatpush2.msra.mxu0 0.0
        %2241 = vmatprep.subr.mxu0 0.0
        %2242 = vmatpush2.msra.mxu0 0.0
        %2243 = vmatprep.subr.mxu0 0.0
        %2244 = vmatpush2.msra.mxu0 0.0
        %2245 = vmatprep.subr.mxu0 0.0
        %2246 = vmatpush2.msra.mxu0 0.0
        %2247 = vmatprep.subr.mxu0 0.0
        %2248 = vmatpush2.msra.mxu0 0.0
        %2249 = vmatprep.subr.mxu0 0.0
        %2250 = vmatpush2.msra.mxu0 0.0
        %2251 = vmatprep.subr.mxu0 0.0
        %2252 = vmatpush2.msra.mxu0 0.0
        %2253 = vmatprep.mubr.f32.mxu0 0.0
        %2254 = vmatmul.mubr.f32.gmra.mxu0 %v1796
        %v2255 = vpop.f32.mrf.mxu0
        %v2256 = vadd.f32 0.0, %v2255
        %v2257 = vpop.f32.mrf.mxu0
        %v2258 = vadd.f32 0.0, %v2257
        %2259 = vdwg.mxu0
        %v2260 = vstv %s1833
        %v2261 = vadd.f32 %v2043, %v2185
        %v2262 = vadd.f32 %v2045, %v2187
        %v2263 = vadd.f32 %v2114, %v2256
        %v2264 = vadd.f32 %v2116, %v2258
        %v2265 = vadd.f32 %v2261, %v1252
        %v2266 = vadd.f32 %v2262, %v1256
        %v2267 = vadd.f32 %v2263, %v1260
        %v2268 = vadd.f32 %v2264, %v1264
        %v2269 = vxor.u32 %v2265, 2147483648
        %v2270 = vmul.f32 %v2269, 1.442695
        %v2271 = vpow.pop %v2270
        %v2272 = vadd.f32 %v2271, 1.0
        %v2273 = vrcp.pop %v2272
        %v2274 = vmul.f32 1.0, %v2273
        %v2275 = vxor.u32 %v2266, 2147483648
        %v2276 = vmul.f32 %v2275, 1.442695
        %v2277 = vpow.pop %v2276
        %v2278 = vadd.f32 %v2277, 1.0
        %v2279 = vrcp.pop %v2278
        %v2280 = vmul.f32 1.0, %v2279
        %v2281 = vtanh.pop %v2267
        %v2282 = vxor.u32 %v2268, 2147483648
        %v2283 = vmul.f32 %v2282, 1.442695
        %v2284 = vpow.pop %v2283
        %v2285 = vadd.f32 %v2284, 1.0
        %v2286 = vrcp.pop %v2285
        %v2287 = vmul.f32 1.0, %v2286
        %v2288 = vmul.f32 %v2280, %v1797
        %v2289 = vmul.f32 %v2274, %v2281
        %v2290 = vadd.f32 %v2288, %v2289
        %v2291 = vtanh.pop %v2290
        %v2292 = vmul.f32 %v2287, %v2291
        %vm2293 = vcmp.ge.s32.totalorder %v2260, 1
        %v2294 = vsel %vm2293, %v2292, %v1796
        %v2295 = vsel %vm2293, %v2290, %v1797
        %s2296 = smul.u32 2, 4
        %s2297 = smul.addr %s2296, 8
        %s2298 = scalar_lea.vmem [#allocation2], %s2297
        %v2299 = vld [vmem:[%s2298] sm:$0xff]
        %v2300 = vld [vmem:[%s2298 + $0x8] sm:$0xff]
        %v2301 = vld [vmem:[%s2298 + $0x10] sm:$0xff]
        %v2302 = vld [vmem:[%s2298 + $0x18] sm:$0xff]
        %v2303 = vadd.f32 %v2299, %v1901
        %v2304 = vadd.f32 %v2300, %v1903
        %v2305 = vadd.f32 %v2301, %v1972
        %v2306 = vadd.f32 %v2302, %v1974
        %v2307 = vxor.u32 %v2303, 2147483648
        %v2308 = vmul.f32 %v2307, 1.442695
        %v2309 = vpow.pop %v2308
        %v2310 = vadd.f32 %v2309, 1.0
        %v2311 = vrcp.pop %v2310
        %v2312 = vmul.f32 1.0, %v2311
        %v2313 = vxor.u32 %v2304, 2147483648
        %v2314 = vmul.f32 %v2313, 1.442695
        %v2315 = vpow.pop %v2314
        %v2316 = vadd.f32 %v2315, 1.0
        %v2317 = vrcp.pop %v2316
        %v2318 = vmul.f32 1.0, %v2317
        %v2319 = vtanh.pop %v2305
        %v2320 = vxor.u32 %v2306, 2147483648
        %v2321 = vmul.f32 %v2320, 1.442695
        %v2322 = vpow.pop %v2321
        %v2323 = vadd.f32 %v2322, 1.0
        %v2324 = vrcp.pop %v2323
        %v2325 = vmul.f32 1.0, %v2324
        %v2326 = vmul.f32 %v2318, %v1830
        %v2327 = vmul.f32 %v2312, %v2319
        %v2328 = vadd.f32 %v2326, %v2327
        %v2329 = vtanh.pop %v2328
        %v2330 = vmul.f32 %v2325, %v2329
        %s2331 = sadd.s32 %s620, 3
        %2332 = vmatprep.subr.mxu0 %v746
        %2333 = vmatpush1.msra.mxu0 %v745
        %2334 = vmatprep.subr.mxu0 %v738
        %2335 = vmatpush1.msra.mxu0 %v737
        %2336 = vmatprep.subr.mxu0 %v730
        %2337 = vmatpush1.msra.mxu0 %v729
        %2338 = vmatprep.subr.mxu0 %v722
        %2339 = vmatpush1.msra.mxu0 %v721
        %2340 = vmatprep.subr.mxu0 %v714
        %2341 = vmatpush1.msra.mxu0 %v713
        %2342 = vmatprep.subr.mxu0 %v706
        %2343 = vmatpush1.msra.mxu0 %v705
        %2344 = vmatprep.subr.mxu0 %v698
        %2345 = vmatpush1.msra.mxu0 %v697
        %2346 = vmatprep.subr.mxu0 %v690
        %2347 = vmatpush1.msra.mxu0 %v689
        %2348 = vmatprep.subr.mxu0 %v682
        %2349 = vmatpush1.msra.mxu0 %v681
        %2350 = vmatprep.subr.mxu0 %v674
        %2351 = vmatpush1.msra.mxu0 %v673
        %2352 = vmatprep.subr.mxu0 %v666
        %2353 = vmatpush1.msra.mxu0 %v665
        %2354 = vmatprep.subr.mxu0 %v658
        %2355 = vmatpush1.msra.mxu0 %v657
        %2356 = vmatprep.subr.mxu0 %v650
        %2357 = vmatpush1.msra.mxu0 %v649
        %2358 = vmatprep.subr.mxu0 %v642
        %2359 = vmatpush1.msra.mxu0 %v641
        %2360 = vmatprep.subr.mxu0 %v634
        %2361 = vmatpush1.msra.mxu0 %v633
        %2362 = vmatprep.subr.mxu0 %v626
        %2363 = vmatpush1.msra.mxu0 %v625
        %2364 = vmatprep.subr.mxu0 0.0
        %2365 = vmatpush2.msra.mxu0 0.0
        %2366 = vmatprep.subr.mxu0 0.0
        %2367 = vmatpush2.msra.mxu0 0.0
        %2368 = vmatprep.subr.mxu0 0.0
        %2369 = vmatpush2.msra.mxu0 0.0
        %2370 = vmatprep.subr.mxu0 0.0
        %2371 = vmatpush2.msra.mxu0 0.0
        %2372 = vmatprep.subr.mxu0 0.0
        %2373 = vmatpush2.msra.mxu0 0.0
        %2374 = vmatprep.subr.mxu0 0.0
        %2375 = vmatpush2.msra.mxu0 0.0
        %2376 = vmatprep.subr.mxu0 0.0
        %2377 = vmatpush2.msra.mxu0 0.0
        %2378 = vmatprep.subr.mxu0 0.0
        %2379 = vmatpush2.msra.mxu0 0.0
        %2380 = vmatprep.subr.mxu0 0.0
        %2381 = vmatpush2.msra.mxu0 0.0
        %2382 = vmatprep.subr.mxu0 0.0
        %2383 = vmatpush2.msra.mxu0 0.0
        %2384 = vmatprep.subr.mxu0 0.0
        %2385 = vmatpush2.msra.mxu0 0.0
        %2386 = vmatprep.subr.mxu0 0.0
        %2387 = vmatpush2.msra.mxu0 0.0
        %2388 = vmatprep.subr.mxu0 0.0
        %2389 = vmatpush2.msra.mxu0 0.0
        %2390 = vmatprep.subr.mxu0 0.0
        %2391 = vmatpush2.msra.mxu0 0.0
        %2392 = vmatprep.subr.mxu0 0.0
        %2393 = vmatpush2.msra.mxu0 0.0
        %2394 = vmatprep.subr.mxu0 0.0
        %2395 = vmatpush2.msra.mxu0 0.0
        %2396 = vmatprep.mubr.f32.mxu0 0.0
        %2397 = vmatmul.mubr.f32.gmra.mxu0 %v2330
        %v2398 = vpop.f32.mrf.mxu0
        %v2399 = vadd.f32 0.0, %v2398
        %v2400 = vpop.f32.mrf.mxu0
        %v2401 = vadd.f32 0.0, %v2400
        %2402 = vdwg.mxu0
        %2403 = vmatprep.subr.mxu0 %v748
        %2404 = vmatpush1.msra.mxu0 %v747
        %2405 = vmatprep.subr.mxu0 %v740
        %2406 = vmatpush1.msra.mxu0 %v739
        %2407 = vmatprep.subr.mxu0 %v732
        %2408 = vmatpush1.msra.mxu0 %v731
        %2409 = vmatprep.subr.mxu0 %v724
        %2410 = vmatpush1.msra.mxu0 %v723
        %2411 = vmatprep.subr.mxu0 %v716
        %2412 = vmatpush1.msra.mxu0 %v715
        %2413 = vmatprep.subr.mxu0 %v708
        %2414 = vmatpush1.msra.mxu0 %v707
        %2415 = vmatprep.subr.mxu0 %v700
        %2416 = vmatpush1.msra.mxu0 %v699
        %2417 = vmatprep.subr.mxu0 %v692
        %2418 = vmatpush1.msra.mxu0 %v691
        %2419 = vmatprep.subr.mxu0 %v684
        %2420 = vmatpush1.msra.mxu0 %v683
        %2421 = vmatprep.subr.mxu0 %v676
        %2422 = vmatpush1.msra.mxu0 %v675
        %2423 = vmatprep.subr.mxu0 %v668
        %2424 = vmatpush1.msra.mxu0 %v667
        %2425 = vmatprep.subr.mxu0 %v660
        %2426 = vmatpush1.msra.mxu0 %v659
        %2427 = vmatprep.subr.mxu0 %v652
        %2428 = vmatpush1.msra.mxu0 %v651
        %2429 = vmatprep.subr.mxu0 %v644
        %2430 = vmatpush1.msra.mxu0 %v643
        %2431 = vmatprep.subr.mxu0 %v636
        %2432 = vmatpush1.msra.mxu0 %v635
        %2433 = vmatprep.subr.mxu0 %v628
        %2434 = vmatpush1.msra.mxu0 %v627
        %2435 = vmatprep.subr.mxu0 0.0
        %2436 = vmatpush2.msra.mxu0 0.0
        %2437 = vmatprep.subr.mxu0 0.0
        %2438 = vmatpush2.msra.mxu0 0.0
        %2439 = vmatprep.subr.mxu0 0.0
        %2440 = vmatpush2.msra.mxu0 0.0
        %2441 = vmatprep.subr.mxu0 0.0
        %2442 = vmatpush2.msra.mxu0 0.0
        %2443 = vmatprep.subr.mxu0 0.0
        %2444 = vmatpush2.msra.mxu0 0.0
        %2445 = vmatprep.subr.mxu0 0.0
        %2446 = vmatpush2.msra.mxu0 0.0
        %2447 = vmatprep.subr.mxu0 0.0
        %2448 = vmatpush2.msra.mxu0 0.0
        %2449 = vmatprep.subr.mxu0 0.0
        %2450 = vmatpush2.msra.mxu0 0.0
        %2451 = vmatprep.subr.mxu0 0.0
        %2452 = vmatpush2.msra.mxu0 0.0
        %2453 = vmatprep.subr.mxu0 0.0
        %2454 = vmatpush2.msra.mxu0 0.0
        %2455 = vmatprep.subr.mxu0 0.0
        %2456 = vmatpush2.msra.mxu0 0.0
        %2457 = vmatprep.subr.mxu0 0.0
        %2458 = vmatpush2.msra.mxu0 0.0
        %2459 = vmatprep.subr.mxu0 0.0
        %2460 = vmatpush2.msra.mxu0 0.0
        %2461 = vmatprep.subr.mxu0 0.0
        %2462 = vmatpush2.msra.mxu0 0.0
        %2463 = vmatprep.subr.mxu0 0.0
        %2464 = vmatpush2.msra.mxu0 0.0
        %2465 = vmatprep.subr.mxu0 0.0
        %2466 = vmatpush2.msra.mxu0 0.0
        %2467 = vmatprep.mubr.f32.mxu0 0.0
        %2468 = vmatmul.mubr.f32.gmra.mxu0 %v2330
        %v2469 = vpop.f32.mrf.mxu0
        %v2470 = vadd.f32 0.0, %v2469
        %v2471 = vpop.f32.mrf.mxu0
        %v2472 = vadd.f32 0.0, %v2471
        %2473 = vdwg.mxu0
        %2474 = vmatprep.subr.mxu0 %v750
        %2475 = vmatpush1.msra.mxu0 %v749
        %2476 = vmatprep.subr.mxu0 %v742
        %2477 = vmatpush1.msra.mxu0 %v741
        %2478 = vmatprep.subr.mxu0 %v734
        %2479 = vmatpush1.msra.mxu0 %v733
        %2480 = vmatprep.subr.mxu0 %v726
        %2481 = vmatpush1.msra.mxu0 %v725
        %2482 = vmatprep.subr.mxu0 %v718
        %2483 = vmatpush1.msra.mxu0 %v717
        %2484 = vmatprep.subr.mxu0 %v710
        %2485 = vmatpush1.msra.mxu0 %v709
        %2486 = vmatprep.subr.mxu0 %v702
        %2487 = vmatpush1.msra.mxu0 %v701
        %2488 = vmatprep.subr.mxu0 %v694
        %2489 = vmatpush1.msra.mxu0 %v693
        %2490 = vmatprep.subr.mxu0 %v686
        %2491 = vmatpush1.msra.mxu0 %v685
        %2492 = vmatprep.subr.mxu0 %v678
        %2493 = vmatpush1.msra.mxu0 %v677
        %2494 = vmatprep.subr.mxu0 %v670
        %2495 = vmatpush1.msra.mxu0 %v669
        %2496 = vmatprep.subr.mxu0 %v662
        %2497 = vmatpush1.msra.mxu0 %v661
        %2498 = vmatprep.subr.mxu0 %v654
        %2499 = vmatpush1.msra.mxu0 %v653
        %2500 = vmatprep.subr.mxu0 %v646
        %2501 = vmatpush1.msra.mxu0 %v645
        %2502 = vmatprep.subr.mxu0 %v638
        %2503 = vmatpush1.msra.mxu0 %v637
        %2504 = vmatprep.subr.mxu0 %v630
        %2505 = vmatpush1.msra.mxu0 %v629
        %2506 = vmatprep.subr.mxu0 0.0
        %2507 = vmatpush2.msra.mxu0 0.0
        %2508 = vmatprep.subr.mxu0 0.0
        %2509 = vmatpush2.msra.mxu0 0.0
        %2510 = vmatprep.subr.mxu0 0.0
        %2511 = vmatpush2.msra.mxu0 0.0
        %2512 = vmatprep.subr.mxu0 0.0
        %2513 = vmatpush2.msra.mxu0 0.0
        %2514 = vmatprep.subr.mxu0 0.0
        %2515 = vmatpush2.msra.mxu0 0.0
        %2516 = vmatprep.subr.mxu0 0.0
        %2517 = vmatpush2.msra.mxu0 0.0
        %2518 = vmatprep.subr.mxu0 0.0
        %2519 = vmatpush2.msra.mxu0 0.0
        %2520 = vmatprep.subr.mxu0 0.0
        %2521 = vmatpush2.msra.mxu0 0.0
        %2522 = vmatprep.subr.mxu0 0.0
        %2523 = vmatpush2.msra.mxu0 0.0
        %2524 = vmatprep.subr.mxu0 0.0
        %2525 = vmatpush2.msra.mxu0 0.0
        %2526 = vmatprep.subr.mxu0 0.0
        %2527 = vmatpush2.msra.mxu0 0.0
        %2528 = vmatprep.subr.mxu0 0.0
        %2529 = vmatpush2.msra.mxu0 0.0
        %2530 = vmatprep.subr.mxu0 0.0
        %2531 = vmatpush2.msra.mxu0 0.0
        %2532 = vmatprep.subr.mxu0 0.0
        %2533 = vmatpush2.msra.mxu0 0.0
        %2534 = vmatprep.subr.mxu0 0.0
        %2535 = vmatpush2.msra.mxu0 0.0
        %2536 = vmatprep.subr.mxu0 0.0
        %2537 = vmatpush2.msra.mxu0 0.0
        %2538 = vmatprep.mubr.f32.mxu0 0.0
        %2539 = vmatmul.mubr.f32.gmra.mxu0 %v2330
        %v2540 = vpop.f32.mrf.mxu0
        %v2541 = vadd.f32 0.0, %v2540
        %v2542 = vpop.f32.mrf.mxu0
        %v2543 = vadd.f32 0.0, %v2542
        %2544 = vdwg.mxu0
        %2545 = vmatprep.subr.mxu0 %v752
        %2546 = vmatpush1.msra.mxu0 %v751
        %2547 = vmatprep.subr.mxu0 %v744
        %2548 = vmatpush1.msra.mxu0 %v743
        %2549 = vmatprep.subr.mxu0 %v736
        %2550 = vmatpush1.msra.mxu0 %v735
        %2551 = vmatprep.subr.mxu0 %v728
        %2552 = vmatpush1.msra.mxu0 %v727
        %2553 = vmatprep.subr.mxu0 %v720
        %2554 = vmatpush1.msra.mxu0 %v719
        %2555 = vmatprep.subr.mxu0 %v712
        %2556 = vmatpush1.msra.mxu0 %v711
        %2557 = vmatprep.subr.mxu0 %v704
        %2558 = vmatpush1.msra.mxu0 %v703
        %2559 = vmatprep.subr.mxu0 %v696
        %2560 = vmatpush1.msra.mxu0 %v695
        %2561 = vmatprep.subr.mxu0 %v688
        %2562 = vmatpush1.msra.mxu0 %v687
        %2563 = vmatprep.subr.mxu0 %v680
        %2564 = vmatpush1.msra.mxu0 %v679
        %2565 = vmatprep.subr.mxu0 %v672
        %2566 = vmatpush1.msra.mxu0 %v671
        %2567 = vmatprep.subr.mxu0 %v664
        %2568 = vmatpush1.msra.mxu0 %v663
        %2569 = vmatprep.subr.mxu0 %v656
        %2570 = vmatpush1.msra.mxu0 %v655
        %2571 = vmatprep.subr.mxu0 %v648
        %2572 = vmatpush1.msra.mxu0 %v647
        %2573 = vmatprep.subr.mxu0 %v640
        %2574 = vmatpush1.msra.mxu0 %v639
        %2575 = vmatprep.subr.mxu0 %v632
        %2576 = vmatpush1.msra.mxu0 %v631
        %2577 = vmatprep.subr.mxu0 0.0
        %2578 = vmatpush2.msra.mxu0 0.0
        %2579 = vmatprep.subr.mxu0 0.0
        %2580 = vmatpush2.msra.mxu0 0.0
        %2581 = vmatprep.subr.mxu0 0.0
        %2582 = vmatpush2.msra.mxu0 0.0
        %2583 = vmatprep.subr.mxu0 0.0
        %2584 = vmatpush2.msra.mxu0 0.0
        %2585 = vmatprep.subr.mxu0 0.0
        %2586 = vmatpush2.msra.mxu0 0.0
        %2587 = vmatprep.subr.mxu0 0.0
        %2588 = vmatpush2.msra.mxu0 0.0
        %2589 = vmatprep.subr.mxu0 0.0
        %2590 = vmatpush2.msra.mxu0 0.0
        %2591 = vmatprep.subr.mxu0 0.0
        %2592 = vmatpush2.msra.mxu0 0.0
        %2593 = vmatprep.subr.mxu0 0.0
        %2594 = vmatpush2.msra.mxu0 0.0
        %2595 = vmatprep.subr.mxu0 0.0
        %2596 = vmatpush2.msra.mxu0 0.0
        %2597 = vmatprep.subr.mxu0 0.0
        %2598 = vmatpush2.msra.mxu0 0.0
        %2599 = vmatprep.subr.mxu0 0.0
        %2600 = vmatpush2.msra.mxu0 0.0
        %2601 = vmatprep.subr.mxu0 0.0
        %2602 = vmatpush2.msra.mxu0 0.0
        %2603 = vmatprep.subr.mxu0 0.0
        %2604 = vmatpush2.msra.mxu0 0.0
        %2605 = vmatprep.subr.mxu0 0.0
        %2606 = vmatpush2.msra.mxu0 0.0
        %2607 = vmatprep.subr.mxu0 0.0
        %2608 = vmatpush2.msra.mxu0 0.0
        %2609 = vmatprep.mubr.f32.mxu0 0.0
        %2610 = vmatmul.mubr.f32.gmra.mxu0 %v2330
        %v2611 = vpop.f32.mrf.mxu0
        %v2612 = vadd.f32 0.0, %v2611
        %v2613 = vpop.f32.mrf.mxu0
        %v2614 = vadd.f32 0.0, %v2613
        %2615 = vdwg.mxu0
        %2616 = vmatprep.subr.mxu0 %v1098
        %2617 = vmatpush1.msra.mxu0 %v1097
        %2618 = vmatprep.subr.mxu0 %v1094
        %2619 = vmatpush1.msra.mxu0 %v1093
        %2620 = vmatprep.subr.mxu0 %v1090
        %2621 = vmatpush1.msra.mxu0 %v1089
        %2622 = vmatprep.subr.mxu0 %v1086
        %2623 = vmatpush1.msra.mxu0 %v1085
        %2624 = vmatprep.subr.mxu0 %v1082
        %2625 = vmatpush1.msra.mxu0 %v1081
        %2626 = vmatprep.subr.mxu0 %v1078
        %2627 = vmatpush1.msra.mxu0 %v1077
        %2628 = vmatprep.subr.mxu0 %v1074
        %2629 = vmatpush1.msra.mxu0 %v1073
        %2630 = vmatprep.subr.mxu0 %v1070
        %2631 = vmatpush1.msra.mxu0 %v1069
        %2632 = vmatprep.subr.mxu0 %v1066
        %2633 = vmatpush1.msra.mxu0 %v1065
        %2634 = vmatprep.subr.mxu0 %v1062
        %2635 = vmatpush1.msra.mxu0 %v1061
        %2636 = vmatprep.subr.mxu0 %v1058
        %2637 = vmatpush1.msra.mxu0 %v1057
        %2638 = vmatprep.subr.mxu0 %v1054
        %2639 = vmatpush1.msra.mxu0 %v1053
        %2640 = vmatprep.subr.mxu0 %v1050
        %2641 = vmatpush1.msra.mxu0 %v1049
        %2642 = vmatprep.subr.mxu0 %v1046
        %2643 = vmatpush1.msra.mxu0 %v1045
        %2644 = vmatprep.subr.mxu0 %v1042
        %2645 = vmatpush1.msra.mxu0 %v1041
        %2646 = vmatprep.subr.mxu0 %v1038
        %2647 = vmatpush1.msra.mxu0 %v1037
        %2648 = vmatprep.subr.mxu0 0.0
        %2649 = vmatpush2.msra.mxu0 0.0
        %2650 = vmatprep.subr.mxu0 0.0
        %2651 = vmatpush2.msra.mxu0 0.0
        %2652 = vmatprep.subr.mxu0 0.0
        %2653 = vmatpush2.msra.mxu0 0.0
        %2654 = vmatprep.subr.mxu0 0.0
        %2655 = vmatpush2.msra.mxu0 0.0
        %2656 = vmatprep.subr.mxu0 0.0
        %2657 = vmatpush2.msra.mxu0 0.0
        %2658 = vmatprep.subr.mxu0 0.0
        %2659 = vmatpush2.msra.mxu0 0.0
        %2660 = vmatprep.subr.mxu0 0.0
        %2661 = vmatpush2.msra.mxu0 0.0
        %2662 = vmatprep.subr.mxu0 0.0
        %2663 = vmatpush2.msra.mxu0 0.0
        %2664 = vmatprep.subr.mxu0 0.0
        %2665 = vmatpush2.msra.mxu0 0.0
        %2666 = vmatprep.subr.mxu0 0.0
        %2667 = vmatpush2.msra.mxu0 0.0
        %2668 = vmatprep.subr.mxu0 0.0
        %2669 = vmatpush2.msra.mxu0 0.0
        %2670 = vmatprep.subr.mxu0 0.0
        %2671 = vmatpush2.msra.mxu0 0.0
        %2672 = vmatprep.subr.mxu0 0.0
        %2673 = vmatpush2.msra.mxu0 0.0
        %2674 = vmatprep.subr.mxu0 0.0
        %2675 = vmatpush2.msra.mxu0 0.0
        %2676 = vmatprep.subr.mxu0 0.0
        %2677 = vmatpush2.msra.mxu0 0.0
        %2678 = vmatprep.subr.mxu0 0.0
        %2679 = vmatpush2.msra.mxu0 0.0
        %2680 = vmatprep.mubr.f32.mxu0 0.0
        %2681 = vmatmul.mubr.f32.gmra.mxu0 %v2294
        %v2682 = vpop.f32.mrf.mxu0
        %v2683 = vadd.f32 0.0, %v2682
        %v2684 = vpop.f32.mrf.mxu0
        %v2685 = vadd.f32 0.0, %v2684
        %2686 = vdwg.mxu0
        %2687 = vmatprep.subr.mxu0 %v1100
        %2688 = vmatpush1.msra.mxu0 %v1099
        %2689 = vmatprep.subr.mxu0 %v1096
        %2690 = vmatpush1.msra.mxu0 %v1095
        %2691 = vmatprep.subr.mxu0 %v1092
        %2692 = vmatpush1.msra.mxu0 %v1091
        %2693 = vmatprep.subr.mxu0 %v1088
        %2694 = vmatpush1.msra.mxu0 %v1087
        %2695 = vmatprep.subr.mxu0 %v1084
        %2696 = vmatpush1.msra.mxu0 %v1083
        %2697 = vmatprep.subr.mxu0 %v1080
        %2698 = vmatpush1.msra.mxu0 %v1079
        %2699 = vmatprep.subr.mxu0 %v1076
        %2700 = vmatpush1.msra.mxu0 %v1075
        %2701 = vmatprep.subr.mxu0 %v1072
        %2702 = vmatpush1.msra.mxu0 %v1071
        %2703 = vmatprep.subr.mxu0 %v1068
        %2704 = vmatpush1.msra.mxu0 %v1067
        %2705 = vmatprep.subr.mxu0 %v1064
        %2706 = vmatpush1.msra.mxu0 %v1063
        %2707 = vmatprep.subr.mxu0 %v1060
        %2708 = vmatpush1.msra.mxu0 %v1059
        %2709 = vmatprep.subr.mxu0 %v1056
        %2710 = vmatpush1.msra.mxu0 %v1055
        %2711 = vmatprep.subr.mxu0 %v1052
        %2712 = vmatpush1.msra.mxu0 %v1051
        %2713 = vmatprep.subr.mxu0 %v1048
        %2714 = vmatpush1.msra.mxu0 %v1047
        %2715 = vmatprep.subr.mxu0 %v1044
        %2716 = vmatpush1.msra.mxu0 %v1043
        %2717 = vmatprep.subr.mxu0 %v1040
        %2718 = vmatpush1.msra.mxu0 %v1039
        %2719 = vmatprep.subr.mxu0 0.0
        %2720 = vmatpush2.msra.mxu0 0.0
        %2721 = vmatprep.subr.mxu0 0.0
        %2722 = vmatpush2.msra.mxu0 0.0
        %2723 = vmatprep.subr.mxu0 0.0
        %2724 = vmatpush2.msra.mxu0 0.0
        %2725 = vmatprep.subr.mxu0 0.0
        %2726 = vmatpush2.msra.mxu0 0.0
        %2727 = vmatprep.subr.mxu0 0.0
        %2728 = vmatpush2.msra.mxu0 0.0
        %2729 = vmatprep.subr.mxu0 0.0
        %2730 = vmatpush2.msra.mxu0 0.0
        %2731 = vmatprep.subr.mxu0 0.0
        %2732 = vmatpush2.msra.mxu0 0.0
        %2733 = vmatprep.subr.mxu0 0.0
        %2734 = vmatpush2.msra.mxu0 0.0
        %2735 = vmatprep.subr.mxu0 0.0
        %2736 = vmatpush2.msra.mxu0 0.0
        %2737 = vmatprep.subr.mxu0 0.0
        %2738 = vmatpush2.msra.mxu0 0.0
        %2739 = vmatprep.subr.mxu0 0.0
        %2740 = vmatpush2.msra.mxu0 0.0
        %2741 = vmatprep.subr.mxu0 0.0
        %2742 = vmatpush2.msra.mxu0 0.0
        %2743 = vmatprep.subr.mxu0 0.0
        %2744 = vmatpush2.msra.mxu0 0.0
        %2745 = vmatprep.subr.mxu0 0.0
        %2746 = vmatpush2.msra.mxu0 0.0
        %2747 = vmatprep.subr.mxu0 0.0
        %2748 = vmatpush2.msra.mxu0 0.0
        %2749 = vmatprep.subr.mxu0 0.0
        %2750 = vmatpush2.msra.mxu0 0.0
        %2751 = vmatprep.mubr.f32.mxu0 0.0
        %2752 = vmatmul.mubr.f32.gmra.mxu0 %v2294
        %v2753 = vpop.f32.mrf.mxu0
        %v2754 = vadd.f32 0.0, %v2753
        %v2755 = vpop.f32.mrf.mxu0
        %v2756 = vadd.f32 0.0, %v2755
        %2757 = vdwg.mxu0
        %v2758 = vstv %s2331
        %v2759 = vadd.f32 %v2541, %v2683
        %v2760 = vadd.f32 %v2543, %v2685
        %v2761 = vadd.f32 %v2612, %v2754
        %v2762 = vadd.f32 %v2614, %v2756
        %v2763 = vadd.f32 %v2759, %v1252
        %v2764 = vadd.f32 %v2760, %v1256
        %v2765 = vadd.f32 %v2761, %v1260
        %v2766 = vadd.f32 %v2762, %v1264
        %v2767 = vxor.u32 %v2763, 2147483648
        %v2768 = vmul.f32 %v2767, 1.442695
        %v2769 = vpow.pop %v2768
        %v2770 = vadd.f32 %v2769, 1.0
        %v2771 = vrcp.pop %v2770
        %v2772 = vmul.f32 1.0, %v2771
        %v2773 = vxor.u32 %v2764, 2147483648
        %v2774 = vmul.f32 %v2773, 1.442695
        %v2775 = vpow.pop %v2774
        %v2776 = vadd.f32 %v2775, 1.0
        %v2777 = vrcp.pop %v2776
        %v2778 = vmul.f32 1.0, %v2777
        %v2779 = vtanh.pop %v2765
        %v2780 = vxor.u32 %v2766, 2147483648
        %v2781 = vmul.f32 %v2780, 1.442695
        %v2782 = vpow.pop %v2781
        %v2783 = vadd.f32 %v2782, 1.0
        %v2784 = vrcp.pop %v2783
        %v2785 = vmul.f32 1.0, %v2784
        %v2786 = vmul.f32 %v2778, %v2295
        %v2787 = vmul.f32 %v2772, %v2779
        %v2788 = vadd.f32 %v2786, %v2787
        %v2789 = vtanh.pop %v2788
        %v2790 = vmul.f32 %v2785, %v2789
        %vm2791 = vcmp.ge.s32.totalorder %v2758, 1
        %v2792 = vsel %vm2791, %v2790, %v2294
        %v2793 = vsel %vm2791, %v2788, %v2295
        %s2794 = smul.u32 3, 4
        %s2795 = smul.addr %s2794, 8
        %s2796 = scalar_lea.vmem [#allocation2], %s2795
        %v2797 = vld [vmem:[%s2796] sm:$0xff]
        %v2798 = vld [vmem:[%s2796 + $0x8] sm:$0xff]
        %v2799 = vld [vmem:[%s2796 + $0x10] sm:$0xff]
        %v2800 = vld [vmem:[%s2796 + $0x18] sm:$0xff]
        %v2801 = vadd.f32 %v2797, %v2399
        %v2802 = vadd.f32 %v2798, %v2401
        %v2803 = vadd.f32 %v2799, %v2470
        %v2804 = vadd.f32 %v2800, %v2472
        %v2805 = vxor.u32 %v2801, 2147483648
        %v2806 = vmul.f32 %v2805, 1.442695
        %v2807 = vpow.pop %v2806
        %v2808 = vadd.f32 %v2807, 1.0
        %v2809 = vrcp.pop %v2808
        %v2810 = vmul.f32 1.0, %v2809
        %v2811 = vxor.u32 %v2802, 2147483648
        %v2812 = vmul.f32 %v2811, 1.442695
        %v2813 = vpow.pop %v2812
        %v2814 = vadd.f32 %v2813, 1.0
        %v2815 = vrcp.pop %v2814
        %v2816 = vmul.f32 1.0, %v2815
        %v2817 = vtanh.pop %v2803
        %v2818 = vxor.u32 %v2804, 2147483648
        %v2819 = vmul.f32 %v2818, 1.442695
        %v2820 = vpow.pop %v2819
        %v2821 = vadd.f32 %v2820, 1.0
        %v2822 = vrcp.pop %v2821
        %v2823 = vmul.f32 1.0, %v2822
        %v2824 = vmul.f32 %v2816, %v2328
        %v2825 = vmul.f32 %v2810, %v2817
        %v2826 = vadd.f32 %v2824, %v2825
        %v2827 = vtanh.pop %v2826
        %v2828 = vmul.f32 %v2823, %v2827
        %2829 = vst [vmem:[#allocation3] sm:$0xff] %v2828
        %2830 = vst [vmem:[#allocation4] sm:$0xff] %v2826
        %2831 = vst [vmem:[#allocation5] sm:$0xff] %v2792
        %2832 = vst [vmem:[#allocation6] sm:$0xff] %v2793
        %p2833 = scmp.eq.s32.totalorder %s26, 1
        // Predicated region
        $region69: #{lstm_model_forward.1} parent=51 // pred_check
          %p2834 = pneg %p2833
        $region70: #{lstm_model_forward.1} parent=51 // pred_check_branch
          %2836 = sbr.rel (%p2834) target = $region72
        $region71: #{lstm_model_forward.1} parent=51 // pred_region
          %v2837 = vld [vmem:[#allocation7 + $0x20] sm:$0xff]
          %v2838 = vld [vmem:[#allocation7 + $0x28] sm:$0xff]
          %v2839 = vld [vmem:[#allocation7 + $0x30] sm:$0xff]
          %v2840 = vld [vmem:[#allocation7 + $0x38] sm:$0xff]
          %v2841 = vld [vmem:[#allocation7 + $0x60] sm:$0xff]
          %v2842 = vld [vmem:[#allocation7 + $0x68] sm:$0xff]
          %v2843 = vld [vmem:[#allocation7 + $0x70] sm:$0xff]
          %v2844 = vld [vmem:[#allocation7 + $0x78] sm:$0xff]
          %v2845 = vld [vmem:[#allocation7 + $0xa0] sm:$0xff]
          %v2846 = vld [vmem:[#allocation7 + $0xa8] sm:$0xff]
          %v2847 = vld [vmem:[#allocation7 + $0xb0] sm:$0xff]
          %v2848 = vld [vmem:[#allocation7 + $0xb8] sm:$0xff]
          %v2849 = vld [vmem:[#allocation7 + $0xe0] sm:$0xff]
          %v2850 = vld [vmem:[#allocation7 + $0xe8] sm:$0xff]
          %v2851 = vld [vmem:[#allocation7 + $0xf0] sm:$0xff]
          %v2852 = vld [vmem:[#allocation7 + $0xf8] sm:$0xff]
          %v2853 = vld [vmem:[#allocation7 + $0x120] sm:$0xff]
          %v2854 = vld [vmem:[#allocation7 + $0x128] sm:$0xff]
          %v2855 = vld [vmem:[#allocation7 + $0x130] sm:$0xff]
          %v2856 = vld [vmem:[#allocation7 + $0x138] sm:$0xff]
          %v2857 = vld [vmem:[#allocation7 + $0x160] sm:$0xff]
          %v2858 = vld [vmem:[#allocation7 + $0x168] sm:$0xff]
          %v2859 = vld [vmem:[#allocation7 + $0x170] sm:$0xff]
          %v2860 = vld [vmem:[#allocation7 + $0x178] sm:$0xff]
          %v2861 = vld [vmem:[#allocation7 + $0x1a0] sm:$0xff]
          %v2862 = vld [vmem:[#allocation7 + $0x1a8] sm:$0xff]
          %v2863 = vld [vmem:[#allocation7 + $0x1b0] sm:$0xff]
          %v2864 = vld [vmem:[#allocation7 + $0x1b8] sm:$0xff]
          %v2865 = vld [vmem:[#allocation7 + $0x1e0] sm:$0xff]
          %v2866 = vld [vmem:[#allocation7 + $0x1e8] sm:$0xff]
          %v2867 = vld [vmem:[#allocation7 + $0x1f0] sm:$0xff]
          %v2868 = vld [vmem:[#allocation7 + $0x1f8] sm:$0xff]
          %v2869 = vld [vmem:[#allocation7 + $0x220] sm:$0xff]
          %v2870 = vld [vmem:[#allocation7 + $0x228] sm:$0xff]
          %v2871 = vld [vmem:[#allocation7 + $0x230] sm:$0xff]
          %v2872 = vld [vmem:[#allocation7 + $0x238] sm:$0xff]
          %v2873 = vld [vmem:[#allocation7 + $0x260] sm:$0xff]
          %v2874 = vld [vmem:[#allocation7 + $0x268] sm:$0xff]
          %v2875 = vld [vmem:[#allocation7 + $0x270] sm:$0xff]
          %v2876 = vld [vmem:[#allocation7 + $0x278] sm:$0xff]
          %v2877 = vld [vmem:[#allocation7 + $0x2a0] sm:$0xff]
          %v2878 = vld [vmem:[#allocation7 + $0x2a8] sm:$0xff]
          %v2879 = vld [vmem:[#allocation7 + $0x2b0] sm:$0xff]
          %v2880 = vld [vmem:[#allocation7 + $0x2b8] sm:$0xff]
          %v2881 = vld [vmem:[#allocation7 + $0x2e0] sm:$0xff]
          %v2882 = vld [vmem:[#allocation7 + $0x2e8] sm:$0xff]
          %v2883 = vld [vmem:[#allocation7 + $0x2f0] sm:$0xff]
          %v2884 = vld [vmem:[#allocation7 + $0x2f8] sm:$0xff]
          %v2885 = vld [vmem:[#allocation7 + $0x320] sm:$0xff]
          %v2886 = vld [vmem:[#allocation7 + $0x328] sm:$0xff]
          %v2887 = vld [vmem:[#allocation7 + $0x330] sm:$0xff]
          %v2888 = vld [vmem:[#allocation7 + $0x338] sm:$0xff]
          %v2889 = vld [vmem:[#allocation7 + $0x360] sm:$0xff]
          %v2890 = vld [vmem:[#allocation7 + $0x368] sm:$0xff]
          %v2891 = vld [vmem:[#allocation7 + $0x370] sm:$0xff]
          %v2892 = vld [vmem:[#allocation7 + $0x378] sm:$0xff]
          %v2893 = vld [vmem:[#allocation7 + $0x3a0] sm:$0xff]
          %v2894 = vld [vmem:[#allocation7 + $0x3a8] sm:$0xff]
          %v2895 = vld [vmem:[#allocation7 + $0x3b0] sm:$0xff]
          %v2896 = vld [vmem:[#allocation7 + $0x3b8] sm:$0xff]
          %v2897 = vld [vmem:[#allocation7 + $0x3e0] sm:$0xff]
          %v2898 = vld [vmem:[#allocation7 + $0x3e8] sm:$0xff]
          %v2899 = vld [vmem:[#allocation7 + $0x3f0] sm:$0xff]
          %v2900 = vld [vmem:[#allocation7 + $0x3f8] sm:$0xff]
          %v2901 = vld [vmem:[#allocation9] sm:$0xff]
          %v2902 = vld [vmem:[#allocation9 + $0x8] sm:$0xff]
          %v2903 = vld [vmem:[#allocation9 + $0x10] sm:$0xff]
          %v2904 = vld [vmem:[#allocation9 + $0x18] sm:$0xff]
          %v2905 = vld [vmem:[#allocation9 + $0x20] sm:$0xff]
          %v2906 = vld [vmem:[#allocation9 + $0x28] sm:$0xff]
          %v2907 = vld [vmem:[#allocation9 + $0x30] sm:$0xff]
          %v2908 = vld [vmem:[#allocation9 + $0x38] sm:$0xff]
          %v2909 = vld [vmem:[#allocation9 + $0x40] sm:$0xff]
          %v2910 = vld [vmem:[#allocation9 + $0x48] sm:$0xff]
          %v2911 = vld [vmem:[#allocation9 + $0x50] sm:$0xff]
          %v2912 = vld [vmem:[#allocation9 + $0x58] sm:$0xff]
          %v2913 = vld [vmem:[#allocation9 + $0x60] sm:$0xff]
          %v2914 = vld [vmem:[#allocation9 + $0x68] sm:$0xff]
          %v2915 = vld [vmem:[#allocation9 + $0x70] sm:$0xff]
          %v2916 = vld [vmem:[#allocation9 + $0x78] sm:$0xff]
          %v2917 = vld [vmem:[#allocation9 + $0x80] sm:$0xff]
          %v2918 = vld [vmem:[#allocation9 + $0x88] sm:$0xff]
          %v2919 = vld [vmem:[#allocation9 + $0x90] sm:$0xff]
          %v2920 = vld [vmem:[#allocation9 + $0x98] sm:$0xff]
          %v2921 = vld [vmem:[#allocation9 + $0xa0] sm:$0xff]
          %v2922 = vld [vmem:[#allocation9 + $0xa8] sm:$0xff]
          %v2923 = vld [vmem:[#allocation9 + $0xb0] sm:$0xff]
          %v2924 = vld [vmem:[#allocation9 + $0xb8] sm:$0xff]
          %v2925 = vld [vmem:[#allocation9 + $0xc0] sm:$0xff]
          %v2926 = vld [vmem:[#allocation9 + $0xc8] sm:$0xff]
          %v2927 = vld [vmem:[#allocation9 + $0xd0] sm:$0xff]
          %v2928 = vld [vmem:[#allocation9 + $0xd8] sm:$0xff]
          %v2929 = vld [vmem:[#allocation9 + $0xe0] sm:$0xff]
          %v2930 = vld [vmem:[#allocation9 + $0xe8] sm:$0xff]
          %v2931 = vld [vmem:[#allocation9 + $0xf0] sm:$0xff]
          %v2932 = vld [vmem:[#allocation9 + $0xf8] sm:$0xff]
          %v2933 = vld [vmem:[#allocation9 + $0x100] sm:$0xff]
          %v2934 = vld [vmem:[#allocation9 + $0x108] sm:$0xff]
          %v2935 = vld [vmem:[#allocation9 + $0x110] sm:$0xff]
          %v2936 = vld [vmem:[#allocation9 + $0x118] sm:$0xff]
          %v2937 = vld [vmem:[#allocation9 + $0x120] sm:$0xff]
          %v2938 = vld [vmem:[#allocation9 + $0x128] sm:$0xff]
          %v2939 = vld [vmem:[#allocation9 + $0x130] sm:$0xff]
          %v2940 = vld [vmem:[#allocation9 + $0x138] sm:$0xff]
          %v2941 = vld [vmem:[#allocation9 + $0x140] sm:$0xff]
          %v2942 = vld [vmem:[#allocation9 + $0x148] sm:$0xff]
          %v2943 = vld [vmem:[#allocation9 + $0x150] sm:$0xff]
          %v2944 = vld [vmem:[#allocation9 + $0x158] sm:$0xff]
          %v2945 = vld [vmem:[#allocation9 + $0x160] sm:$0xff]
          %v2946 = vld [vmem:[#allocation9 + $0x168] sm:$0xff]
          %v2947 = vld [vmem:[#allocation9 + $0x170] sm:$0xff]
          %v2948 = vld [vmem:[#allocation9 + $0x178] sm:$0xff]
          %v2949 = vld [vmem:[#allocation9 + $0x180] sm:$0xff]
          %v2950 = vld [vmem:[#allocation9 + $0x188] sm:$0xff]
          %v2951 = vld [vmem:[#allocation9 + $0x190] sm:$0xff]
          %v2952 = vld [vmem:[#allocation9 + $0x198] sm:$0xff]
          %v2953 = vld [vmem:[#allocation9 + $0x1a0] sm:$0xff]
          %v2954 = vld [vmem:[#allocation9 + $0x1a8] sm:$0xff]
          %v2955 = vld [vmem:[#allocation9 + $0x1b0] sm:$0xff]
          %v2956 = vld [vmem:[#allocation9 + $0x1b8] sm:$0xff]
          %v2957 = vld [vmem:[#allocation9 + $0x1c0] sm:$0xff]
          %v2958 = vld [vmem:[#allocation9 + $0x1c8] sm:$0xff]
          %v2959 = vld [vmem:[#allocation9 + $0x1d0] sm:$0xff]
          %v2960 = vld [vmem:[#allocation9 + $0x1d8] sm:$0xff]
          %v2961 = vld [vmem:[#allocation9 + $0x1e0] sm:$0xff]
          %v2962 = vld [vmem:[#allocation9 + $0x1e8] sm:$0xff]
          %v2963 = vld [vmem:[#allocation9 + $0x1f0] sm:$0xff]
          %v2964 = vld [vmem:[#allocation9 + $0x1f8] sm:$0xff]
          %2965 = vmatprep.subr.mxu0 %v2962
          %2966 = vmatpush1.msra.mxu0 %v2961
          %2967 = vmatprep.subr.mxu0 %v2958
          %2968 = vmatpush1.msra.mxu0 %v2957
          %2969 = vmatprep.subr.mxu0 %v2954
          %2970 = vmatpush1.msra.mxu0 %v2953
          %2971 = vmatprep.subr.mxu0 %v2950
          %2972 = vmatpush1.msra.mxu0 %v2949
          %2973 = vmatprep.subr.mxu0 %v2946
          %2974 = vmatpush1.msra.mxu0 %v2945
          %2975 = vmatprep.subr.mxu0 %v2942
          %2976 = vmatpush1.msra.mxu0 %v2941
          %2977 = vmatprep.subr.mxu0 %v2938
          %2978 = vmatpush1.msra.mxu0 %v2937
          %2979 = vmatprep.subr.mxu0 %v2934
          %2980 = vmatpush1.msra.mxu0 %v2933
          %2981 = vmatprep.subr.mxu0 %v2930
          %2982 = vmatpush1.msra.mxu0 %v2929
          %2983 = vmatprep.subr.mxu0 %v2926
          %2984 = vmatpush1.msra.mxu0 %v2925
          %2985 = vmatprep.subr.mxu0 %v2922
          %2986 = vmatpush1.msra.mxu0 %v2921
          %2987 = vmatprep.subr.mxu0 %v2918
          %2988 = vmatpush1.msra.mxu0 %v2917
          %2989 = vmatprep.subr.mxu0 %v2914
          %2990 = vmatpush1.msra.mxu0 %v2913
          %2991 = vmatprep.subr.mxu0 %v2910
          %2992 = vmatpush1.msra.mxu0 %v2909
          %2993 = vmatprep.subr.mxu0 %v2906
          %2994 = vmatpush1.msra.mxu0 %v2905
          %2995 = vmatprep.subr.mxu0 %v2902
          %2996 = vmatpush1.msra.mxu0 %v2901
          %2997 = vmatprep.subr.mxu0 0.0
          %2998 = vmatpush2.msra.mxu0 0.0
          %2999 = vmatprep.subr.mxu0 0.0
          %3000 = vmatpush2.msra.mxu0 0.0
          %3001 = vmatprep.subr.mxu0 0.0
          %3002 = vmatpush2.msra.mxu0 0.0
          %3003 = vmatprep.subr.mxu0 0.0
          %3004 = vmatpush2.msra.mxu0 0.0
          %3005 = vmatprep.subr.mxu0 0.0
          %3006 = vmatpush2.msra.mxu0 0.0
          %3007 = vmatprep.subr.mxu0 0.0
          %3008 = vmatpush2.msra.mxu0 0.0
          %3009 = vmatprep.subr.mxu0 0.0
          %3010 = vmatpush2.msra.mxu0 0.0
          %3011 = vmatprep.subr.mxu0 0.0
          %3012 = vmatpush2.msra.mxu0 0.0
          %3013 = vmatprep.subr.mxu0 0.0
          %3014 = vmatpush2.msra.mxu0 0.0
          %3015 = vmatprep.subr.mxu0 0.0
          %3016 = vmatpush2.msra.mxu0 0.0
          %3017 = vmatprep.subr.mxu0 0.0
          %3018 = vmatpush2.msra.mxu0 0.0
          %3019 = vmatprep.subr.mxu0 0.0
          %3020 = vmatpush2.msra.mxu0 0.0
          %3021 = vmatprep.subr.mxu0 0.0
          %3022 = vmatpush2.msra.mxu0 0.0
          %3023 = vmatprep.subr.mxu0 0.0
          %3024 = vmatpush2.msra.mxu0 0.0
          %3025 = vmatprep.subr.mxu0 0.0
          %3026 = vmatpush2.msra.mxu0 0.0
          %3027 = vmatprep.subr.mxu0 0.0
          %3028 = vmatpush2.msra.mxu0 0.0
          %3029 = vmatprep.mubr.f32.mxu0 0.0
          %3030 = vmatmul.mubr.f32.gmra.mxu0 %v2792
          %v3031 = vpop.f32.mrf.mxu0
          %v3032 = vadd.f32 0.0, %v3031
          %v3033 = vpop.f32.mrf.mxu0
          %v3034 = vadd.f32 0.0, %v3033
          %3035 = vdwg.mxu0
          %3036 = vmatprep.subr.mxu0 %v2964
          %3037 = vmatpush1.msra.mxu0 %v2963
          %3038 = vmatprep.subr.mxu0 %v2960
          %3039 = vmatpush1.msra.mxu0 %v2959
          %3040 = vmatprep.subr.mxu0 %v2956
          %3041 = vmatpush1.msra.mxu0 %v2955
          %3042 = vmatprep.subr.mxu0 %v2952
          %3043 = vmatpush1.msra.mxu0 %v2951
          %3044 = vmatprep.subr.mxu0 %v2948
          %3045 = vmatpush1.msra.mxu0 %v2947
          %3046 = vmatprep.subr.mxu0 %v2944
          %3047 = vmatpush1.msra.mxu0 %v2943
          %3048 = vmatprep.subr.mxu0 %v2940
          %3049 = vmatpush1.msra.mxu0 %v2939
          %3050 = vmatprep.subr.mxu0 %v2936
          %3051 = vmatpush1.msra.mxu0 %v2935
          %3052 = vmatprep.subr.mxu0 %v2932
          %3053 = vmatpush1.msra.mxu0 %v2931
          %3054 = vmatprep.subr.mxu0 %v2928
          %3055 = vmatpush1.msra.mxu0 %v2927
          %3056 = vmatprep.subr.mxu0 %v2924
          %3057 = vmatpush1.msra.mxu0 %v2923
          %3058 = vmatprep.subr.mxu0 %v2920
          %3059 = vmatpush1.msra.mxu0 %v2919
          %3060 = vmatprep.subr.mxu0 %v2916
          %3061 = vmatpush1.msra.mxu0 %v2915
          %3062 = vmatprep.subr.mxu0 %v2912
          %3063 = vmatpush1.msra.mxu0 %v2911
          %3064 = vmatprep.subr.mxu0 %v2908
          %3065 = vmatpush1.msra.mxu0 %v2907
          %3066 = vmatprep.subr.mxu0 %v2904
          %3067 = vmatpush1.msra.mxu0 %v2903
          %3068 = vmatprep.subr.mxu0 0.0
          %3069 = vmatpush2.msra.mxu0 0.0
          %3070 = vmatprep.subr.mxu0 0.0
          %3071 = vmatpush2.msra.mxu0 0.0
          %3072 = vmatprep.subr.mxu0 0.0
          %3073 = vmatpush2.msra.mxu0 0.0
          %3074 = vmatprep.subr.mxu0 0.0
          %3075 = vmatpush2.msra.mxu0 0.0
          %3076 = vmatprep.subr.mxu0 0.0
          %3077 = vmatpush2.msra.mxu0 0.0
          %3078 = vmatprep.subr.mxu0 0.0
          %3079 = vmatpush2.msra.mxu0 0.0
          %3080 = vmatprep.subr.mxu0 0.0
          %3081 = vmatpush2.msra.mxu0 0.0
          %3082 = vmatprep.subr.mxu0 0.0
          %3083 = vmatpush2.msra.mxu0 0.0
          %3084 = vmatprep.subr.mxu0 0.0
          %3085 = vmatpush2.msra.mxu0 0.0
          %3086 = vmatprep.subr.mxu0 0.0
          %3087 = vmatpush2.msra.mxu0 0.0
          %3088 = vmatprep.subr.mxu0 0.0
          %3089 = vmatpush2.msra.mxu0 0.0
          %3090 = vmatprep.subr.mxu0 0.0
          %3091 = vmatpush2.msra.mxu0 0.0
          %3092 = vmatprep.subr.mxu0 0.0
          %3093 = vmatpush2.msra.mxu0 0.0
          %3094 = vmatprep.subr.mxu0 0.0
          %3095 = vmatpush2.msra.mxu0 0.0
          %3096 = vmatprep.subr.mxu0 0.0
          %3097 = vmatpush2.msra.mxu0 0.0
          %3098 = vmatprep.subr.mxu0 0.0
          %3099 = vmatpush2.msra.mxu0 0.0
          %3100 = vmatprep.mubr.f32.mxu0 0.0
          %3101 = vmatmul.mubr.f32.gmra.mxu0 %v2792
          %v3102 = vpop.f32.mrf.mxu0
          %v3103 = vadd.f32 0.0, %v3102
          %v3104 = vpop.f32.mrf.mxu0
          %v3105 = vadd.f32 0.0, %v3104
          %3106 = vdwg.mxu0
          %3107 = vmatprep.subr.mxu0 %v2898
          %3108 = vmatpush1.msra.mxu0 %v2897
          %3109 = vmatprep.subr.mxu0 %v2894
          %3110 = vmatpush1.msra.mxu0 %v2893
          %3111 = vmatprep.subr.mxu0 %v2890
          %3112 = vmatpush1.msra.mxu0 %v2889
          %3113 = vmatprep.subr.mxu0 %v2886
          %3114 = vmatpush1.msra.mxu0 %v2885
          %3115 = vmatprep.subr.mxu0 %v2882
          %3116 = vmatpush1.msra.mxu0 %v2881
          %3117 = vmatprep.subr.mxu0 %v2878
          %3118 = vmatpush1.msra.mxu0 %v2877
          %3119 = vmatprep.subr.mxu0 %v2874
          %3120 = vmatpush1.msra.mxu0 %v2873
          %3121 = vmatprep.subr.mxu0 %v2870
          %3122 = vmatpush1.msra.mxu0 %v2869
          %3123 = vmatprep.subr.mxu0 %v2866
          %3124 = vmatpush1.msra.mxu0 %v2865
          %3125 = vmatprep.subr.mxu0 %v2862
          %3126 = vmatpush1.msra.mxu0 %v2861
          %3127 = vmatprep.subr.mxu0 %v2858
          %3128 = vmatpush1.msra.mxu0 %v2857
          %3129 = vmatprep.subr.mxu0 %v2854
          %3130 = vmatpush1.msra.mxu0 %v2853
          %3131 = vmatprep.subr.mxu0 %v2850
          %3132 = vmatpush1.msra.mxu0 %v2849
          %3133 = vmatprep.subr.mxu0 %v2846
          %3134 = vmatpush1.msra.mxu0 %v2845
          %3135 = vmatprep.subr.mxu0 %v2842
          %3136 = vmatpush1.msra.mxu0 %v2841
          %3137 = vmatprep.subr.mxu0 %v2838
          %3138 = vmatpush1.msra.mxu0 %v2837
          %3139 = vmatprep.subr.mxu0 0.0
          %3140 = vmatpush2.msra.mxu0 0.0
          %3141 = vmatprep.subr.mxu0 0.0
          %3142 = vmatpush2.msra.mxu0 0.0
          %3143 = vmatprep.subr.mxu0 0.0
          %3144 = vmatpush2.msra.mxu0 0.0
          %3145 = vmatprep.subr.mxu0 0.0
          %3146 = vmatpush2.msra.mxu0 0.0
          %3147 = vmatprep.subr.mxu0 0.0
          %3148 = vmatpush2.msra.mxu0 0.0
          %3149 = vmatprep.subr.mxu0 0.0
          %3150 = vmatpush2.msra.mxu0 0.0
          %3151 = vmatprep.subr.mxu0 0.0
          %3152 = vmatpush2.msra.mxu0 0.0
          %3153 = vmatprep.subr.mxu0 0.0
          %3154 = vmatpush2.msra.mxu0 0.0
          %3155 = vmatprep.subr.mxu0 0.0
          %3156 = vmatpush2.msra.mxu0 0.0
          %3157 = vmatprep.subr.mxu0 0.0
          %3158 = vmatpush2.msra.mxu0 0.0
          %3159 = vmatprep.subr.mxu0 0.0
          %3160 = vmatpush2.msra.mxu0 0.0
          %3161 = vmatprep.subr.mxu0 0.0
          %3162 = vmatpush2.msra.mxu0 0.0
          %3163 = vmatprep.subr.mxu0 0.0
          %3164 = vmatpush2.msra.mxu0 0.0
          %3165 = vmatprep.subr.mxu0 0.0
          %3166 = vmatpush2.msra.mxu0 0.0
          %3167 = vmatprep.subr.mxu0 0.0
          %3168 = vmatpush2.msra.mxu0 0.0
          %3169 = vmatprep.subr.mxu0 0.0
          %3170 = vmatpush2.msra.mxu0 0.0
          %3171 = vmatprep.mubr.f32.mxu0 0.0
          %3172 = vmatmul.mubr.f32.gmra.mxu0 %v2828
          %v3173 = vpop.f32.mrf.mxu0
          %v3174 = vadd.f32 %v3032, %v3173
          %v3175 = vpop.f32.mrf.mxu0
          %v3176 = vadd.f32 %v3034, %v3175
          %3177 = vdwg.mxu0
          %3178 = vmatprep.subr.mxu0 %v2900
          %3179 = vmatpush1.msra.mxu0 %v2899
          %3180 = vmatprep.subr.mxu0 %v2896
          %3181 = vmatpush1.msra.mxu0 %v2895
          %3182 = vmatprep.subr.mxu0 %v2892
          %3183 = vmatpush1.msra.mxu0 %v2891
          %3184 = vmatprep.subr.mxu0 %v2888
          %3185 = vmatpush1.msra.mxu0 %v2887
          %3186 = vmatprep.subr.mxu0 %v2884
          %3187 = vmatpush1.msra.mxu0 %v2883
          %3188 = vmatprep.subr.mxu0 %v2880
          %3189 = vmatpush1.msra.mxu0 %v2879
          %3190 = vmatprep.subr.mxu0 %v2876
          %3191 = vmatpush1.msra.mxu0 %v2875
          %3192 = vmatprep.subr.mxu0 %v2872
          %3193 = vmatpush1.msra.mxu0 %v2871
          %3194 = vmatprep.subr.mxu0 %v2868
          %3195 = vmatpush1.msra.mxu0 %v2867
          %3196 = vmatprep.subr.mxu0 %v2864
          %3197 = vmatpush1.msra.mxu0 %v2863
          %3198 = vmatprep.subr.mxu0 %v2860
          %3199 = vmatpush1.msra.mxu0 %v2859
          %3200 = vmatprep.subr.mxu0 %v2856
          %3201 = vmatpush1.msra.mxu0 %v2855
          %3202 = vmatprep.subr.mxu0 %v2852
          %3203 = vmatpush1.msra.mxu0 %v2851
          %3204 = vmatprep.subr.mxu0 %v2848
          %3205 = vmatpush1.msra.mxu0 %v2847
          %3206 = vmatprep.subr.mxu0 %v2844
          %3207 = vmatpush1.msra.mxu0 %v2843
          %3208 = vmatprep.subr.mxu0 %v2840
          %3209 = vmatpush1.msra.mxu0 %v2839
          %3210 = vmatprep.subr.mxu0 0.0
          %3211 = vmatpush2.msra.mxu0 0.0
          %3212 = vmatprep.subr.mxu0 0.0
          %3213 = vmatpush2.msra.mxu0 0.0
          %3214 = vmatprep.subr.mxu0 0.0
          %3215 = vmatpush2.msra.mxu0 0.0
          %3216 = vmatprep.subr.mxu0 0.0
          %3217 = vmatpush2.msra.mxu0 0.0
          %3218 = vmatprep.subr.mxu0 0.0
          %3219 = vmatpush2.msra.mxu0 0.0
          %3220 = vmatprep.subr.mxu0 0.0
          %3221 = vmatpush2.msra.mxu0 0.0
          %3222 = vmatprep.subr.mxu0 0.0
          %3223 = vmatpush2.msra.mxu0 0.0
          %3224 = vmatprep.subr.mxu0 0.0
          %3225 = vmatpush2.msra.mxu0 0.0
          %3226 = vmatprep.subr.mxu0 0.0
          %3227 = vmatpush2.msra.mxu0 0.0
          %3228 = vmatprep.subr.mxu0 0.0
          %3229 = vmatpush2.msra.mxu0 0.0
          %3230 = vmatprep.subr.mxu0 0.0
          %3231 = vmatpush2.msra.mxu0 0.0
          %3232 = vmatprep.subr.mxu0 0.0
          %3233 = vmatpush2.msra.mxu0 0.0
          %3234 = vmatprep.subr.mxu0 0.0
          %3235 = vmatpush2.msra.mxu0 0.0
          %3236 = vmatprep.subr.mxu0 0.0
          %3237 = vmatpush2.msra.mxu0 0.0
          %3238 = vmatprep.subr.mxu0 0.0
          %3239 = vmatpush2.msra.mxu0 0.0
          %3240 = vmatprep.subr.mxu0 0.0
          %3241 = vmatpush2.msra.mxu0 0.0
          %3242 = vmatprep.mubr.f32.mxu0 0.0
          %3243 = vmatmul.mubr.f32.gmra.mxu0 %v2828
          %v3244 = vpop.f32.mrf.mxu0
          %v3245 = vadd.f32 %v3103, %v3244
          %v3246 = vpop.f32.mrf.mxu0
          %v3247 = vadd.f32 %v3105, %v3246
          %3248 = vdwg.mxu0
          %v3249 = vadd.f32 %v3174, %v1252
          %v3250 = vadd.f32 %v3176, %v1256
          %v3251 = vadd.f32 %v3245, %v1260
          %v3252 = vadd.f32 %v3247, %v1264
          %v3253 = vxor.u32 %v3249, 2147483648
          %v3254 = vmul.f32 %v3253, 1.442695
          %v3255 = vpow.pop %v3254
          %v3256 = vadd.f32 %v3255, 1.0
          %v3257 = vrcp.pop %v3256
          %v3258 = vmul.f32 1.0, %v3257
          %v3259 = vxor.u32 %v3250, 2147483648
          %v3260 = vmul.f32 %v3259, 1.442695
          %v3261 = vpow.pop %v3260
          %v3262 = vadd.f32 %v3261, 1.0
          %v3263 = vrcp.pop %v3262
          %v3264 = vmul.f32 1.0, %v3263
          %v3265 = vtanh.pop %v3251
          %v3266 = vxor.u32 %v3252, 2147483648
          %v3267 = vmul.f32 %v3266, 1.442695
          %v3268 = vpow.pop %v3267
          %v3269 = vadd.f32 %v3268, 1.0
          %v3270 = vrcp.pop %v3269
          %v3271 = vmul.f32 1.0, %v3270
          %v3272 = vmul.f32 %v3264, %v2793
          %v3273 = vmul.f32 %v3258, %v3265
          %v3274 = vadd.f32 %v3272, %v3273
          %v3275 = vtanh.pop %v3274
          %v3276 = vmul.f32 %v3271, %v3275
          %v3277 = vld [vmem:[#allocation11] sm:$0xff]
          %v3278 = vld [vmem:[#allocation11 + $0x8] sm:$0xff]
          %v3279 = vld [vmem:[#allocation11 + $0x10] sm:$0xff]
          %v3280 = vld [vmem:[#allocation11 + $0x18] sm:$0xff]
          %v3281 = vld [vmem:[#allocation11 + $0x20] sm:$0xff]
          %v3282 = vld [vmem:[#allocation11 + $0x28] sm:$0xff]
          %v3283 = vld [vmem:[#allocation11 + $0x30] sm:$0xff]
          %v3284 = vld [vmem:[#allocation11 + $0x38] sm:$0xff]
          %v3285 = vld [vmem:[#allocation11 + $0x40] sm:$0xff]
          %v3286 = vld [vmem:[#allocation11 + $0x48] sm:$0xff]
          %v3287 = vld [vmem:[#allocation11 + $0x50] sm:$0xff]
          %v3288 = vld [vmem:[#allocation11 + $0x58] sm:$0xff]
          %v3289 = vld [vmem:[#allocation11 + $0x60] sm:$0xff]
          %v3290 = vld [vmem:[#allocation11 + $0x68] sm:$0xff]
          %v3291 = vld [vmem:[#allocation11 + $0x70] sm:$0xff]
          %v3292 = vld [vmem:[#allocation11 + $0x78] sm:$0xff]
          %v3293 = vld [vmem:[%s7] sm:$0x1]
          %v3295 = vlaneseq
          %v3296 = vshrl.u32 %v3295, 7
          %v3297 = vsub.s32 0, %v3296
          %v3298 = vrot.slane %v3293, %v3297
          %3300 = vmatprep.subr.mxu0 0.0
          %3301 = vmatpush1.msra.mxu0 %v3292
          %3302 = vmatprep.subr.mxu0 0.0
          %3303 = vmatpush1.msra.mxu0 %v3291
          %3304 = vmatprep.subr.mxu0 0.0
          %3305 = vmatpush1.msra.mxu0 %v3290
          %3306 = vmatprep.subr.mxu0 0.0
          %3307 = vmatpush1.msra.mxu0 %v3289
          %3308 = vmatprep.subr.mxu0 0.0
          %3309 = vmatpush1.msra.mxu0 %v3288
          %3310 = vmatprep.subr.mxu0 0.0
          %3311 = vmatpush1.msra.mxu0 %v3287
          %3312 = vmatprep.subr.mxu0 0.0
          %3313 = vmatpush1.msra.mxu0 %v3286
          %3314 = vmatprep.subr.mxu0 0.0
          %3315 = vmatpush1.msra.mxu0 %v3285
          %3316 = vmatprep.subr.mxu0 0.0
          %3317 = vmatpush1.msra.mxu0 %v3284
          %3318 = vmatprep.subr.mxu0 0.0
          %3319 = vmatpush1.msra.mxu0 %v3283
          %3320 = vmatprep.subr.mxu0 0.0
          %3321 = vmatpush1.msra.mxu0 %v3282
          %3322 = vmatprep.subr.mxu0 0.0
          %3323 = vmatpush1.msra.mxu0 %v3281
          %3324 = vmatprep.subr.mxu0 0.0
          %3325 = vmatpush1.msra.mxu0 %v3280
          %3326 = vmatprep.subr.mxu0 0.0
          %3327 = vmatpush1.msra.mxu0 %v3279
          %3328 = vmatprep.subr.mxu0 0.0
          %3329 = vmatpush1.msra.mxu0 %v3278
          %3330 = vmatprep.subr.mxu0 0.0
          %3331 = vmatpush1.msra.mxu0 %v3277
          %3332 = vmatprep.subr.mxu0 0.0
          %3333 = vmatpush2.msra.mxu0 0.0
          %3334 = vmatprep.subr.mxu0 0.0
          %3335 = vmatpush2.msra.mxu0 0.0
          %3336 = vmatprep.subr.mxu0 0.0
          %3337 = vmatpush2.msra.mxu0 0.0
          %3338 = vmatprep.subr.mxu0 0.0
          %3339 = vmatpush2.msra.mxu0 0.0
          %3340 = vmatprep.subr.mxu0 0.0
          %3341 = vmatpush2.msra.mxu0 0.0
          %3342 = vmatprep.subr.mxu0 0.0
          %3343 = vmatpush2.msra.mxu0 0.0
          %3344 = vmatprep.subr.mxu0 0.0
          %3345 = vmatpush2.msra.mxu0 0.0
          %3346 = vmatprep.subr.mxu0 0.0
          %3347 = vmatpush2.msra.mxu0 0.0
          %3348 = vmatprep.subr.mxu0 0.0
          %3349 = vmatpush2.msra.mxu0 0.0
          %3350 = vmatprep.subr.mxu0 0.0
          %3351 = vmatpush2.msra.mxu0 0.0
          %3352 = vmatprep.subr.mxu0 0.0
          %3353 = vmatpush2.msra.mxu0 0.0
          %3354 = vmatprep.subr.mxu0 0.0
          %3355 = vmatpush2.msra.mxu0 0.0
          %3356 = vmatprep.subr.mxu0 0.0
          %3357 = vmatpush2.msra.mxu0 0.0
          %3358 = vmatprep.subr.mxu0 0.0
          %3359 = vmatpush2.msra.mxu0 0.0
          %3360 = vmatprep.subr.mxu0 0.0
          %3361 = vmatpush2.msra.mxu0 0.0
          %3362 = vmatprep.subr.mxu0 0.0
          %3363 = vmatpush2.msra.mxu0 0.0
          %3364 = vmatprep.mubr.f32.mxu0 0.0
          %3365 = vmatmul.mubr.f32.gmra.mxu0 %v3276
          %v3366 = vpop.f32.mrf.mxu0
          %v3367 = vadd.f32 %v3298, %v3366
          %v3368 = vpop.f32.mrf.mxu0
          %3369 = vdwg.mxu0
          %3370 = vst [vmem:[%s373] sm:$0xff] %v3367
        $region72: #{lstm_model_forward.1} parent=51 // pred_fallthru
          _
        %p3371 = scmp.lt.s32.totalorder %s25, 0
        %s3372 = scalar_select %p3371, %s25, 0
        %s3373 = smul.addr %s3372, 8
        %s3374 = scalar_lea.vmem %s8, %s3373
        // Predicated region
        $region73: #{lstm_model_forward.1} parent=51 // pred_check
          %p3375 = pneg %p228
        $region74: #{lstm_model_forward.1} parent=51 // pred_check_branch
          %3377 = sbr.rel (%p3375) target = $region76
        $region75: #{lstm_model_forward.1} parent=51 // pred_region
          _
        $region76: #{lstm_model_forward.1} parent=51 // pred_fallthru
          _
        // Predicated region
        $region77: #{lstm_model_forward.1} parent=51 // pred_check
          %p3378 = pneg %p228
        $region78: #{lstm_model_forward.1} parent=51 // pred_check_branch
          %3380 = sbr.rel (%p3378) target = $region80
        $region79: #{lstm_model_forward.1} parent=51 // pred_region
          %p3381 = scmp.lt.s32.totalorder %s25, 0
          %s3382 = scalar_select %p3381, %s25, 0
          %s3383 = smul.addr %s3382, 8
          %s3384 = scalar_lea.vmem %s8, %s3383
        $region80: #{lstm_model_forward.1} parent=51 // pred_fallthru
          _
      $region52: #{lstm_model_forward.1} parent=5 // pred_fallthru
        _
      %p3385 = scmp.le.s32.totalorder 2, %s16
      // Predicated region
      $region81: #{lstm_model_forward.1} parent=5 // pred_check
        %p3386 = pneg %p3385
      $region82: #{lstm_model_forward.1} parent=5 // pred_check_branch
        %3388 = sbr.rel (%p3386) target = $region84
      $region83: #{lstm_model_forward.1} parent=5 // pred_region
        %s3389 = ssub.s32 %s16, 2
      $region84: #{lstm_model_forward.1} parent=5 // pred_fallthru
        _
    $region6: #{lstm_model_forward.1} parent=1 // loop_footer
      %s20 = sadd.s32 1, %s16
    $region7: #{lstm_model_forward.1} parent=1 // loop_footer_branch
      %15 = sbr.rel target = $region3
    $region8: #{lstm_model_forward.1} parent=1 // loop_exit
      _
    %3390 = vsyncpa [#allocation8], 1
    %s3391 = scalar_lea.sflag [#allocation8], 1
    %3392 = vsyncpa %s3391, 1
    %3393 = vsyncpa [#allocation10], 1

</llo_original>
